<compile_context>
chip_gen: v5e
topology: v5e:2x2
jax: 0.10.0
libtpu: 0.0.40
codegen_flags: <defaults>
</compile_context>

<pallas_src>
import functools

import jax
import jax.numpy as jnp
from jax.experimental import pallas as pl
from jax.experimental.pallas import tpu as pltpu

EPS = 1e-5

_COMPILER_PARAMS = pltpu.CompilerParams(
    dimension_semantics=("arbitrary",),
    vmem_limit_bytes=32 * 1024 * 1024,   # safe on v5e/v6e (128 MiB) and v7x (64 MiB)
)


def _full_spec(shape):
    """Whole-array block for the trivial grid=(1,) launch (demo shapes are tiny)."""
    return pl.BlockSpec(shape, lambda i: (0,) * len(shape))


def _bn_train(y, gamma, beta):
    """Train-mode BatchNorm over rows (N*OH*OW), single stats pass + fused apply.

    var = E[x^2] - E[x]^2 (biased), eps = 1e-5, all in f32.
    """
    inv_m = 1.0 / y.shape[0]
    mean = jnp.sum(y, axis=0, keepdims=True) * inv_m
    ex2 = jnp.sum(y * y, axis=0, keepdims=True) * inv_m
    var = ex2 - mean * mean
    scale = gamma * jax.lax.rsqrt(var + EPS)
    shift = beta - mean * scale
    return y * scale + shift


def _stage_hpad(hpad, hb, N, OH, OW, OC):
    """Write the bf16 intermediate into the (N, OH+2, OW+2, OC) scratch, zeroing
    only the halo ring (no full zero-fill)."""
    zrow = jnp.zeros((N, 1, OW + 2, OC), jnp.bfloat16)
    zcol = jnp.zeros((N, OH, 1, OC), jnp.bfloat16)
    hpad[:, 0:1, :, :] = zrow
    hpad[:, OH + 1:OH + 2, :, :] = zrow
    hpad[:, 1:OH + 1, 0:1, :] = zcol
    hpad[:, 1:OH + 1, OW + 1:OW + 2, :] = zcol
    hpad[:, 1:OH + 1, 1:OW + 1, :] = hb


# ---------------------------------------------------------------------------
# Fused residual-block kernels
# ---------------------------------------------------------------------------
def _residual_down_kernel(p00, p01, p10, p11, w1, w2, wsc,
                          g1, b1, g2, b2, gsc, bsc,
                          o_ref, hpad,
                          *, N, OH, OW, IC, OC):
    """downsample=True:
       out = ReLU(BN(conv3x3_s1(ReLU(BN(conv3x3_s2(x))))) + BN(conv1x1_s2(x)))."""
    M = N * OH * OW
    phases = (p00, p01, p10, p11)   # phase[a,b][n, r, c, :] == x_pad[n, 2r+a, 2c+b, :]

    # ---- conv1: 3x3 / stride 2 / pad 1 — one matmul with K = 9*IC ----
    wins = []
    for t in range(9):
        i, j = t // 3, t % 3
        ph = phases[2 * (i % 2) + (j % 2)]
        wins.append(ph[:, i // 2:i // 2 + OH, j // 2:j // 2 + OW, :])
    lhs1 = jnp.concatenate(wins, axis=-1).reshape(M, 9 * IC)          # bf16
    y1 = jnp.dot(lhs1, w1[...], preferred_element_type=jnp.float32)
    h = jnp.maximum(_bn_train(y1, g1[...], b1[...]), 0.0)

    # Stage intermediate (bf16, zero halo ring) in VMEM only — never to HBM.
    _stage_hpad(hpad, h.astype(jnp.bfloat16).reshape(N, OH, OW, OC), N, OH, OW, OC)

    # ---- conv2: 3x3 / stride 1 / pad 1 — one matmul with K = 9*OC ----
    wins2 = [hpad[:, i:i + OH, j:j + OW, :] for i in range(3) for j in range(3)]
    lhs2 = jnp.concatenate(wins2, axis=-1).reshape(M, 9 * OC)
    y2 = _bn_train(jnp.dot(lhs2, w2[...], preferred_element_type=jnp.float32),
                   g2[...], b2[...])

    # ---- shortcut: 1x1 / stride 2 — reuse conv1's center-tap LHS chunk ----
    sc_in = lhs1[:, 4 * IC:5 * IC]                                    # == x at stride 2
    sc = _bn_train(jnp.dot(sc_in, wsc[...], preferred_element_type=jnp.float32),
                   gsc[...], bsc[...])

    o_ref[...] = jnp.maximum(y2 + sc, 0.0).astype(o_ref.dtype)


def _residual_identity_kernel(xp, w1, w2, g1, b1, g2, b2,
                              o_ref, hpad, *, N, H, W, C):
    """downsample=False:  out = ReLU(BN(conv2(ReLU(BN(conv1(x))))) + x)."""
    M = N * H * W

    # ---- conv1: 3x3 / stride 1 / pad 1 — one matmul with K = 9*C ----
    wins = [xp[:, i:i + H, j:j + W, :] for i in range(3) for j in range(3)]
    lhs1 = jnp.concatenate(wins, axis=-1).reshape(M, 9 * C)           # bf16
    y1 = jnp.dot(lhs1, w1[...], preferred_element_type=jnp.float32)
    h = jnp.maximum(_bn_train(y1, g1[...], b1[...]), 0.0)

    _stage_hpad(hpad, h.astype(jnp.bfloat16).reshape(N, H, W, C), N, H, W, C)

    # ---- conv2: 3x3 / stride 1 / pad 1 ----
    wins2 = [hpad[:, i:i + H, j:j + W, :] for i in range(3) for j in range(3)]
    lhs2 = jnp.concatenate(wins2, axis=-1).reshape(M, 9 * C)
    y2 = _bn_train(jnp.dot(lhs2, w2[...], preferred_element_type=jnp.float32),
                   g2[...], b2[...])

    # Residual == conv1's center-tap chunk (== x); no second input DMA.
    res = lhs1[:, 4 * C:5 * C].astype(jnp.float32)
    o_ref[...] = jnp.maximum(y2 + res, 0.0).astype(o_ref.dtype)


# ---------------------------------------------------------------------------
# Wrapper (NHWC in -> NHWC bf16 out; blocks chain in NHWC with no transposes)
# ---------------------------------------------------------------------------
def my_inverted_residual(params, x_nhwc):
    down = params['downsample']
    x = x_nhwc.astype(jnp.bfloat16)                 # single activation cast
    N, H, W, IC = x.shape
    OC = params['w1'].shape[0]

    # (OC, IC, 3, 3) -> (9*IC, OC), tap-major rows, bf16 MXU feed.
    w1 = jnp.transpose(params['w1'], (2, 3, 1, 0)).reshape(9 * IC, OC).astype(jnp.bfloat16)
    w2 = jnp.transpose(params['w2'], (2, 3, 1, 0)).reshape(9 * OC, OC).astype(jnp.bfloat16)
    g1 = params['g1'].reshape(1, OC).astype(jnp.float32)
    b1 = params['b1'].reshape(1, OC).astype(jnp.float32)
    g2 = params['g2'].reshape(1, OC).astype(jnp.float32)
    b2 = params['b2'].reshape(1, OC).astype(jnp.float32)

    xp = jnp.pad(x, ((0, 0), (1, 1), (1, 1), (0, 0)))               # zero pad = 1

    if down:
        OH, OW = (H - 1) // 2 + 1, (W - 1) // 2 + 1
        # Pad to even spatial dims so the four parity phases share one shape.
        xp = jnp.pad(xp, ((0, 0), (0, (H + 2) % 2), (0, (W + 2) % 2), (0, 0)))
        phases = [xp[:, a::2, b::2, :] for a in (0, 1) for b in (0, 1)]
        wsc = jnp.transpose(params['wsc'].reshape(OC, IC), (1, 0)).astype(jnp.bfloat16)
        gsc = params['gsc'].reshape(1, OC).astype(jnp.float32)
        bsc = params['bsc'].reshape(1, OC).astype(jnp.float32)

        args = (*phases, w1, w2, wsc, g1, b1, g2, b2, gsc, bsc)
        kernel = functools.partial(_residual_down_kernel,
                                   N=N, OH=OH, OW=OW, IC=IC, OC=OC)
    else:
        assert IC == OC, "identity residual requires in_channels == out_channels"
        OH, OW = H, W
        args = (xp, w1, w2, g1, b1, g2, b2)
        kernel = functools.partial(_residual_identity_kernel, N=N, H=H, W=W, C=OC)

    M = N * OH * OW
    y = pl.pallas_call(
        kernel,
        grid=(1,),
        in_specs=[_full_spec(a.shape) for a in args],
        out_specs=_full_spec((M, OC)),
        out_shape=jax.ShapeDtypeStruct((M, OC), jnp.bfloat16),       # lane-dense bf16
        scratch_shapes=[pltpu.VMEM((N, OH + 2, OW + 2, OC), jnp.bfloat16)],
        compiler_params=_COMPILER_PARAMS,
    )(*args)
    return y.reshape(N, OH, OW, OC)                                  # stay NHWC


# ---------------------------------------------------------------------------
# Deterministic parameters + pure-JAX reference (for a self-check)
# ---------------------------------------------------------------------------
def _conv_w(key, oc, ic, kh, kw):
    fan_in = ic * kh * kw
    return jax.random.normal(key, (oc, ic, kh, kw), jnp.float32) * jnp.sqrt(2.0 / fan_in)


def init_block_params(key, in_channels, out_channels, downsample):
    k1, k2, k3 = jax.random.split(key, 3)
    p = {
        'downsample': downsample,
        'w1': _conv_w(k1, out_channels, in_channels, 3, 3),
        'g1': jnp.ones((out_channels,), jnp.float32),
        'b1': jnp.zeros((out_channels,), jnp.float32),
        'w2': _conv_w(k2, out_channels, out_channels, 3, 3),
        'g2': jnp.ones((out_channels,), jnp.float32),
        'b2': jnp.zeros((out_channels,), jnp.float32),
    }
    if downsample:
        p['wsc'] = _conv_w(k3, out_channels, in_channels, 1, 1)
        p['gsc'] = jnp.ones((out_channels,), jnp.float32)
        p['bsc'] = jnp.zeros((out_channels,), jnp.float32)
    return p


def _conv_ref(x_nhwc, w_oihw, stride, pad):
    return jax.lax.conv_general_dilated(
        x_nhwc, jnp.transpose(w_oihw, (2, 3, 1, 0)),
        window_strides=(stride, stride), padding=((pad, pad), (pad, pad)),
        dimension_numbers=('NHWC', 'HWIO', 'NHWC'))


def _bn_ref(y, gamma, beta):
    mean = jnp.mean(y, axis=(0, 1, 2), keepdims=True)
    var = jnp.mean((y - mean) ** 2, axis=(0, 1, 2), keepdims=True)
    return (y - mean) * jax.lax.rsqrt(var + EPS) * gamma + beta


def my_inverted_residual_ref(params, x_nhwc):
    x = x_nhwc.astype(jnp.float32)
    s1 = 2 if params['downsample'] else 1
    h = jnp.maximum(_bn_ref(_conv_ref(x, params['w1'], s1, 1),
                            params['g1'], params['b1']), 0.0)
    y = _bn_ref(_conv_ref(h, params['w2'], 1, 1), params['g2'], params['b2'])
    if params['downsample']:
        sc = _bn_ref(_conv_ref(x, params['wsc'], 2, 0), params['gsc'], params['bsc'])
    else:
        sc = x
    return jnp.maximum(y + sc, 0.0)


if __name__ == "__main__":
    key = jax.random.PRNGKey(0)
    kx, ka, kb = jax.random.split(key, 3)

    # Block A: myInvertedResidual(128, 128, downsample=True)  on (2, 128, 16, 16)
    # Block B: myInvertedResidual(128, 128, downsample=False) on block A's output
    # (128 channels keep every concat / slice lane-tile aligned.)
    params_a = init_block_params(ka, 128, 128, downsample=True)
    params_b = init_block_params(kb, 128, 128, downsample=False)

    x_nchw = jax.random.normal(kx, (2, 128, 16, 16), jnp.float32)    # NCHW like PyTorch
    x = jnp.transpose(x_nchw, (0, 2, 3, 1))                          # chain in NHWC

    fwd_a = jax.jit(lambda inp: my_inverted_residual(params_a, inp))
    fwd_b = jax.jit(lambda inp: my_inverted_residual(params_b, inp))

    y_a = jax.block_until_ready(fwd_a(x))
    y_b = jax.block_until_ready(fwd_b(y_a))

    assert y_a.shape == (2, 8, 8, 128), y_a.shape
    assert y_b.shape == (2, 8, 8, 128), y_b.shape
    assert y_a.dtype == jnp.bfloat16 and y_b.dtype == jnp.bfloat16

    y_a32 = y_a.astype(jnp.float32)
    y_b32 = y_b.astype(jnp.float32)
    assert bool(jnp.all(jnp.isfinite(y_a32))) and bool(jnp.all(jnp.isfinite(y_b32)))

    # Loose tolerance: MXU feeds and the output are bf16 (f32 accumulation / BN).
    ref_a = my_inverted_residual_ref(params_a, x)
    ref_b = my_inverted_residual_ref(params_b, y_a32)
    assert float(jnp.max(jnp.abs(y_a32 - ref_a))) < 0.25
    assert float(jnp.max(jnp.abs(y_b32 - ref_b))) < 0.25

    print("KERNEL_OK")
</pallas_src>

<mosaic_0001>
module attributes {stable_mosaic.version = 11 : i64} {
  func.func @_residual_down_kernel(%arg0: i32, %arg1: memref<2x9x9x128xbf16, #tpu.memory_space<vmem>>, %arg2: memref<2x9x9x128xbf16, #tpu.memory_space<vmem>>, %arg3: memref<2x9x9x128xbf16, #tpu.memory_space<vmem>>, %arg4: memref<2x9x9x128xbf16, #tpu.memory_space<vmem>>, %arg5: memref<1152x128xbf16, #tpu.memory_space<vmem>>, %arg6: memref<1152x128xbf16, #tpu.memory_space<vmem>>, %arg7: memref<128x128xbf16, #tpu.memory_space<vmem>>, %arg8: memref<1x128xf32, #tpu.memory_space<vmem>>, %arg9: memref<1x128xf32, #tpu.memory_space<vmem>>, %arg10: memref<1x128xf32, #tpu.memory_space<vmem>>, %arg11: memref<1x128xf32, #tpu.memory_space<vmem>>, %arg12: memref<1x128xf32, #tpu.memory_space<vmem>>, %arg13: memref<1x128xf32, #tpu.memory_space<vmem>>, %arg14: memref<128x128xbf16, #tpu.memory_space<vmem>>, %arg15: memref<2x10x10x128xbf16, #tpu.memory_space<vmem>>) attributes {dimension_semantics = [#tpu.dimension_semantics<arbitrary>], iteration_bounds = array<i64: 1>, scalar_prefetch = 0 : i64, scratch_operands = 1 : i64, tpu.core_type = #tpu.core_type<tc>, window_params = [{pipeline_mode = #tpu.pipeline_mode<synchronous>, transform_indices = @transform_0, window_bounds = array<i64: 2, 9, 9, 128>}, {pipeline_mode = #tpu.pipeline_mode<synchronous>, transform_indices = @transform_1, window_bounds = array<i64: 2, 9, 9, 128>}, {pipeline_mode = #tpu.pipeline_mode<synchronous>, transform_indices = @transform_2, window_bounds = array<i64: 2, 9, 9, 128>}, {pipeline_mode = #tpu.pipeline_mode<synchronous>, transform_indices = @transform_3, window_bounds = array<i64: 2, 9, 9, 128>}, {pipeline_mode = #tpu.pipeline_mode<synchronous>, transform_indices = @transform_4, window_bounds = array<i64: 1152, 128>}, {pipeline_mode = #tpu.pipeline_mode<synchronous>, transform_indices = @transform_5, window_bounds = array<i64: 1152, 128>}, {pipeline_mode = #tpu.pipeline_mode<synchronous>, transform_indices = @transform_6, window_bounds = array<i64: 128, 128>}, {pipeline_mode = #tpu.pipeline_mode<synchronous>, transform_indices = @transform_7, window_bounds = array<i64: 1, 128>}, {pipeline_mode = #tpu.pipeline_mode<synchronous>, transform_indices = @transform_8, window_bounds = array<i64: 1, 128>}, {pipeline_mode = #tpu.pipeline_mode<synchronous>, transform_indices = @transform_9, window_bounds = array<i64: 1, 128>}, {pipeline_mode = #tpu.pipeline_mode<synchronous>, transform_indices = @transform_10, window_bounds = array<i64: 1, 128>}, {pipeline_mode = #tpu.pipeline_mode<synchronous>, transform_indices = @transform_11, window_bounds = array<i64: 1, 128>}, {pipeline_mode = #tpu.pipeline_mode<synchronous>, transform_indices = @transform_12, window_bounds = array<i64: 1, 128>}, {pipeline_mode = #tpu.pipeline_mode<synchronous>, transform_indices = @transform_13, window_bounds = array<i64: 128, 128>}]} {
    %c0 = arith.constant 0 : index
    %c0_0 = arith.constant 0 : index
    %c0_1 = arith.constant 0 : index
    %c0_2 = arith.constant 0 : index
    %0 = vector.load %arg1[%c0, %c0_0, %c0_1, %c0_2] : memref<2x9x9x128xbf16, #tpu.memory_space<vmem>>, vector<2x8x8x128xbf16>
    %c0_3 = arith.constant 0 : index
    %c0_4 = arith.constant 0 : index
    %c0_5 = arith.constant 0 : index
    %c0_6 = arith.constant 0 : index
    %1 = vector.load %arg2[%c0_3, %c0_4, %c0_5, %c0_6] : memref<2x9x9x128xbf16, #tpu.memory_space<vmem>>, vector<2x8x8x128xbf16>
    %c0_7 = arith.constant 0 : index
    %c0_8 = arith.constant 0 : index
    %c1 = arith.constant 1 : index
    %c0_9 = arith.constant 0 : index
    %2 = vector.load %arg1[%c0_7, %c0_8, %c1, %c0_9] : memref<2x9x9x128xbf16, #tpu.memory_space<vmem>>, vector<2x8x8x128xbf16>
    %c0_10 = arith.constant 0 : index
    %c0_11 = arith.constant 0 : index
    %c0_12 = arith.constant 0 : index
    %c0_13 = arith.constant 0 : index
    %3 = vector.load %arg3[%c0_10, %c0_11, %c0_12, %c0_13] : memref<2x9x9x128xbf16, #tpu.memory_space<vmem>>, vector<2x8x8x128xbf16>
    %c0_14 = arith.constant 0 : index
    %c0_15 = arith.constant 0 : index
    %c0_16 = arith.constant 0 : index
    %c0_17 = arith.constant 0 : index
    %4 = vector.load %arg4[%c0_14, %c0_15, %c0_16, %c0_17] : memref<2x9x9x128xbf16, #tpu.memory_space<vmem>>, vector<2x8x8x128xbf16>
    %c0_18 = arith.constant 0 : index
    %c0_19 = arith.constant 0 : index
    %c1_20 = arith.constant 1 : index
    %c0_21 = arith.constant 0 : index
    %5 = vector.load %arg3[%c0_18, %c0_19, %c1_20, %c0_21] : memref<2x9x9x128xbf16, #tpu.memory_space<vmem>>, vector<2x8x8x128xbf16>
    %c0_22 = arith.constant 0 : index
    %c1_23 = arith.constant 1 : index
    %c0_24 = arith.constant 0 : index
    %c0_25 = arith.constant 0 : index
    %6 = vector.load %arg1[%c0_22, %c1_23, %c0_24, %c0_25] : memref<2x9x9x128xbf16, #tpu.memory_space<vmem>>, vector<2x8x8x128xbf16>
    %c0_26 = arith.constant 0 : index
    %c1_27 = arith.constant 1 : index
    %c0_28 = arith.constant 0 : index
    %c0_29 = arith.constant 0 : index
    %7 = vector.load %arg2[%c0_26, %c1_27, %c0_28, %c0_29] : memref<2x9x9x128xbf16, #tpu.memory_space<vmem>>, vector<2x8x8x128xbf16>
    %c0_30 = arith.constant 0 : index
    %c1_31 = arith.constant 1 : index
    %c1_32 = arith.constant 1 : index
    %c0_33 = arith.constant 0 : index
    %8 = vector.load %arg1[%c0_30, %c1_31, %c1_32, %c0_33] : memref<2x9x9x128xbf16, #tpu.memory_space<vmem>>, vector<2x8x8x128xbf16>
    %9 = tpu.concatenate %0, %1, %2, %3, %4, %5, %6, %7, %8 in 3 : vector<2x8x8x128xbf16>, vector<2x8x8x128xbf16>, vector<2x8x8x128xbf16>, vector<2x8x8x128xbf16>, vector<2x8x8x128xbf16>, vector<2x8x8x128xbf16>, vector<2x8x8x128xbf16>, vector<2x8x8x128xbf16>, vector<2x8x8x128xbf16> -> vector<2x8x8x1152xbf16>
    %10 = vector.shape_cast %9 : vector<2x8x8x1152xbf16> to vector<128x1152xbf16>
    %c0_34 = arith.constant 0 : index
    %c0_35 = arith.constant 0 : index
    %11 = vector.load %arg5[%c0_34, %c0_35] : memref<1152x128xbf16, #tpu.memory_space<vmem>>, vector<1152x128xbf16>
    %cst = arith.constant dense<0.000000e+00> : vector<128x128xf32>
    %12 = tpu.matmul %10, %11, %cst {dimension_numbers = #tpu.dot_dimension_numbers<[1], [0], [0], [1], [0, 0, 1, 1], [], []>} : vector<128x1152xbf16>, vector<1152x128xbf16>, vector<128x128xf32> -> vector<128x128xf32>
    %c0_36 = arith.constant 0 : index
    %c0_37 = arith.constant 0 : index
    %13 = vector.load %arg8[%c0_36, %c0_37] : memref<1x128xf32, #tpu.memory_space<vmem>>, vector<1x128xf32>
    %c0_38 = arith.constant 0 : index
    %c0_39 = arith.constant 0 : index
    %14 = vector.load %arg9[%c0_38, %c0_39] : memref<1x128xf32, #tpu.memory_space<vmem>>, vector<1x128xf32>
    %cst_40 = arith.constant dense<0.000000e+00> : vector<128xf32>
    %15 = vector.multi_reduction <add>, %12, %cst_40 [0] : vector<128x128xf32> to vector<128xf32>
    %16 = vector.shape_cast %15 : vector<128xf32> to vector<1x128xf32>
    %cst_41 = arith.constant 7.812500e-03 : f32
    %17 = vector.broadcast %cst_41 : f32 to vector<1x128xf32>
    %18 = arith.mulf %16, %17 : vector<1x128xf32>
    %19 = arith.mulf %12, %12 : vector<128x128xf32>
    %cst_42 = arith.constant dense<0.000000e+00> : vector<128xf32>
    %20 = vector.multi_reduction <add>, %19, %cst_42 [0] : vector<128x128xf32> to vector<128xf32>
    %21 = vector.shape_cast %20 : vector<128xf32> to vector<1x128xf32>
    %cst_43 = arith.constant 7.812500e-03 : f32
    %22 = vector.broadcast %cst_43 : f32 to vector<1x128xf32>
    %23 = arith.mulf %21, %22 : vector<1x128xf32>
    %24 = arith.mulf %18, %18 : vector<1x128xf32>
    %25 = arith.subf %23, %24 : vector<1x128xf32>
    %cst_44 = arith.constant 9.99999974E-6 : f32
    %26 = vector.broadcast %cst_44 : f32 to vector<1x128xf32>
    %27 = arith.addf %25, %26 : vector<1x128xf32>
    %28 = math.rsqrt %27 : vector<1x128xf32>
    %29 = arith.mulf %13, %28 : vector<1x128xf32>
    %30 = arith.mulf %18, %29 : vector<1x128xf32>
    %31 = arith.subf %14, %30 : vector<1x128xf32>
    %32 = vector.broadcast %29 : vector<1x128xf32> to vector<128x128xf32>
    %33 = arith.mulf %12, %32 : vector<128x128xf32>
    %34 = vector.broadcast %31 : vector<1x128xf32> to vector<128x128xf32>
    %35 = arith.addf %33, %34 : vector<128x128xf32>
    %cst_45 = arith.constant 0.000000e+00 : f32
    %36 = vector.broadcast %cst_45 : f32 to vector<128x128xf32>
    %37 = arith.maximumf %35, %36 : vector<128x128xf32>
    %38 = arith.truncf %37 : vector<128x128xf32> to vector<128x128xbf16>
    %39 = vector.shape_cast %38 : vector<128x128xbf16> to vector<2x8x8x128xbf16>
    %cst_46 = arith.constant 0.000000e+00 : bf16
    %40 = vector.broadcast %cst_46 : bf16 to vector<2x1x10x128xbf16>
    %cst_47 = arith.constant 0.000000e+00 : bf16
    %41 = vector.broadcast %cst_47 : bf16 to vector<2x8x1x128xbf16>
    %c0_48 = arith.constant 0 : index
    %c0_49 = arith.constant 0 : index
    %c0_50 = arith.constant 0 : index
    %c0_51 = arith.constant 0 : index
    %42 = vector.load %arg15[%c0_48, %c0_49, %c0_50, %c0_51] : memref<2x10x10x128xbf16, #tpu.memory_space<vmem>>, vector<2x1x10x128xbf16>
    tpu.vector_store %arg15[%c0_48, %c0_49, %c0_50, %c0_51], %40 {strides = array<i32>} : memref<2x10x10x128xbf16, #tpu.memory_space<vmem>>, vector<2x1x10x128xbf16>,
    %c0_52 = arith.constant 0 : index
    %c9 = arith.constant 9 : index
    %c0_53 = arith.constant 0 : index
    %c0_54 = arith.constant 0 : index
    %43 = vector.load %arg15[%c0_52, %c9, %c0_53, %c0_54] : memref<2x10x10x128xbf16, #tpu.memory_space<vmem>>, vector<2x1x10x128xbf16>
    tpu.vector_store %arg15[%c0_52, %c9, %c0_53, %c0_54], %40 {strides = array<i32>} : memref<2x10x10x128xbf16, #tpu.memory_space<vmem>>, vector<2x1x10x128xbf16>,
    %c0_55 = arith.constant 0 : index
    %c1_56 = arith.constant 1 : index
    %c0_57 = arith.constant 0 : index
    %c0_58 = arith.constant 0 : index
    %44 = vector.load %arg15[%c0_55, %c1_56, %c0_57, %c0_58] : memref<2x10x10x128xbf16, #tpu.memory_space<vmem>>, vector<2x8x1x128xbf16>
    tpu.vector_store %arg15[%c0_55, %c1_56, %c0_57, %c0_58], %41 {strides = array<i32>} : memref<2x10x10x128xbf16, #tpu.memory_space<vmem>>, vector<2x8x1x128xbf16>,
    %c0_59 = arith.constant 0 : index
    %c1_60 = arith.constant 1 : index
    %c9_61 = arith.constant 9 : index
    %c0_62 = arith.constant 0 : index
    %45 = vector.load %arg15[%c0_59, %c1_60, %c9_61, %c0_62] : memref<2x10x10x128xbf16, #tpu.memory_space<vmem>>, vector<2x8x1x128xbf16>
    tpu.vector_store %arg15[%c0_59, %c1_60, %c9_61, %c0_62], %41 {strides = array<i32>} : memref<2x10x10x128xbf16, #tpu.memory_space<vmem>>, vector<2x8x1x128xbf16>,
    %c0_63 = arith.constant 0 : index
    %c1_64 = arith.constant 1 : index
    %c1_65 = arith.constant 1 : index
    %c0_66 = arith.constant 0 : index
    %46 = vector.load %arg15[%c0_63, %c1_64, %c1_65, %c0_66] : memref<2x10x10x128xbf16, #tpu.memory_space<vmem>>, vector<2x8x8x128xbf16>
    tpu.vector_store %arg15[%c0_63, %c1_64, %c1_65, %c0_66], %39 {strides = array<i32>} : memref<2x10x10x128xbf16, #tpu.memory_space<vmem>>, vector<2x8x8x128xbf16>,
    %c0_67 = arith.constant 0 : index
    %c0_68 = arith.constant 0 : index
    %c0_69 = arith.constant 0 : index
    %c0_70 = arith.constant 0 : index
    %47 = vector.load %arg15[%c0_67, %c0_68, %c0_69, %c0_70] : memref<2x10x10x128xbf16, #tpu.memory_space<vmem>>, vector<2x8x8x128xbf16>
    %c0_71 = arith.constant 0 : index
    %c0_72 = arith.constant 0 : index
    %c1_73 = arith.constant 1 : index
    %c0_74 = arith.constant 0 : index
    %48 = vector.load %arg15[%c0_71, %c0_72, %c1_73, %c0_74] : memref<2x10x10x128xbf16, #tpu.memory_space<vmem>>, vector<2x8x8x128xbf16>
    %c0_75 = arith.constant 0 : index
    %c0_76 = arith.constant 0 : index
    %c2 = arith.constant 2 : index
    %c0_77 = arith.constant 0 : index
    %49 = vector.load %arg15[%c0_75, %c0_76, %c2, %c0_77] : memref<2x10x10x128xbf16, #tpu.memory_space<vmem>>, vector<2x8x8x128xbf16>
    %c0_78 = arith.constant 0 : index
    %c1_79 = arith.constant 1 : index
    %c0_80 = arith.constant 0 : index
    %c0_81 = arith.constant 0 : index
    %50 = vector.load %arg15[%c0_78, %c1_79, %c0_80, %c0_81] : memref<2x10x10x128xbf16, #tpu.memory_space<vmem>>, vector<2x8x8x128xbf16>
    %c0_82 = arith.constant 0 : index
    %c1_83 = arith.constant 1 : index
    %c1_84 = arith.constant 1 : index
    %c0_85 = arith.constant 0 : index
    %51 = vector.load %arg15[%c0_82, %c1_83, %c1_84, %c0_85] : memref<2x10x10x128xbf16, #tpu.memory_space<vmem>>, vector<2x8x8x128xbf16>
    %c0_86 = arith.constant 0 : index
    %c1_87 = arith.constant 1 : index
    %c2_88 = arith.constant 2 : index
    %c0_89 = arith.constant 0 : index
    %52 = vector.load %arg15[%c0_86, %c1_87, %c2_88, %c0_89] : memref<2x10x10x128xbf16, #tpu.memory_space<vmem>>, vector<2x8x8x128xbf16>
    %c0_90 = arith.constant 0 : index
    %c2_91 = arith.constant 2 : index
    %c0_92 = arith.constant 0 : index
    %c0_93 = arith.constant 0 : index
    %53 = vector.load %arg15[%c0_90, %c2_91, %c0_92, %c0_93] : memref<2x10x10x128xbf16, #tpu.memory_space<vmem>>, vector<2x8x8x128xbf16>
    %c0_94 = arith.constant 0 : index
    %c2_95 = arith.constant 2 : index
    %c1_96 = arith.constant 1 : index
    %c0_97 = arith.constant 0 : index
    %54 = vector.load %arg15[%c0_94, %c2_95, %c1_96, %c0_97] : memref<2x10x10x128xbf16, #tpu.memory_space<vmem>>, vector<2x8x8x128xbf16>
    %c0_98 = arith.constant 0 : index
    %c2_99 = arith.constant 2 : index
    %c2_100 = arith.constant 2 : index
    %c0_101 = arith.constant 0 : index
    %55 = vector.load %arg15[%c0_98, %c2_99, %c2_100, %c0_101] : memref<2x10x10x128xbf16, #tpu.memory_space<vmem>>, vector<2x8x8x128xbf16>
    %56 = tpu.concatenate %47, %48, %49, %50, %51, %52, %53, %54, %55 in 3 : vector<2x8x8x128xbf16>, vector<2x8x8x128xbf16>, vector<2x8x8x128xbf16>, vector<2x8x8x128xbf16>, vector<2x8x8x128xbf16>, vector<2x8x8x128xbf16>, vector<2x8x8x128xbf16>, vector<2x8x8x128xbf16>, vector<2x8x8x128xbf16> -> vector<2x8x8x1152xbf16>
    %57 = vector.shape_cast %56 : vector<2x8x8x1152xbf16> to vector<128x1152xbf16>
    %c0_102 = arith.constant 0 : index
    %c0_103 = arith.constant 0 : index
    %58 = vector.load %arg6[%c0_102, %c0_103] : memref<1152x128xbf16, #tpu.memory_space<vmem>>, vector<1152x128xbf16>
    %cst_104 = arith.constant dense<0.000000e+00> : vector<128x128xf32>
    %59 = tpu.matmul %57, %58, %cst_104 {dimension_numbers = #tpu.dot_dimension_numbers<[1], [0], [0], [1], [0, 0, 1, 1], [], []>} : vector<128x1152xbf16>, vector<1152x128xbf16>, vector<128x128xf32> -> vector<128x128xf32>
    %c0_105 = arith.constant 0 : index
    %c0_106 = arith.constant 0 : index
    %60 = vector.load %arg10[%c0_105, %c0_106] : memref<1x128xf32, #tpu.memory_space<vmem>>, vector<1x128xf32>
    %c0_107 = arith.constant 0 : index
    %c0_108 = arith.constant 0 : index
    %61 = vector.load %arg11[%c0_107, %c0_108] : memref<1x128xf32, #tpu.memory_space<vmem>>, vector<1x128xf32>
    %cst_109 = arith.constant dense<0.000000e+00> : vector<128xf32>
    %62 = vector.multi_reduction <add>, %59, %cst_109 [0] : vector<128x128xf32> to vector<128xf32>
    %63 = vector.shape_cast %62 : vector<128xf32> to vector<1x128xf32>
    %cst_110 = arith.constant 7.812500e-03 : f32
    %64 = vector.broadcast %cst_110 : f32 to vector<1x128xf32>
    %65 = arith.mulf %63, %64 : vector<1x128xf32>
    %66 = arith.mulf %59, %59 : vector<128x128xf32>
    %cst_111 = arith.constant dense<0.000000e+00> : vector<128xf32>
    %67 = vector.multi_reduction <add>, %66, %cst_111 [0] : vector<128x128xf32> to vector<128xf32>
    %68 = vector.shape_cast %67 : vector<128xf32> to vector<1x128xf32>
    %cst_112 = arith.constant 7.812500e-03 : f32
    %69 = vector.broadcast %cst_112 : f32 to vector<1x128xf32>
    %70 = arith.mulf %68, %69 : vector<1x128xf32>
    %71 = arith.mulf %65, %65 : vector<1x128xf32>
    %72 = arith.subf %70, %71 : vector<1x128xf32>
    %cst_113 = arith.constant 9.99999974E-6 : f32
    %73 = vector.broadcast %cst_113 : f32 to vector<1x128xf32>
    %74 = arith.addf %72, %73 : vector<1x128xf32>
    %75 = math.rsqrt %74 : vector<1x128xf32>
    %76 = arith.mulf %60, %75 : vector<1x128xf32>
    %77 = arith.mulf %65, %76 : vector<1x128xf32>
    %78 = arith.subf %61, %77 : vector<1x128xf32>
    %79 = vector.broadcast %76 : vector<1x128xf32> to vector<128x128xf32>
    %80 = arith.mulf %59, %79 : vector<128x128xf32>
    %81 = vector.broadcast %78 : vector<1x128xf32> to vector<128x128xf32>
    %82 = arith.addf %80, %81 : vector<128x128xf32>
    %83 = vector.extract_strided_slice %10 {offsets = [0, 512], sizes = [128, 128], strides = [1, 1]} : vector<128x1152xbf16> to vector<128x128xbf16>
    %c0_114 = arith.constant 0 : index
    %c0_115 = arith.constant 0 : index
    %84 = vector.load %arg7[%c0_114, %c0_115] : memref<128x128xbf16, #tpu.memory_space<vmem>>, vector<128x128xbf16>
    %cst_116 = arith.constant dense<0.000000e+00> : vector<128x128xf32>
    %85 = tpu.matmul %83, %84, %cst_116 {dimension_numbers = #tpu.dot_dimension_numbers<[1], [0], [0], [1], [0, 0, 1, 1], [], []>} : vector<128x128xbf16>, vector<128x128xbf16>, vector<128x128xf32> -> vector<128x128xf32>
    %c0_117 = arith.constant 0 : index
    %c0_118 = arith.constant 0 : index
    %86 = vector.load %arg12[%c0_117, %c0_118] : memref<1x128xf32, #tpu.memory_space<vmem>>, vector<1x128xf32>
    %c0_119 = arith.constant 0 : index
    %c0_120 = arith.constant 0 : index
    %87 = vector.load %arg13[%c0_119, %c0_120] : memref<1x128xf32, #tpu.memory_space<vmem>>, vector<1x128xf32>
    %cst_121 = arith.constant dense<0.000000e+00> : vector<128xf32>
    %88 = vector.multi_reduction <add>, %85, %cst_121 [0] : vector<128x128xf32> to vector<128xf32>
    %89 = vector.shape_cast %88 : vector<128xf32> to vector<1x128xf32>
    %cst_122 = arith.constant 7.812500e-03 : f32
    %90 = vector.broadcast %cst_122 : f32 to vector<1x128xf32>
    %91 = arith.mulf %89, %90 : vector<1x128xf32>
    %92 = arith.mulf %85, %85 : vector<128x128xf32>
    %cst_123 = arith.constant dense<0.000000e+00> : vector<128xf32>
    %93 = vector.multi_reduction <add>, %92, %cst_123 [0] : vector<128x128xf32> to vector<128xf32>
    %94 = vector.shape_cast %93 : vector<128xf32> to vector<1x128xf32>
    %cst_124 = arith.constant 7.812500e-03 : f32
    %95 = vector.broadcast %cst_124 : f32 to vector<1x128xf32>
    %96 = arith.mulf %94, %95 : vector<1x128xf32>
    %97 = arith.mulf %91, %91 : vector<1x128xf32>
    %98 = arith.subf %96, %97 : vector<1x128xf32>
    %cst_125 = arith.constant 9.99999974E-6 : f32
    %99 = vector.broadcast %cst_125 : f32 to vector<1x128xf32>
    %100 = arith.addf %98, %99 : vector<1x128xf32>
    %101 = math.rsqrt %100 : vector<1x128xf32>
    %102 = arith.mulf %86, %101 : vector<1x128xf32>
    %103 = arith.mulf %91, %102 : vector<1x128xf32>
    %104 = arith.subf %87, %103 : vector<1x128xf32>
    %105 = vector.broadcast %102 : vector<1x128xf32> to vector<128x128xf32>
    %106 = arith.mulf %85, %105 : vector<128x128xf32>
    %107 = vector.broadcast %104 : vector<1x128xf32> to vector<128x128xf32>
    %108 = arith.addf %106, %107 : vector<128x128xf32>
    %109 = arith.addf %82, %108 : vector<128x128xf32>
    %cst_126 = arith.constant 0.000000e+00 : f32
    %110 = vector.broadcast %cst_126 : f32 to vector<128x128xf32>
    %111 = arith.maximumf %109, %110 : vector<128x128xf32>
    %112 = arith.truncf %111 : vector<128x128xf32> to vector<128x128xbf16>
    %c0_127 = arith.constant 0 : index
    %c0_128 = arith.constant 0 : index
    %113 = vector.load %arg14[%c0_127, %c0_128] : memref<128x128xbf16, #tpu.memory_space<vmem>>, vector<128x128xbf16>
    tpu.vector_store %arg14[%c0_127, %c0_128], %112 {strides = array<i32>} : memref<128x128xbf16, #tpu.memory_space<vmem>>, vector<128x128xbf16>,
    return
  }
  func.func @transform_0(%arg0: i32) -> (i32, i32, i32, i32) {
    %c0_i32 = arith.constant 0 : i32
    %c0_i32_0 = arith.constant 0 : i32
    %c0_i32_1 = arith.constant 0 : i32
    %c0_i32_2 = arith.constant 0 : i32
    %c0_i32_3 = arith.constant 0 : i32
    return %c0_i32, %c0_i32_0, %c0_i32_1, %c0_i32_2 : i32, i32, i32, i32
  }
  func.func @transform_1(%arg0: i32) -> (i32, i32, i32, i32) {
    %c0_i32 = arith.constant 0 : i32
    %c0_i32_0 = arith.constant 0 : i32
    %c0_i32_1 = arith.constant 0 : i32
    %c0_i32_2 = arith.constant 0 : i32
    %c0_i32_3 = arith.constant 0 : i32
    return %c0_i32, %c0_i32_0, %c0_i32_1, %c0_i32_2 : i32, i32, i32, i32
  }
  func.func @transform_2(%arg0: i32) -> (i32, i32, i32, i32) {
    %c0_i32 = arith.constant 0 : i32
    %c0_i32_0 = arith.constant 0 : i32
    %c0_i32_1 = arith.constant 0 : i32
    %c0_i32_2 = arith.constant 0 : i32
    %c0_i32_3 = arith.constant 0 : i32
    return %c0_i32, %c0_i32_0, %c0_i32_1, %c0_i32_2 : i32, i32, i32, i32
  }
  func.func @transform_3(%arg0: i32) -> (i32, i32, i32, i32) {
    %c0_i32 = arith.constant 0 : i32
    %c0_i32_0 = arith.constant 0 : i32
    %c0_i32_1 = arith.constant 0 : i32
    %c0_i32_2 = arith.constant 0 : i32
    %c0_i32_3 = arith.constant 0 : i32
    return %c0_i32, %c0_i32_0, %c0_i32_1, %c0_i32_2 : i32, i32, i32, i32
  }
  func.func @transform_4(%arg0: i32) -> (i32, i32) {
    %c0_i32 = arith.constant 0 : i32
    %c0_i32_0 = arith.constant 0 : i32
    %c0_i32_1 = arith.constant 0 : i32
    return %c0_i32, %c0_i32_0 : i32, i32
  }
  func.func @transform_5(%arg0: i32) -> (i32, i32) {
    %c0_i32 = arith.constant 0 : i32
    %c0_i32_0 = arith.constant 0 : i32
    %c0_i32_1 = arith.constant 0 : i32
    return %c0_i32, %c0_i32_0 : i32, i32
  }
  func.func @transform_6(%arg0: i32) -> (i32, i32) {
    %c0_i32 = arith.constant 0 : i32
    %c0_i32_0 = arith.constant 0 : i32
    %c0_i32_1 = arith.constant 0 : i32
    return %c0_i32, %c0_i32_0 : i32, i32
  }
  func.func @transform_7(%arg0: i32) -> (i32, i32) {
    %c0_i32 = arith.constant 0 : i32
    %c0_i32_0 = arith.constant 0 : i32
    %c0_i32_1 = arith.constant 0 : i32
    return %c0_i32, %c0_i32_0 : i32, i32
  }
  func.func @transform_8(%arg0: i32) -> (i32, i32) {
    %c0_i32 = arith.constant 0 : i32
    %c0_i32_0 = arith.constant 0 : i32
    %c0_i32_1 = arith.constant 0 : i32
    return %c0_i32, %c0_i32_0 : i32, i32
  }
  func.func @transform_9(%arg0: i32) -> (i32, i32) {
    %c0_i32 = arith.constant 0 : i32
    %c0_i32_0 = arith.constant 0 : i32
    %c0_i32_1 = arith.constant 0 : i32
    return %c0_i32, %c0_i32_0 : i32, i32
  }
  func.func @transform_10(%arg0: i32) -> (i32, i32) {
    %c0_i32 = arith.constant 0 : i32
    %c0_i32_0 = arith.constant 0 : i32
    %c0_i32_1 = arith.constant 0 : i32
    return %c0_i32, %c0_i32_0 : i32, i32
  }
  func.func @transform_11(%arg0: i32) -> (i32, i32) {
    %c0_i32 = arith.constant 0 : i32
    %c0_i32_0 = arith.constant 0 : i32
    %c0_i32_1 = arith.constant 0 : i32
    return %c0_i32, %c0_i32_0 : i32, i32
  }
  func.func @transform_12(%arg0: i32) -> (i32, i32) {
    %c0_i32 = arith.constant 0 : i32
    %c0_i32_0 = arith.constant 0 : i32
    %c0_i32_1 = arith.constant 0 : i32
    return %c0_i32, %c0_i32_0 : i32, i32
  }
  func.func @transform_13(%arg0: i32) -> (i32, i32) {
    %c0_i32 = arith.constant 0 : i32
    %c0_i32_0 = arith.constant 0 : i32
    %c0_i32_1 = arith.constant 0 : i32
    return %c0_i32, %c0_i32_0 : i32, i32
  }
}

</mosaic_0001>

<llo_original>
// kernel: _lambda_.1
$region0: #{_lambda_.1}
  #allocation0 [shape = 'u32[]', space=smem, size = 0x4, offset = 0x4, fixed_abs, tag = 'smem constant byte address 0x4 - core index']
  #allocation1 [shape = 'u32[72,128]{1,0:T(1,128)}', space=vmem, size = 0x9000, scoped, tag = 'internal scratch']
  #allocation2 [shape = 'bf16[2,10,10,128]{3,2,1,0:T(8,128)(2,1)}', space=vmem, size = 0x14000, scoped, tag = 'scratch operand']
  %s0 = inlined_call_operand.vmem [shape: bf16[2,9,9,128], index: 0, kind: input, shape index: {}]
  %s1 = inlined_call_operand.vmem [shape: bf16[2,9,9,128], index: 1, kind: input, shape index: {}]
  %s2 = inlined_call_operand.vmem [shape: bf16[2,9,9,128], index: 2, kind: input, shape index: {}]
  %s3 = inlined_call_operand.vmem [shape: bf16[2,9,9,128], index: 3, kind: input, shape index: {}]
  %s4 = inlined_call_operand.vmem [shape: bf16[1152,128], index: 4, kind: input, shape index: {}]
  %s5 = inlined_call_operand.vmem [shape: bf16[1152,128], index: 5, kind: input, shape index: {}]
  %s6 = inlined_call_operand.vmem [shape: bf16[128,128], index: 6, kind: input, shape index: {}]
  %s7 = inlined_call_operand.vmem [shape: f32[1,128], index: 7, kind: input, shape index: {}, may-alias: {7,9,11}]
  %s8 = inlined_call_operand.vmem [shape: f32[1,128], index: 8, kind: input, shape index: {}, may-alias: {8,10,12}]
  %s9 = inlined_call_operand.vmem [shape: f32[1,128], index: 9, kind: input, shape index: {}, may-alias: {7,9,11}]
  %s10 = inlined_call_operand.vmem [shape: f32[1,128], index: 10, kind: input, shape index: {}, may-alias: {8,10,12}]
  %s11 = inlined_call_operand.vmem [shape: f32[1,128], index: 11, kind: input, shape index: {}, may-alias: {7,9,11}]
  %s12 = inlined_call_operand.vmem [shape: f32[1,128], index: 12, kind: input, shape index: {}, may-alias: {8,10,12}]
  %s13 = inlined_call_operand.hbm [shape: bf16[128,128], index: 13, kind: output, shape index: {}]
  %s14 = sld [smem:[#allocation0]]
  $region62: #{_lambda_.1} parent=0
    _
  %s16 = ssub.s32 1, %s14
  %s17 = scalar_select 0, %s16, %s14
  $region1: #{_lambda_.1} parent=0
    #allocation3 [shape = 'u8[32768]{0}', space=vmem, size = 0x8000, scoped, tag = 'output window, operand 0, single buffered']
    #allocation4 [shape = 's32[1]{0}', space=sflag, size = 0x4, scoped, tag = 'scoped memory for _lambda_.1']
    %18 = vsyncpa [#allocation4], 0
    // Predicated region
    $region2: #{_lambda_.1} parent=1 // pred_check
      _
    $region3: #{_lambda_.1} parent=1 // pred_check_branch
      %20 = sbr.rel (0) target = $region5
    $region4: #{_lambda_.1} parent=1 // pred_region
      _
    $region5: #{_lambda_.1} parent=1 // pred_fallthru
      _
    // Predicated region
    $region6: #{_lambda_.1} parent=1 // pred_check
      _
    $region7: #{_lambda_.1} parent=1 // pred_check_branch
      %22 = sbr.rel (0) target = $region9
    $region8: #{_lambda_.1} parent=1 // pred_region
      _
    $region9: #{_lambda_.1} parent=1 // pred_fallthru
      _
    // Predicated region
    $region10: #{_lambda_.1} parent=1 // pred_check
      _
    $region11: #{_lambda_.1} parent=1 // pred_check_branch
      %24 = sbr.rel (0) target = $region13
    $region12: #{_lambda_.1} parent=1 // pred_region
      _
    $region13: #{_lambda_.1} parent=1 // pred_fallthru
      _
    // Predicated region
    $region14: #{_lambda_.1} parent=1 // pred_check
      _
    $region15: #{_lambda_.1} parent=1 // pred_check_branch
      %26 = sbr.rel (0) target = $region17
    $region16: #{_lambda_.1} parent=1 // pred_region
      _
    $region17: #{_lambda_.1} parent=1 // pred_fallthru
      _
    // Predicated region
    $region18: #{_lambda_.1} parent=1 // pred_check
      _
    $region19: #{_lambda_.1} parent=1 // pred_check_branch
      %28 = sbr.rel (0) target = $region21
    $region20: #{_lambda_.1} parent=1 // pred_region
      _
    $region21: #{_lambda_.1} parent=1 // pred_fallthru
      _
    // Predicated region
    $region22: #{_lambda_.1} parent=1 // pred_check
      _
    $region23: #{_lambda_.1} parent=1 // pred_check_branch
      %30 = sbr.rel (0) target = $region25
    $region24: #{_lambda_.1} parent=1 // pred_region
      _
    $region25: #{_lambda_.1} parent=1 // pred_fallthru
      _
    // Predicated region
    $region26: #{_lambda_.1} parent=1 // pred_check
      _
    $region27: #{_lambda_.1} parent=1 // pred_check_branch
      %32 = sbr.rel (0) target = $region29
    $region28: #{_lambda_.1} parent=1 // pred_region
      _
    $region29: #{_lambda_.1} parent=1 // pred_fallthru
      _
    // Predicated region
    $region30: #{_lambda_.1} parent=1 // pred_check
      _
    $region31: #{_lambda_.1} parent=1 // pred_check_branch
      %34 = sbr.rel (0) target = $region33
    $region32: #{_lambda_.1} parent=1 // pred_region
      _
    $region33: #{_lambda_.1} parent=1 // pred_fallthru
      _
    // Predicated region
    $region34: #{_lambda_.1} parent=1 // pred_check
      _
    $region35: #{_lambda_.1} parent=1 // pred_check_branch
      %36 = sbr.rel (0) target = $region37
    $region36: #{_lambda_.1} parent=1 // pred_region
      _
    $region37: #{_lambda_.1} parent=1 // pred_fallthru
      _
    // Predicated region
    $region38: #{_lambda_.1} parent=1 // pred_check
      _
    $region39: #{_lambda_.1} parent=1 // pred_check_branch
      %38 = sbr.rel (0) target = $region41
    $region40: #{_lambda_.1} parent=1 // pred_region
      _
    $region41: #{_lambda_.1} parent=1 // pred_fallthru
      _
    // Predicated region
    $region42: #{_lambda_.1} parent=1 // pred_check
      _
    $region43: #{_lambda_.1} parent=1 // pred_check_branch
      %40 = sbr.rel (0) target = $region45
    $region44: #{_lambda_.1} parent=1 // pred_region
      _
    $region45: #{_lambda_.1} parent=1 // pred_fallthru
      _
    // Predicated region
    $region46: #{_lambda_.1} parent=1 // pred_check
      _
    $region47: #{_lambda_.1} parent=1 // pred_check_branch
      %42 = sbr.rel (0) target = $region49
    $region48: #{_lambda_.1} parent=1 // pred_region
      _
    $region49: #{_lambda_.1} parent=1 // pred_fallthru
      _
    // Predicated region
    $region50: #{_lambda_.1} parent=1 // pred_check
      _
    $region51: #{_lambda_.1} parent=1 // pred_check_branch
      %44 = sbr.rel (0) target = $region53
    $region52: #{_lambda_.1} parent=1 // pred_region
      _
    $region53: #{_lambda_.1} parent=1 // pred_fallthru
      _
    %v46 = vld [vmem:[%s0] sm:$0xf]
    %v47 = vld [vmem:[%s0 + $0x8] sm:$0xf]
    %v48 = vld [vmem:[%s0 + $0x10] sm:$0xf]
    %v49 = vld [vmem:[%s0 + $0x18] sm:$0xf]
    %v50 = vld [vmem:[%s0 + $0x20] sm:$0xf]
    %v51 = vld [vmem:[%s0 + $0x28] sm:$0xf]
    %v52 = vld [vmem:[%s0 + $0x30] sm:$0xf]
    %v53 = vld [vmem:[%s0 + $0x38] sm:$0xf]
    %v54 = vld [vmem:[%s0 + $0x48] sm:$0xf]
    %v55 = vld [vmem:[%s0 + $0x50] sm:$0xf]
    %v56 = vld [vmem:[%s0 + $0x58] sm:$0xf]
    %v57 = vld [vmem:[%s0 + $0x60] sm:$0xf]
    %v58 = vld [vmem:[%s0 + $0x68] sm:$0xf]
    %v59 = vld [vmem:[%s0 + $0x70] sm:$0xf]
    %v60 = vld [vmem:[%s0 + $0x78] sm:$0xf]
    %v61 = vld [vmem:[%s0 + $0x80] sm:$0xf]
    %v62 = vld [vmem:[%s1] sm:$0xf]
    %v63 = vld [vmem:[%s1 + $0x8] sm:$0xf]
    %v64 = vld [vmem:[%s1 + $0x10] sm:$0xf]
    %v65 = vld [vmem:[%s1 + $0x18] sm:$0xf]
    %v66 = vld [vmem:[%s1 + $0x20] sm:$0xf]
    %v67 = vld [vmem:[%s1 + $0x28] sm:$0xf]
    %v68 = vld [vmem:[%s1 + $0x30] sm:$0xf]
    %v69 = vld [vmem:[%s1 + $0x38] sm:$0xf]
    %v70 = vld [vmem:[%s1 + $0x48] sm:$0xf]
    %v71 = vld [vmem:[%s1 + $0x50] sm:$0xf]
    %v72 = vld [vmem:[%s1 + $0x58] sm:$0xf]
    %v73 = vld [vmem:[%s1 + $0x60] sm:$0xf]
    %v74 = vld [vmem:[%s1 + $0x68] sm:$0xf]
    %v75 = vld [vmem:[%s1 + $0x70] sm:$0xf]
    %v76 = vld [vmem:[%s1 + $0x78] sm:$0xf]
    %v77 = vld [vmem:[%s1 + $0x80] sm:$0xf]
    %v78 = vld [vmem:[%s0 + $0x4] sm:$0x1]
    %v79 = vld [vmem:[%s0 + $0xc] sm:$0x1]
    %v80 = vld [vmem:[%s0 + $0x14] sm:$0x1]
    %v81 = vld [vmem:[%s0 + $0x1c] sm:$0x1]
    %v82 = vld [vmem:[%s0 + $0x24] sm:$0x1]
    %v83 = vld [vmem:[%s0 + $0x2c] sm:$0x1]
    %v84 = vld [vmem:[%s0 + $0x34] sm:$0x1]
    %v85 = vld [vmem:[%s0 + $0x3c] sm:$0x1]
    %v86 = vld [vmem:[%s0 + $0x4c] sm:$0x1]
    %v87 = vld [vmem:[%s0 + $0x54] sm:$0x1]
    %v88 = vld [vmem:[%s0 + $0x5c] sm:$0x1]
    %v89 = vld [vmem:[%s0 + $0x64] sm:$0x1]
    %v90 = vld [vmem:[%s0 + $0x6c] sm:$0x1]
    %v91 = vld [vmem:[%s0 + $0x74] sm:$0x1]
    %v92 = vld [vmem:[%s0 + $0x7c] sm:$0x1]
    %v93 = vld [vmem:[%s0 + $0x84] sm:$0x1]
    %v94 = vld [vmem:[%s2] sm:$0xf]
    %v95 = vld [vmem:[%s2 + $0x8] sm:$0xf]
    %v96 = vld [vmem:[%s2 + $0x10] sm:$0xf]
    %v97 = vld [vmem:[%s2 + $0x18] sm:$0xf]
    %v98 = vld [vmem:[%s2 + $0x20] sm:$0xf]
    %v99 = vld [vmem:[%s2 + $0x28] sm:$0xf]
    %v100 = vld [vmem:[%s2 + $0x30] sm:$0xf]
    %v101 = vld [vmem:[%s2 + $0x38] sm:$0xf]
    %v102 = vld [vmem:[%s2 + $0x48] sm:$0xf]
    %v103 = vld [vmem:[%s2 + $0x50] sm:$0xf]
    %v104 = vld [vmem:[%s2 + $0x58] sm:$0xf]
    %v105 = vld [vmem:[%s2 + $0x60] sm:$0xf]
    %v106 = vld [vmem:[%s2 + $0x68] sm:$0xf]
    %v107 = vld [vmem:[%s2 + $0x70] sm:$0xf]
    %v108 = vld [vmem:[%s2 + $0x78] sm:$0xf]
    %v109 = vld [vmem:[%s2 + $0x80] sm:$0xf]
    %v110 = vld [vmem:[%s3] sm:$0xf]
    %v111 = vld [vmem:[%s3 + $0x8] sm:$0xf]
    %v112 = vld [vmem:[%s3 + $0x10] sm:$0xf]
    %v113 = vld [vmem:[%s3 + $0x18] sm:$0xf]
    %v114 = vld [vmem:[%s3 + $0x20] sm:$0xf]
    %v115 = vld [vmem:[%s3 + $0x28] sm:$0xf]
    %v116 = vld [vmem:[%s3 + $0x30] sm:$0xf]
    %v117 = vld [vmem:[%s3 + $0x38] sm:$0xf]
    %v118 = vld [vmem:[%s3 + $0x48] sm:$0xf]
    %v119 = vld [vmem:[%s3 + $0x50] sm:$0xf]
    %v120 = vld [vmem:[%s3 + $0x58] sm:$0xf]
    %v121 = vld [vmem:[%s3 + $0x60] sm:$0xf]
    %v122 = vld [vmem:[%s3 + $0x68] sm:$0xf]
    %v123 = vld [vmem:[%s3 + $0x70] sm:$0xf]
    %v124 = vld [vmem:[%s3 + $0x78] sm:$0xf]
    %v125 = vld [vmem:[%s3 + $0x80] sm:$0xf]
    %v126 = vld [vmem:[%s2 + $0x4] sm:$0x1]
    %v127 = vld [vmem:[%s2 + $0xc] sm:$0x1]
    %v128 = vld [vmem:[%s2 + $0x14] sm:$0x1]
    %v129 = vld [vmem:[%s2 + $0x1c] sm:$0x1]
    %v130 = vld [vmem:[%s2 + $0x24] sm:$0x1]
    %v131 = vld [vmem:[%s2 + $0x2c] sm:$0x1]
    %v132 = vld [vmem:[%s2 + $0x34] sm:$0x1]
    %v133 = vld [vmem:[%s2 + $0x3c] sm:$0x1]
    %v134 = vld [vmem:[%s2 + $0x4c] sm:$0x1]
    %v135 = vld [vmem:[%s2 + $0x54] sm:$0x1]
    %v136 = vld [vmem:[%s2 + $0x5c] sm:$0x1]
    %v137 = vld [vmem:[%s2 + $0x64] sm:$0x1]
    %v138 = vld [vmem:[%s2 + $0x6c] sm:$0x1]
    %v139 = vld [vmem:[%s2 + $0x74] sm:$0x1]
    %v140 = vld [vmem:[%s2 + $0x7c] sm:$0x1]
    %v141 = vld [vmem:[%s2 + $0x84] sm:$0x1]
    %s142 = scalar_lea.vmem %s0, 8
    %v143 = vld [vmem:[%s142] sm:$0xf]
    %v144 = vld [vmem:[%s142 + $0x8] sm:$0xf]
    %v145 = vld [vmem:[%s142 + $0x10] sm:$0xf]
    %v146 = vld [vmem:[%s142 + $0x18] sm:$0xf]
    %v147 = vld [vmem:[%s142 + $0x20] sm:$0xf]
    %v148 = vld [vmem:[%s142 + $0x28] sm:$0xf]
    %v149 = vld [vmem:[%s142 + $0x30] sm:$0xf]
    %v150 = vld [vmem:[%s142 + $0x38] sm:$0xf]
    %v151 = vld [vmem:[%s142 + $0x48] sm:$0xf]
    %v152 = vld [vmem:[%s142 + $0x50] sm:$0xf]
    %v153 = vld [vmem:[%s142 + $0x58] sm:$0xf]
    %v154 = vld [vmem:[%s142 + $0x60] sm:$0xf]
    %v155 = vld [vmem:[%s142 + $0x68] sm:$0xf]
    %v156 = vld [vmem:[%s142 + $0x70] sm:$0xf]
    %v157 = vld [vmem:[%s142 + $0x78] sm:$0xf]
    %v158 = vld [vmem:[%s142 + $0x80] sm:$0xf]
    %s159 = scalar_lea.vmem %s1, 8
    %v160 = vld [vmem:[%s159] sm:$0xf]
    %v161 = vld [vmem:[%s159 + $0x8] sm:$0xf]
    %v162 = vld [vmem:[%s159 + $0x10] sm:$0xf]
    %v163 = vld [vmem:[%s159 + $0x18] sm:$0xf]
    %v164 = vld [vmem:[%s159 + $0x20] sm:$0xf]
    %v165 = vld [vmem:[%s159 + $0x28] sm:$0xf]
    %v166 = vld [vmem:[%s159 + $0x30] sm:$0xf]
    %v167 = vld [vmem:[%s159 + $0x38] sm:$0xf]
    %v168 = vld [vmem:[%s159 + $0x48] sm:$0xf]
    %v169 = vld [vmem:[%s159 + $0x50] sm:$0xf]
    %v170 = vld [vmem:[%s159 + $0x58] sm:$0xf]
    %v171 = vld [vmem:[%s159 + $0x60] sm:$0xf]
    %v172 = vld [vmem:[%s159 + $0x68] sm:$0xf]
    %v173 = vld [vmem:[%s159 + $0x70] sm:$0xf]
    %v174 = vld [vmem:[%s159 + $0x78] sm:$0xf]
    %v175 = vld [vmem:[%s159 + $0x80] sm:$0xf]
    %v176 = vld [vmem:[%s142 + $0x4] sm:$0x1]
    %v177 = vld [vmem:[%s142 + $0xc] sm:$0x1]
    %v178 = vld [vmem:[%s142 + $0x14] sm:$0x1]
    %v179 = vld [vmem:[%s142 + $0x1c] sm:$0x1]
    %v180 = vld [vmem:[%s142 + $0x24] sm:$0x1]
    %v181 = vld [vmem:[%s142 + $0x2c] sm:$0x1]
    %v182 = vld [vmem:[%s142 + $0x34] sm:$0x1]
    %v183 = vld [vmem:[%s142 + $0x3c] sm:$0x1]
    %v184 = vld [vmem:[%s142 + $0x4c] sm:$0x1]
    %v185 = vld [vmem:[%s142 + $0x54] sm:$0x1]
    %v186 = vld [vmem:[%s142 + $0x5c] sm:$0x1]
    %v187 = vld [vmem:[%s142 + $0x64] sm:$0x1]
    %v188 = vld [vmem:[%s142 + $0x6c] sm:$0x1]
    %v189 = vld [vmem:[%s142 + $0x74] sm:$0x1]
    %v190 = vld [vmem:[%s142 + $0x7c] sm:$0x1]
    %v191 = vld [vmem:[%s142 + $0x84] sm:$0x1]
    %v224 = vunpack.c.l.b16 %v46
    %v225 = vunpack.c.l.b16 %v78
    %v226 = vunpack.c.l.b16 %v47
    %v227 = vunpack.c.l.b16 %v79
    %v228 = vunpack.c.l.b16 %v48
    %v229 = vunpack.c.l.b16 %v80
    %v230 = vunpack.c.l.b16 %v49
    %v231 = vunpack.c.l.b16 %v81
    %v232 = vunpack.c.l.b16 %v50
    %v233 = vunpack.c.l.b16 %v82
    %v234 = vunpack.c.l.b16 %v51
    %v235 = vunpack.c.l.b16 %v83
    %v236 = vunpack.c.l.b16 %v52
    %v237 = vunpack.c.l.b16 %v84
    %v238 = vunpack.c.l.b16 %v53
    %v239 = vunpack.c.l.b16 %v85
    %v240 = vunpack.c.l.b16 %v54
    %v241 = vunpack.c.l.b16 %v86
    %v242 = vunpack.c.l.b16 %v55
    %v243 = vunpack.c.l.b16 %v87
    %v244 = vunpack.c.l.b16 %v56
    %v245 = vunpack.c.l.b16 %v88
    %v246 = vunpack.c.l.b16 %v57
    %v247 = vunpack.c.l.b16 %v89
    %v248 = vunpack.c.l.b16 %v58
    %v249 = vunpack.c.l.b16 %v90
    %v250 = vunpack.c.l.b16 %v59
    %v251 = vunpack.c.l.b16 %v91
    %v252 = vunpack.c.l.b16 %v60
    %v253 = vunpack.c.l.b16 %v92
    %v254 = vunpack.c.l.b16 %v61
    %v255 = vunpack.c.l.b16 %v93
    %v256 = vpack.c.b16 %v225, %v224
    %v257 = vpack.c.b16 %v227, %v226
    %v258 = vpack.c.b16 %v229, %v228
    %v259 = vpack.c.b16 %v231, %v230
    %v260 = vpack.c.b16 %v233, %v232
    %v261 = vpack.c.b16 %v235, %v234
    %v262 = vpack.c.b16 %v237, %v236
    %v263 = vpack.c.b16 %v239, %v238
    %v264 = vpack.c.b16 %v241, %v240
    %v265 = vpack.c.b16 %v243, %v242
    %v266 = vpack.c.b16 %v245, %v244
    %v267 = vpack.c.b16 %v247, %v246
    %v268 = vpack.c.b16 %v249, %v248
    %v269 = vpack.c.b16 %v251, %v250
    %v270 = vpack.c.b16 %v253, %v252
    %v271 = vpack.c.b16 %v255, %v254
    %v273 = vshrl.u32 %v256, 16
    %v275 = vshll.u32 %v256, 16
    %v277 = vrot.slane %v275, 1
    %v278 = vor.u32 %v273, %v277
    %v280 = vshrl.u32 %v257, 16
    %v282 = vshll.u32 %v257, 16
    %v284 = vrot.slane %v282, 1
    %v285 = vor.u32 %v280, %v284
    %v287 = vshrl.u32 %v258, 16
    %v289 = vshll.u32 %v258, 16
    %v291 = vrot.slane %v289, 1
    %v292 = vor.u32 %v287, %v291
    %v294 = vshrl.u32 %v259, 16
    %v296 = vshll.u32 %v259, 16
    %v298 = vrot.slane %v296, 1
    %v299 = vor.u32 %v294, %v298
    %v301 = vshrl.u32 %v260, 16
    %v303 = vshll.u32 %v260, 16
    %v305 = vrot.slane %v303, 1
    %v306 = vor.u32 %v301, %v305
    %v308 = vshrl.u32 %v261, 16
    %v310 = vshll.u32 %v261, 16
    %v312 = vrot.slane %v310, 1
    %v313 = vor.u32 %v308, %v312
    %v315 = vshrl.u32 %v262, 16
    %v317 = vshll.u32 %v262, 16
    %v319 = vrot.slane %v317, 1
    %v320 = vor.u32 %v315, %v319
    %v322 = vshrl.u32 %v263, 16
    %v324 = vshll.u32 %v263, 16
    %v326 = vrot.slane %v324, 1
    %v327 = vor.u32 %v322, %v326
    %v329 = vshrl.u32 %v264, 16
    %v331 = vshll.u32 %v264, 16
    %v333 = vrot.slane %v331, 1
    %v334 = vor.u32 %v329, %v333
    %v336 = vshrl.u32 %v265, 16
    %v338 = vshll.u32 %v265, 16
    %v340 = vrot.slane %v338, 1
    %v341 = vor.u32 %v336, %v340
    %v343 = vshrl.u32 %v266, 16
    %v345 = vshll.u32 %v266, 16
    %v347 = vrot.slane %v345, 1
    %v348 = vor.u32 %v343, %v347
    %v350 = vshrl.u32 %v267, 16
    %v352 = vshll.u32 %v267, 16
    %v354 = vrot.slane %v352, 1
    %v355 = vor.u32 %v350, %v354
    %v357 = vshrl.u32 %v268, 16
    %v359 = vshll.u32 %v268, 16
    %v361 = vrot.slane %v359, 1
    %v362 = vor.u32 %v357, %v361
    %v364 = vshrl.u32 %v269, 16
    %v366 = vshll.u32 %v269, 16
    %v368 = vrot.slane %v366, 1
    %v369 = vor.u32 %v364, %v368
    %v371 = vshrl.u32 %v270, 16
    %v373 = vshll.u32 %v270, 16
    %v375 = vrot.slane %v373, 1
    %v376 = vor.u32 %v371, %v375
    %v378 = vshrl.u32 %v271, 16
    %v380 = vshll.u32 %v271, 16
    %v382 = vrot.slane %v380, 1
    %v383 = vor.u32 %v378, %v382
    %v416 = vunpack.c.l.b16 %v94
    %v417 = vunpack.c.l.b16 %v126
    %v418 = vunpack.c.l.b16 %v95
    %v419 = vunpack.c.l.b16 %v127
    %v420 = vunpack.c.l.b16 %v96
    %v421 = vunpack.c.l.b16 %v128
    %v422 = vunpack.c.l.b16 %v97
    %v423 = vunpack.c.l.b16 %v129
    %v424 = vunpack.c.l.b16 %v98
    %v425 = vunpack.c.l.b16 %v130
    %v426 = vunpack.c.l.b16 %v99
    %v427 = vunpack.c.l.b16 %v131
    %v428 = vunpack.c.l.b16 %v100
    %v429 = vunpack.c.l.b16 %v132
    %v430 = vunpack.c.l.b16 %v101
    %v431 = vunpack.c.l.b16 %v133
    %v432 = vunpack.c.l.b16 %v102
    %v433 = vunpack.c.l.b16 %v134
    %v434 = vunpack.c.l.b16 %v103
    %v435 = vunpack.c.l.b16 %v135
    %v436 = vunpack.c.l.b16 %v104
    %v437 = vunpack.c.l.b16 %v136
    %v438 = vunpack.c.l.b16 %v105
    %v439 = vunpack.c.l.b16 %v137
    %v440 = vunpack.c.l.b16 %v106
    %v441 = vunpack.c.l.b16 %v138
    %v442 = vunpack.c.l.b16 %v107
    %v443 = vunpack.c.l.b16 %v139
    %v444 = vunpack.c.l.b16 %v108
    %v445 = vunpack.c.l.b16 %v140
    %v446 = vunpack.c.l.b16 %v109
    %v447 = vunpack.c.l.b16 %v141
    %v448 = vpack.c.b16 %v417, %v416
    %v449 = vpack.c.b16 %v419, %v418
    %v450 = vpack.c.b16 %v421, %v420
    %v451 = vpack.c.b16 %v423, %v422
    %v452 = vpack.c.b16 %v425, %v424
    %v453 = vpack.c.b16 %v427, %v426
    %v454 = vpack.c.b16 %v429, %v428
    %v455 = vpack.c.b16 %v431, %v430
    %v456 = vpack.c.b16 %v433, %v432
    %v457 = vpack.c.b16 %v435, %v434
    %v458 = vpack.c.b16 %v437, %v436
    %v459 = vpack.c.b16 %v439, %v438
    %v460 = vpack.c.b16 %v441, %v440
    %v461 = vpack.c.b16 %v443, %v442
    %v462 = vpack.c.b16 %v445, %v444
    %v463 = vpack.c.b16 %v447, %v446
    %v465 = vshrl.u32 %v448, 16
    %v467 = vshll.u32 %v448, 16
    %v469 = vrot.slane %v467, 1
    %v470 = vor.u32 %v465, %v469
    %v472 = vshrl.u32 %v449, 16
    %v474 = vshll.u32 %v449, 16
    %v476 = vrot.slane %v474, 1
    %v477 = vor.u32 %v472, %v476
    %v479 = vshrl.u32 %v450, 16
    %v481 = vshll.u32 %v450, 16
    %v483 = vrot.slane %v481, 1
    %v484 = vor.u32 %v479, %v483
    %v486 = vshrl.u32 %v451, 16
    %v488 = vshll.u32 %v451, 16
    %v490 = vrot.slane %v488, 1
    %v491 = vor.u32 %v486, %v490
    %v493 = vshrl.u32 %v452, 16
    %v495 = vshll.u32 %v452, 16
    %v497 = vrot.slane %v495, 1
    %v498 = vor.u32 %v493, %v497
    %v500 = vshrl.u32 %v453, 16
    %v502 = vshll.u32 %v453, 16
    %v504 = vrot.slane %v502, 1
    %v505 = vor.u32 %v500, %v504
    %v507 = vshrl.u32 %v454, 16
    %v509 = vshll.u32 %v454, 16
    %v511 = vrot.slane %v509, 1
    %v512 = vor.u32 %v507, %v511
    %v514 = vshrl.u32 %v455, 16
    %v516 = vshll.u32 %v455, 16
    %v518 = vrot.slane %v516, 1
    %v519 = vor.u32 %v514, %v518
    %v521 = vshrl.u32 %v456, 16
    %v523 = vshll.u32 %v456, 16
    %v525 = vrot.slane %v523, 1
    %v526 = vor.u32 %v521, %v525
    %v528 = vshrl.u32 %v457, 16
    %v530 = vshll.u32 %v457, 16
    %v532 = vrot.slane %v530, 1
    %v533 = vor.u32 %v528, %v532
    %v535 = vshrl.u32 %v458, 16
    %v537 = vshll.u32 %v458, 16
    %v539 = vrot.slane %v537, 1
    %v540 = vor.u32 %v535, %v539
    %v542 = vshrl.u32 %v459, 16
    %v544 = vshll.u32 %v459, 16
    %v546 = vrot.slane %v544, 1
    %v547 = vor.u32 %v542, %v546
    %v549 = vshrl.u32 %v460, 16
    %v551 = vshll.u32 %v460, 16
    %v553 = vrot.slane %v551, 1
    %v554 = vor.u32 %v549, %v553
    %v556 = vshrl.u32 %v461, 16
    %v558 = vshll.u32 %v461, 16
    %v560 = vrot.slane %v558, 1
    %v561 = vor.u32 %v556, %v560
    %v563 = vshrl.u32 %v462, 16
    %v565 = vshll.u32 %v462, 16
    %v567 = vrot.slane %v565, 1
    %v568 = vor.u32 %v563, %v567
    %v570 = vshrl.u32 %v463, 16
    %v572 = vshll.u32 %v463, 16
    %v574 = vrot.slane %v572, 1
    %v575 = vor.u32 %v570, %v574
    %v608 = vunpack.c.l.b16 %v143
    %v609 = vunpack.c.l.b16 %v176
    %v610 = vunpack.c.l.b16 %v144
    %v611 = vunpack.c.l.b16 %v177
    %v612 = vunpack.c.l.b16 %v145
    %v613 = vunpack.c.l.b16 %v178
    %v614 = vunpack.c.l.b16 %v146
    %v615 = vunpack.c.l.b16 %v179
    %v616 = vunpack.c.l.b16 %v147
    %v617 = vunpack.c.l.b16 %v180
    %v618 = vunpack.c.l.b16 %v148
    %v619 = vunpack.c.l.b16 %v181
    %v620 = vunpack.c.l.b16 %v149
    %v621 = vunpack.c.l.b16 %v182
    %v622 = vunpack.c.l.b16 %v150
    %v623 = vunpack.c.l.b16 %v183
    %v624 = vunpack.c.l.b16 %v151
    %v625 = vunpack.c.l.b16 %v184
    %v626 = vunpack.c.l.b16 %v152
    %v627 = vunpack.c.l.b16 %v185
    %v628 = vunpack.c.l.b16 %v153
    %v629 = vunpack.c.l.b16 %v186
    %v630 = vunpack.c.l.b16 %v154
    %v631 = vunpack.c.l.b16 %v187
    %v632 = vunpack.c.l.b16 %v155
    %v633 = vunpack.c.l.b16 %v188
    %v634 = vunpack.c.l.b16 %v156
    %v635 = vunpack.c.l.b16 %v189
    %v636 = vunpack.c.l.b16 %v157
    %v637 = vunpack.c.l.b16 %v190
    %v638 = vunpack.c.l.b16 %v158
    %v639 = vunpack.c.l.b16 %v191
    %v640 = vpack.c.b16 %v609, %v608
    %v641 = vpack.c.b16 %v611, %v610
    %v642 = vpack.c.b16 %v613, %v612
    %v643 = vpack.c.b16 %v615, %v614
    %v644 = vpack.c.b16 %v617, %v616
    %v645 = vpack.c.b16 %v619, %v618
    %v646 = vpack.c.b16 %v621, %v620
    %v647 = vpack.c.b16 %v623, %v622
    %v648 = vpack.c.b16 %v625, %v624
    %v649 = vpack.c.b16 %v627, %v626
    %v650 = vpack.c.b16 %v629, %v628
    %v651 = vpack.c.b16 %v631, %v630
    %v652 = vpack.c.b16 %v633, %v632
    %v653 = vpack.c.b16 %v635, %v634
    %v654 = vpack.c.b16 %v637, %v636
    %v655 = vpack.c.b16 %v639, %v638
    %v657 = vshrl.u32 %v640, 16
    %v659 = vshll.u32 %v640, 16
    %v661 = vrot.slane %v659, 1
    %v662 = vor.u32 %v657, %v661
    %v664 = vshrl.u32 %v641, 16
    %v666 = vshll.u32 %v641, 16
    %v668 = vrot.slane %v666, 1
    %v669 = vor.u32 %v664, %v668
    %v671 = vshrl.u32 %v642, 16
    %v673 = vshll.u32 %v642, 16
    %v675 = vrot.slane %v673, 1
    %v676 = vor.u32 %v671, %v675
    %v678 = vshrl.u32 %v643, 16
    %v680 = vshll.u32 %v643, 16
    %v682 = vrot.slane %v680, 1
    %v683 = vor.u32 %v678, %v682
    %v685 = vshrl.u32 %v644, 16
    %v687 = vshll.u32 %v644, 16
    %v689 = vrot.slane %v687, 1
    %v690 = vor.u32 %v685, %v689
    %v692 = vshrl.u32 %v645, 16
    %v694 = vshll.u32 %v645, 16
    %v696 = vrot.slane %v694, 1
    %v697 = vor.u32 %v692, %v696
    %v699 = vshrl.u32 %v646, 16
    %v701 = vshll.u32 %v646, 16
    %v703 = vrot.slane %v701, 1
    %v704 = vor.u32 %v699, %v703
    %v706 = vshrl.u32 %v647, 16
    %v708 = vshll.u32 %v647, 16
    %v710 = vrot.slane %v708, 1
    %v711 = vor.u32 %v706, %v710
    %v713 = vshrl.u32 %v648, 16
    %v715 = vshll.u32 %v648, 16
    %v717 = vrot.slane %v715, 1
    %v718 = vor.u32 %v713, %v717
    %v720 = vshrl.u32 %v649, 16
    %v722 = vshll.u32 %v649, 16
    %v724 = vrot.slane %v722, 1
    %v725 = vor.u32 %v720, %v724
    %v727 = vshrl.u32 %v650, 16
    %v729 = vshll.u32 %v650, 16
    %v731 = vrot.slane %v729, 1
    %v732 = vor.u32 %v727, %v731
    %v734 = vshrl.u32 %v651, 16
    %v736 = vshll.u32 %v651, 16
    %v738 = vrot.slane %v736, 1
    %v739 = vor.u32 %v734, %v738
    %v741 = vshrl.u32 %v652, 16
    %v743 = vshll.u32 %v652, 16
    %v745 = vrot.slane %v743, 1
    %v746 = vor.u32 %v741, %v745
    %v748 = vshrl.u32 %v653, 16
    %v750 = vshll.u32 %v653, 16
    %v752 = vrot.slane %v750, 1
    %v753 = vor.u32 %v748, %v752
    %v755 = vshrl.u32 %v654, 16
    %v757 = vshll.u32 %v654, 16
    %v759 = vrot.slane %v757, 1
    %v760 = vor.u32 %v755, %v759
    %v762 = vshrl.u32 %v655, 16
    %v764 = vshll.u32 %v655, 16
    %v766 = vrot.slane %v764, 1
    %v767 = vor.u32 %v762, %v766
    %v816 = vunpack.c.l.b16 %v62
    %v817 = vunpack.c.l.b16 %v278
    %v818 = vunpack.c.l.b16 %v110
    %v819 = vunpack.c.l.b16 %v470
    %v820 = vunpack.c.l.b16 %v160
    %v821 = vunpack.c.l.b16 %v662
    %v822 = vunpack.c.l.b16 %v63
    %v823 = vunpack.c.l.b16 %v285
    %v824 = vunpack.c.l.b16 %v111
    %v825 = vunpack.c.l.b16 %v477
    %v826 = vunpack.c.l.b16 %v161
    %v827 = vunpack.c.l.b16 %v669
    %v828 = vunpack.c.l.b16 %v64
    %v829 = vunpack.c.l.b16 %v292
    %v830 = vunpack.c.l.b16 %v112
    %v831 = vunpack.c.l.b16 %v484
    %v832 = vunpack.c.l.b16 %v162
    %v833 = vunpack.c.l.b16 %v676
    %v834 = vunpack.c.l.b16 %v65
    %v835 = vunpack.c.l.b16 %v299
    %v836 = vunpack.c.l.b16 %v113
    %v837 = vunpack.c.l.b16 %v491
    %v838 = vunpack.c.l.b16 %v163
    %v839 = vunpack.c.l.b16 %v683
    %v840 = vunpack.c.l.b16 %v66
    %v841 = vunpack.c.l.b16 %v306
    %v842 = vunpack.c.l.b16 %v114
    %v843 = vunpack.c.l.b16 %v498
    %v844 = vunpack.c.l.b16 %v164
    %v845 = vunpack.c.l.b16 %v690
    %v846 = vunpack.c.l.b16 %v67
    %v847 = vunpack.c.l.b16 %v313
    %v848 = vunpack.c.l.b16 %v115
    %v849 = vunpack.c.l.b16 %v505
    %v850 = vunpack.c.l.b16 %v165
    %v851 = vunpack.c.l.b16 %v697
    %v852 = vunpack.c.l.b16 %v68
    %v853 = vunpack.c.l.b16 %v320
    %v854 = vunpack.c.l.b16 %v116
    %v855 = vunpack.c.l.b16 %v512
    %v856 = vunpack.c.l.b16 %v166
    %v857 = vunpack.c.l.b16 %v704
    %v858 = vunpack.c.l.b16 %v69
    %v859 = vunpack.c.l.b16 %v327
    %v860 = vunpack.c.l.b16 %v117
    %v861 = vunpack.c.l.b16 %v519
    %v862 = vunpack.c.l.b16 %v167
    %v863 = vunpack.c.l.b16 %v711
    %v864 = vunpack.c.l.b16 %v70
    %v865 = vunpack.c.l.b16 %v334
    %v866 = vunpack.c.l.b16 %v118
    %v867 = vunpack.c.l.b16 %v526
    %v868 = vunpack.c.l.b16 %v168
    %v869 = vunpack.c.l.b16 %v718
    %v870 = vunpack.c.l.b16 %v71
    %v871 = vunpack.c.l.b16 %v341
    %v872 = vunpack.c.l.b16 %v119
    %v873 = vunpack.c.l.b16 %v533
    %v874 = vunpack.c.l.b16 %v169
    %v875 = vunpack.c.l.b16 %v725
    %v876 = vunpack.c.l.b16 %v72
    %v877 = vunpack.c.l.b16 %v348
    %v878 = vunpack.c.l.b16 %v120
    %v879 = vunpack.c.l.b16 %v540
    %v880 = vunpack.c.l.b16 %v170
    %v881 = vunpack.c.l.b16 %v732
    %v882 = vunpack.c.l.b16 %v73
    %v883 = vunpack.c.l.b16 %v355
    %v884 = vunpack.c.l.b16 %v121
    %v885 = vunpack.c.l.b16 %v547
    %v886 = vunpack.c.l.b16 %v171
    %v887 = vunpack.c.l.b16 %v739
    %v888 = vunpack.c.l.b16 %v74
    %v889 = vunpack.c.l.b16 %v362
    %v890 = vunpack.c.l.b16 %v122
    %v891 = vunpack.c.l.b16 %v554
    %v892 = vunpack.c.l.b16 %v172
    %v893 = vunpack.c.l.b16 %v746
    %v894 = vunpack.c.l.b16 %v75
    %v895 = vunpack.c.l.b16 %v369
    %v896 = vunpack.c.l.b16 %v123
    %v897 = vunpack.c.l.b16 %v561
    %v898 = vunpack.c.l.b16 %v173
    %v899 = vunpack.c.l.b16 %v753
    %v900 = vunpack.c.l.b16 %v76
    %v901 = vunpack.c.l.b16 %v376
    %v902 = vunpack.c.l.b16 %v124
    %v903 = vunpack.c.l.b16 %v568
    %v904 = vunpack.c.l.b16 %v174
    %v905 = vunpack.c.l.b16 %v760
    %v906 = vunpack.c.l.b16 %v77
    %v907 = vunpack.c.l.b16 %v383
    %v908 = vunpack.c.l.b16 %v125
    %v909 = vunpack.c.l.b16 %v575
    %v910 = vunpack.c.l.b16 %v175
    %v911 = vunpack.c.l.b16 %v767
    %v912 = vld [vmem:[%s4] sm:$0xf]
    %v913 = vld [vmem:[%s4 + $0x4] sm:$0xf]
    %v914 = vld [vmem:[%s4 + $0x8] sm:$0xf]
    %v915 = vld [vmem:[%s4 + $0xc] sm:$0xf]
    %v916 = vld [vmem:[%s4 + $0x10] sm:$0xf]
    %v917 = vld [vmem:[%s4 + $0x14] sm:$0xf]
    %v918 = vld [vmem:[%s4 + $0x18] sm:$0xf]
    %v919 = vld [vmem:[%s4 + $0x1c] sm:$0xf]
    %v920 = vld [vmem:[%s4 + $0x20] sm:$0xf]
    %v921 = vld [vmem:[%s4 + $0x24] sm:$0xf]
    %v922 = vld [vmem:[%s4 + $0x28] sm:$0xf]
    %v923 = vld [vmem:[%s4 + $0x2c] sm:$0xf]
    %v924 = vld [vmem:[%s4 + $0x30] sm:$0xf]
    %v925 = vld [vmem:[%s4 + $0x34] sm:$0xf]
    %v926 = vld [vmem:[%s4 + $0x38] sm:$0xf]
    %v927 = vld [vmem:[%s4 + $0x3c] sm:$0xf]
    %v928 = vld [vmem:[%s4 + $0x40] sm:$0xf]
    %v929 = vld [vmem:[%s4 + $0x44] sm:$0xf]
    %v930 = vld [vmem:[%s4 + $0x48] sm:$0xf]
    %v931 = vld [vmem:[%s4 + $0x4c] sm:$0xf]
    %v932 = vld [vmem:[%s4 + $0x50] sm:$0xf]
    %v933 = vld [vmem:[%s4 + $0x54] sm:$0xf]
    %v934 = vld [vmem:[%s4 + $0x58] sm:$0xf]
    %v935 = vld [vmem:[%s4 + $0x5c] sm:$0xf]
    %v936 = vld [vmem:[%s4 + $0x60] sm:$0xf]
    %v937 = vld [vmem:[%s4 + $0x64] sm:$0xf]
    %v938 = vld [vmem:[%s4 + $0x68] sm:$0xf]
    %v939 = vld [vmem:[%s4 + $0x6c] sm:$0xf]
    %v940 = vld [vmem:[%s4 + $0x70] sm:$0xf]
    %v941 = vld [vmem:[%s4 + $0x74] sm:$0xf]
    %v942 = vld [vmem:[%s4 + $0x78] sm:$0xf]
    %v943 = vld [vmem:[%s4 + $0x7c] sm:$0xf]
    %v944 = vld [vmem:[%s4 + $0x80] sm:$0xf]
    %v945 = vld [vmem:[%s4 + $0x84] sm:$0xf]
    %v946 = vld [vmem:[%s4 + $0x88] sm:$0xf]
    %v947 = vld [vmem:[%s4 + $0x8c] sm:$0xf]
    %v948 = vld [vmem:[%s4 + $0x90] sm:$0xf]
    %v949 = vld [vmem:[%s4 + $0x94] sm:$0xf]
    %v950 = vld [vmem:[%s4 + $0x98] sm:$0xf]
    %v951 = vld [vmem:[%s4 + $0x9c] sm:$0xf]
    %v952 = vld [vmem:[%s4 + $0xa0] sm:$0xf]
    %v953 = vld [vmem:[%s4 + $0xa4] sm:$0xf]
    %v954 = vld [vmem:[%s4 + $0xa8] sm:$0xf]
    %v955 = vld [vmem:[%s4 + $0xac] sm:$0xf]
    %v956 = vld [vmem:[%s4 + $0xb0] sm:$0xf]
    %v957 = vld [vmem:[%s4 + $0xb4] sm:$0xf]
    %v958 = vld [vmem:[%s4 + $0xb8] sm:$0xf]
    %v959 = vld [vmem:[%s4 + $0xbc] sm:$0xf]
    %v960 = vld [vmem:[%s4 + $0xc0] sm:$0xf]
    %v961 = vld [vmem:[%s4 + $0xc4] sm:$0xf]
    %v962 = vld [vmem:[%s4 + $0xc8] sm:$0xf]
    %v963 = vld [vmem:[%s4 + $0xcc] sm:$0xf]
    %v964 = vld [vmem:[%s4 + $0xd0] sm:$0xf]
    %v965 = vld [vmem:[%s4 + $0xd4] sm:$0xf]
    %v966 = vld [vmem:[%s4 + $0xd8] sm:$0xf]
    %v967 = vld [vmem:[%s4 + $0xdc] sm:$0xf]
    %v968 = vld [vmem:[%s4 + $0xe0] sm:$0xf]
    %v969 = vld [vmem:[%s4 + $0xe4] sm:$0xf]
    %v970 = vld [vmem:[%s4 + $0xe8] sm:$0xf]
    %v971 = vld [vmem:[%s4 + $0xec] sm:$0xf]
    %v972 = vld [vmem:[%s4 + $0xf0] sm:$0xf]
    %v973 = vld [vmem:[%s4 + $0xf4] sm:$0xf]
    %v974 = vld [vmem:[%s4 + $0xf8] sm:$0xf]
    %v975 = vld [vmem:[%s4 + $0xfc] sm:$0xf]
    %v976 = vld [vmem:[%s4 + $0x100] sm:$0xf]
    %v977 = vld [vmem:[%s4 + $0x104] sm:$0xf]
    %v978 = vld [vmem:[%s4 + $0x108] sm:$0xf]
    %v979 = vld [vmem:[%s4 + $0x10c] sm:$0xf]
    %v980 = vld [vmem:[%s4 + $0x110] sm:$0xf]
    %v981 = vld [vmem:[%s4 + $0x114] sm:$0xf]
    %v982 = vld [vmem:[%s4 + $0x118] sm:$0xf]
    %v983 = vld [vmem:[%s4 + $0x11c] sm:$0xf]
    %v984 = vld [vmem:[%s4 + $0x120] sm:$0xf]
    %v985 = vld [vmem:[%s4 + $0x124] sm:$0xf]
    %v986 = vld [vmem:[%s4 + $0x128] sm:$0xf]
    %v987 = vld [vmem:[%s4 + $0x12c] sm:$0xf]
    %v988 = vld [vmem:[%s4 + $0x130] sm:$0xf]
    %v989 = vld [vmem:[%s4 + $0x134] sm:$0xf]
    %v990 = vld [vmem:[%s4 + $0x138] sm:$0xf]
    %v991 = vld [vmem:[%s4 + $0x13c] sm:$0xf]
    %v992 = vld [vmem:[%s4 + $0x140] sm:$0xf]
    %v993 = vld [vmem:[%s4 + $0x144] sm:$0xf]
    %v994 = vld [vmem:[%s4 + $0x148] sm:$0xf]
    %v995 = vld [vmem:[%s4 + $0x14c] sm:$0xf]
    %v996 = vld [vmem:[%s4 + $0x150] sm:$0xf]
    %v997 = vld [vmem:[%s4 + $0x154] sm:$0xf]
    %v998 = vld [vmem:[%s4 + $0x158] sm:$0xf]
    %v999 = vld [vmem:[%s4 + $0x15c] sm:$0xf]
    %v1000 = vld [vmem:[%s4 + $0x160] sm:$0xf]
    %v1001 = vld [vmem:[%s4 + $0x164] sm:$0xf]
    %v1002 = vld [vmem:[%s4 + $0x168] sm:$0xf]
    %v1003 = vld [vmem:[%s4 + $0x16c] sm:$0xf]
    %v1004 = vld [vmem:[%s4 + $0x170] sm:$0xf]
    %v1005 = vld [vmem:[%s4 + $0x174] sm:$0xf]
    %v1006 = vld [vmem:[%s4 + $0x178] sm:$0xf]
    %v1007 = vld [vmem:[%s4 + $0x17c] sm:$0xf]
    %v1008 = vld [vmem:[%s4 + $0x180] sm:$0xf]
    %v1009 = vld [vmem:[%s4 + $0x184] sm:$0xf]
    %v1010 = vld [vmem:[%s4 + $0x188] sm:$0xf]
    %v1011 = vld [vmem:[%s4 + $0x18c] sm:$0xf]
    %v1012 = vld [vmem:[%s4 + $0x190] sm:$0xf]
    %v1013 = vld [vmem:[%s4 + $0x194] sm:$0xf]
    %v1014 = vld [vmem:[%s4 + $0x198] sm:$0xf]
    %v1015 = vld [vmem:[%s4 + $0x19c] sm:$0xf]
    %v1016 = vld [vmem:[%s4 + $0x1a0] sm:$0xf]
    %v1017 = vld [vmem:[%s4 + $0x1a4] sm:$0xf]
    %v1018 = vld [vmem:[%s4 + $0x1a8] sm:$0xf]
    %v1019 = vld [vmem:[%s4 + $0x1ac] sm:$0xf]
    %v1020 = vld [vmem:[%s4 + $0x1b0] sm:$0xf]
    %v1021 = vld [vmem:[%s4 + $0x1b4] sm:$0xf]
    %v1022 = vld [vmem:[%s4 + $0x1b8] sm:$0xf]
    %v1023 = vld [vmem:[%s4 + $0x1bc] sm:$0xf]
    %v1024 = vld [vmem:[%s4 + $0x1c0] sm:$0xf]
    %v1025 = vld [vmem:[%s4 + $0x1c4] sm:$0xf]
    %v1026 = vld [vmem:[%s4 + $0x1c8] sm:$0xf]
    %v1027 = vld [vmem:[%s4 + $0x1cc] sm:$0xf]
    %v1028 = vld [vmem:[%s4 + $0x1d0] sm:$0xf]
    %v1029 = vld [vmem:[%s4 + $0x1d4] sm:$0xf]
    %v1030 = vld [vmem:[%s4 + $0x1d8] sm:$0xf]
    %v1031 = vld [vmem:[%s4 + $0x1dc] sm:$0xf]
    %v1032 = vld [vmem:[%s4 + $0x1e0] sm:$0xf]
    %v1033 = vld [vmem:[%s4 + $0x1e4] sm:$0xf]
    %v1034 = vld [vmem:[%s4 + $0x1e8] sm:$0xf]
    %v1035 = vld [vmem:[%s4 + $0x1ec] sm:$0xf]
    %v1036 = vld [vmem:[%s4 + $0x1f0] sm:$0xf]
    %v1037 = vld [vmem:[%s4 + $0x1f4] sm:$0xf]
    %v1038 = vld [vmem:[%s4 + $0x1f8] sm:$0xf]
    %v1039 = vld [vmem:[%s4 + $0x1fc] sm:$0xf]
    %v1040 = vld [vmem:[%s4 + $0x200] sm:$0xf]
    %v1041 = vld [vmem:[%s4 + $0x204] sm:$0xf]
    %v1042 = vld [vmem:[%s4 + $0x208] sm:$0xf]
    %v1043 = vld [vmem:[%s4 + $0x20c] sm:$0xf]
    %v1044 = vld [vmem:[%s4 + $0x210] sm:$0xf]
    %v1045 = vld [vmem:[%s4 + $0x214] sm:$0xf]
    %v1046 = vld [vmem:[%s4 + $0x218] sm:$0xf]
    %v1047 = vld [vmem:[%s4 + $0x21c] sm:$0xf]
    %v1048 = vld [vmem:[%s4 + $0x220] sm:$0xf]
    %v1049 = vld [vmem:[%s4 + $0x224] sm:$0xf]
    %v1050 = vld [vmem:[%s4 + $0x228] sm:$0xf]
    %v1051 = vld [vmem:[%s4 + $0x22c] sm:$0xf]
    %v1052 = vld [vmem:[%s4 + $0x230] sm:$0xf]
    %v1053 = vld [vmem:[%s4 + $0x234] sm:$0xf]
    %v1054 = vld [vmem:[%s4 + $0x238] sm:$0xf]
    %v1055 = vld [vmem:[%s4 + $0x23c] sm:$0xf]
    %v1056 = vpack.c.b16 %v226, %v224
    %v1057 = vpack.c.b16 %v822, %v816
    %v1058 = vpack.c.b16 %v823, %v817
    %v1059 = vpack.c.b16 %v418, %v416
    %v1060 = vpack.c.b16 %v824, %v818
    %v1061 = vpack.c.b16 %v825, %v819
    %v1062 = vpack.c.b16 %v610, %v608
    %v1063 = vpack.c.b16 %v826, %v820
    %v1064 = vpack.c.b16 %v827, %v821
    %v1065 = vpack.c.b16 %v230, %v228
    %v1066 = vpack.c.b16 %v834, %v828
    %v1067 = vpack.c.b16 %v835, %v829
    %v1068 = vpack.c.b16 %v422, %v420
    %v1069 = vpack.c.b16 %v836, %v830
    %v1070 = vpack.c.b16 %v837, %v831
    %v1071 = vpack.c.b16 %v614, %v612
    %v1072 = vpack.c.b16 %v838, %v832
    %v1073 = vpack.c.b16 %v839, %v833
    %v1074 = vpack.c.b16 %v234, %v232
    %v1075 = vpack.c.b16 %v846, %v840
    %v1076 = vpack.c.b16 %v847, %v841
    %v1077 = vpack.c.b16 %v426, %v424
    %v1078 = vpack.c.b16 %v848, %v842
    %v1079 = vpack.c.b16 %v849, %v843
    %v1080 = vpack.c.b16 %v618, %v616
    %v1081 = vpack.c.b16 %v850, %v844
    %v1082 = vpack.c.b16 %v851, %v845
    %v1083 = vpack.c.b16 %v238, %v236
    %v1084 = vpack.c.b16 %v858, %v852
    %v1085 = vpack.c.b16 %v859, %v853
    %v1086 = vpack.c.b16 %v430, %v428
    %v1087 = vpack.c.b16 %v860, %v854
    %v1088 = vpack.c.b16 %v861, %v855
    %v1089 = vpack.c.b16 %v622, %v620
    %v1090 = vpack.c.b16 %v862, %v856
    %v1091 = vpack.c.b16 %v863, %v857
    %v1092 = vpack.c.b16 %v242, %v240
    %v1093 = vpack.c.b16 %v870, %v864
    %v1094 = vpack.c.b16 %v871, %v865
    %v1095 = vpack.c.b16 %v434, %v432
    %v1096 = vpack.c.b16 %v872, %v866
    %v1097 = vpack.c.b16 %v873, %v867
    %v1098 = vpack.c.b16 %v626, %v624
    %v1099 = vpack.c.b16 %v874, %v868
    %v1100 = vpack.c.b16 %v875, %v869
    %v1101 = vpack.c.b16 %v246, %v244
    %v1102 = vpack.c.b16 %v882, %v876
    %v1103 = vpack.c.b16 %v883, %v877
    %v1104 = vpack.c.b16 %v438, %v436
    %v1105 = vpack.c.b16 %v884, %v878
    %v1106 = vpack.c.b16 %v885, %v879
    %v1107 = vpack.c.b16 %v630, %v628
    %v1108 = vpack.c.b16 %v886, %v880
    %v1109 = vpack.c.b16 %v887, %v881
    %v1110 = vpack.c.b16 %v250, %v248
    %v1111 = vpack.c.b16 %v894, %v888
    %v1112 = vpack.c.b16 %v895, %v889
    %v1113 = vpack.c.b16 %v442, %v440
    %v1114 = vpack.c.b16 %v896, %v890
    %v1115 = vpack.c.b16 %v897, %v891
    %v1116 = vpack.c.b16 %v634, %v632
    %v1117 = vpack.c.b16 %v898, %v892
    %v1118 = vpack.c.b16 %v899, %v893
    %v1119 = vpack.c.b16 %v254, %v252
    %v1120 = vpack.c.b16 %v906, %v900
    %v1121 = vpack.c.b16 %v907, %v901
    %v1122 = vpack.c.b16 %v446, %v444
    %v1123 = vpack.c.b16 %v908, %v902
    %v1124 = vpack.c.b16 %v909, %v903
    %v1125 = vpack.c.b16 %v638, %v636
    %v1126 = vpack.c.b16 %v910, %v904
    %v1127 = vpack.c.b16 %v911, %v905
    %v1344 = vunpack.c.l.b16 %v912
    %v1345 = vunpack.c.l.b16 %v913
    %v1346 = vunpack.c.l.b16 %v914
    %v1347 = vunpack.c.l.b16 %v915
    %v1348 = vunpack.c.l.b16 %v916
    %v1349 = vunpack.c.l.b16 %v917
    %v1350 = vunpack.c.l.b16 %v918
    %v1351 = vunpack.c.l.b16 %v919
    %v1352 = vunpack.c.l.b16 %v920
    %v1353 = vunpack.c.l.b16 %v921
    %v1354 = vunpack.c.l.b16 %v922
    %v1355 = vunpack.c.l.b16 %v923
    %v1356 = vunpack.c.l.b16 %v924
    %v1357 = vunpack.c.l.b16 %v925
    %v1358 = vunpack.c.l.b16 %v926
    %v1359 = vunpack.c.l.b16 %v927
    %v1360 = vunpack.c.l.b16 %v928
    %v1361 = vunpack.c.l.b16 %v929
    %v1362 = vunpack.c.l.b16 %v930
    %v1363 = vunpack.c.l.b16 %v931
    %v1364 = vunpack.c.l.b16 %v932
    %v1365 = vunpack.c.l.b16 %v933
    %v1366 = vunpack.c.l.b16 %v934
    %v1367 = vunpack.c.l.b16 %v935
    %v1368 = vunpack.c.l.b16 %v936
    %v1369 = vunpack.c.l.b16 %v937
    %v1370 = vunpack.c.l.b16 %v938
    %v1371 = vunpack.c.l.b16 %v939
    %v1372 = vunpack.c.l.b16 %v940
    %v1373 = vunpack.c.l.b16 %v941
    %v1374 = vunpack.c.l.b16 %v942
    %v1375 = vunpack.c.l.b16 %v943
    %v1376 = vunpack.c.l.b16 %v944
    %v1377 = vunpack.c.l.b16 %v945
    %v1378 = vunpack.c.l.b16 %v946
    %v1379 = vunpack.c.l.b16 %v947
    %v1380 = vunpack.c.l.b16 %v948
    %v1381 = vunpack.c.l.b16 %v949
    %v1382 = vunpack.c.l.b16 %v950
    %v1383 = vunpack.c.l.b16 %v951
    %v1384 = vunpack.c.l.b16 %v952
    %v1385 = vunpack.c.l.b16 %v953
    %v1386 = vunpack.c.l.b16 %v954
    %v1387 = vunpack.c.l.b16 %v955
    %v1388 = vunpack.c.l.b16 %v956
    %v1389 = vunpack.c.l.b16 %v957
    %v1390 = vunpack.c.l.b16 %v958
    %v1391 = vunpack.c.l.b16 %v959
    %v1392 = vunpack.c.l.b16 %v960
    %v1393 = vunpack.c.l.b16 %v961
    %v1394 = vunpack.c.l.b16 %v962
    %v1395 = vunpack.c.l.b16 %v963
    %v1396 = vunpack.c.l.b16 %v964
    %v1397 = vunpack.c.l.b16 %v965
    %v1398 = vunpack.c.l.b16 %v966
    %v1399 = vunpack.c.l.b16 %v967
    %v1400 = vunpack.c.l.b16 %v968
    %v1401 = vunpack.c.l.b16 %v969
    %v1402 = vunpack.c.l.b16 %v970
    %v1403 = vunpack.c.l.b16 %v971
    %v1404 = vunpack.c.l.b16 %v972
    %v1405 = vunpack.c.l.b16 %v973
    %v1406 = vunpack.c.l.b16 %v974
    %v1407 = vunpack.c.l.b16 %v975
    %v1408 = vunpack.c.l.b16 %v976
    %v1409 = vunpack.c.l.b16 %v977
    %v1410 = vunpack.c.l.b16 %v978
    %v1411 = vunpack.c.l.b16 %v979
    %v1412 = vunpack.c.l.b16 %v980
    %v1413 = vunpack.c.l.b16 %v981
    %v1414 = vunpack.c.l.b16 %v982
    %v1415 = vunpack.c.l.b16 %v983
    %v1416 = vunpack.c.l.b16 %v984
    %v1417 = vunpack.c.l.b16 %v985
    %v1418 = vunpack.c.l.b16 %v986
    %v1419 = vunpack.c.l.b16 %v987
    %v1420 = vunpack.c.l.b16 %v988
    %v1421 = vunpack.c.l.b16 %v989
    %v1422 = vunpack.c.l.b16 %v990
    %v1423 = vunpack.c.l.b16 %v991
    %v1424 = vunpack.c.l.b16 %v992
    %v1425 = vunpack.c.l.b16 %v993
    %v1426 = vunpack.c.l.b16 %v994
    %v1427 = vunpack.c.l.b16 %v995
    %v1428 = vunpack.c.l.b16 %v996
    %v1429 = vunpack.c.l.b16 %v997
    %v1430 = vunpack.c.l.b16 %v998
    %v1431 = vunpack.c.l.b16 %v999
    %v1432 = vunpack.c.l.b16 %v1000
    %v1433 = vunpack.c.l.b16 %v1001
    %v1434 = vunpack.c.l.b16 %v1002
    %v1435 = vunpack.c.l.b16 %v1003
    %v1436 = vunpack.c.l.b16 %v1004
    %v1437 = vunpack.c.l.b16 %v1005
    %v1438 = vunpack.c.l.b16 %v1006
    %v1439 = vunpack.c.l.b16 %v1007
    %v1440 = vunpack.c.l.b16 %v1008
    %v1441 = vunpack.c.l.b16 %v1009
    %v1442 = vunpack.c.l.b16 %v1010
    %v1443 = vunpack.c.l.b16 %v1011
    %v1444 = vunpack.c.l.b16 %v1012
    %v1445 = vunpack.c.l.b16 %v1013
    %v1446 = vunpack.c.l.b16 %v1014
    %v1447 = vunpack.c.l.b16 %v1015
    %v1448 = vunpack.c.l.b16 %v1016
    %v1449 = vunpack.c.l.b16 %v1017
    %v1450 = vunpack.c.l.b16 %v1018
    %v1451 = vunpack.c.l.b16 %v1019
    %v1452 = vunpack.c.l.b16 %v1020
    %v1453 = vunpack.c.l.b16 %v1021
    %v1454 = vunpack.c.l.b16 %v1022
    %v1455 = vunpack.c.l.b16 %v1023
    %v1456 = vunpack.c.l.b16 %v1024
    %v1457 = vunpack.c.l.b16 %v1025
    %v1458 = vunpack.c.l.b16 %v1026
    %v1459 = vunpack.c.l.b16 %v1027
    %v1460 = vunpack.c.l.b16 %v1028
    %v1461 = vunpack.c.l.b16 %v1029
    %v1462 = vunpack.c.l.b16 %v1030
    %v1463 = vunpack.c.l.b16 %v1031
    %v1464 = vunpack.c.l.b16 %v1032
    %v1465 = vunpack.c.l.b16 %v1033
    %v1466 = vunpack.c.l.b16 %v1034
    %v1467 = vunpack.c.l.b16 %v1035
    %v1468 = vunpack.c.l.b16 %v1036
    %v1469 = vunpack.c.l.b16 %v1037
    %v1470 = vunpack.c.l.b16 %v1038
    %v1471 = vunpack.c.l.b16 %v1039
    %v1472 = vunpack.c.l.b16 %v1040
    %v1473 = vunpack.c.l.b16 %v1041
    %v1474 = vunpack.c.l.b16 %v1042
    %v1475 = vunpack.c.l.b16 %v1043
    %v1476 = vunpack.c.l.b16 %v1044
    %v1477 = vunpack.c.l.b16 %v1045
    %v1478 = vunpack.c.l.b16 %v1046
    %v1479 = vunpack.c.l.b16 %v1047
    %v1480 = vunpack.c.l.b16 %v1048
    %v1481 = vunpack.c.l.b16 %v1049
    %v1482 = vunpack.c.l.b16 %v1050
    %v1483 = vunpack.c.l.b16 %v1051
    %v1484 = vunpack.c.l.b16 %v1052
    %v1485 = vunpack.c.l.b16 %v1053
    %v1486 = vunpack.c.l.b16 %v1054
    %v1487 = vunpack.c.l.b16 %v1055
    %v1488 = vpack.c.b16 %v1345, %v1344
    %v1489 = vpack.c.b16 %v1347, %v1346
    %v1490 = vpack.c.b16 %v1349, %v1348
    %v1491 = vpack.c.b16 %v1351, %v1350
    %v1492 = vpack.c.b16 %v1353, %v1352
    %v1493 = vpack.c.b16 %v1355, %v1354
    %v1494 = vpack.c.b16 %v1357, %v1356
    %v1495 = vpack.c.b16 %v1359, %v1358
    %v1496 = vpack.c.b16 %v1361, %v1360
    %v1497 = vpack.c.b16 %v1363, %v1362
    %v1498 = vpack.c.b16 %v1365, %v1364
    %v1499 = vpack.c.b16 %v1367, %v1366
    %v1500 = vpack.c.b16 %v1369, %v1368
    %v1501 = vpack.c.b16 %v1371, %v1370
    %v1502 = vpack.c.b16 %v1373, %v1372
    %v1503 = vpack.c.b16 %v1375, %v1374
    %v1504 = vpack.c.b16 %v1377, %v1376
    %v1505 = vpack.c.b16 %v1379, %v1378
    %v1506 = vpack.c.b16 %v1381, %v1380
    %v1507 = vpack.c.b16 %v1383, %v1382
    %v1508 = vpack.c.b16 %v1385, %v1384
    %v1509 = vpack.c.b16 %v1387, %v1386
    %v1510 = vpack.c.b16 %v1389, %v1388
    %v1511 = vpack.c.b16 %v1391, %v1390
    %v1512 = vpack.c.b16 %v1393, %v1392
    %v1513 = vpack.c.b16 %v1395, %v1394
    %v1514 = vpack.c.b16 %v1397, %v1396
    %v1515 = vpack.c.b16 %v1399, %v1398
    %v1516 = vpack.c.b16 %v1401, %v1400
    %v1517 = vpack.c.b16 %v1403, %v1402
    %v1518 = vpack.c.b16 %v1405, %v1404
    %v1519 = vpack.c.b16 %v1407, %v1406
    %v1520 = vpack.c.b16 %v1409, %v1408
    %v1521 = vpack.c.b16 %v1411, %v1410
    %v1522 = vpack.c.b16 %v1413, %v1412
    %v1523 = vpack.c.b16 %v1415, %v1414
    %v1524 = vpack.c.b16 %v1417, %v1416
    %v1525 = vpack.c.b16 %v1419, %v1418
    %v1526 = vpack.c.b16 %v1421, %v1420
    %v1527 = vpack.c.b16 %v1423, %v1422
    %v1528 = vpack.c.b16 %v1425, %v1424
    %v1529 = vpack.c.b16 %v1427, %v1426
    %v1530 = vpack.c.b16 %v1429, %v1428
    %v1531 = vpack.c.b16 %v1431, %v1430
    %v1532 = vpack.c.b16 %v1433, %v1432
    %v1533 = vpack.c.b16 %v1435, %v1434
    %v1534 = vpack.c.b16 %v1437, %v1436
    %v1535 = vpack.c.b16 %v1439, %v1438
    %v1536 = vpack.c.b16 %v1441, %v1440
    %v1537 = vpack.c.b16 %v1443, %v1442
    %v1538 = vpack.c.b16 %v1445, %v1444
    %v1539 = vpack.c.b16 %v1447, %v1446
    %v1540 = vpack.c.b16 %v1449, %v1448
    %v1541 = vpack.c.b16 %v1451, %v1450
    %v1542 = vpack.c.b16 %v1453, %v1452
    %v1543 = vpack.c.b16 %v1455, %v1454
    %v1544 = vpack.c.b16 %v1457, %v1456
    %v1545 = vpack.c.b16 %v1459, %v1458
    %v1546 = vpack.c.b16 %v1461, %v1460
    %v1547 = vpack.c.b16 %v1463, %v1462
    %v1548 = vpack.c.b16 %v1465, %v1464
    %v1549 = vpack.c.b16 %v1467, %v1466
    %v1550 = vpack.c.b16 %v1469, %v1468
    %v1551 = vpack.c.b16 %v1471, %v1470
    %v1552 = vpack.c.b16 %v1473, %v1472
    %v1553 = vpack.c.b16 %v1475, %v1474
    %v1554 = vpack.c.b16 %v1477, %v1476
    %v1555 = vpack.c.b16 %v1479, %v1478
    %v1556 = vpack.c.b16 %v1481, %v1480
    %v1557 = vpack.c.b16 %v1483, %v1482
    %v1558 = vpack.c.b16 %v1485, %v1484
    %v1559 = vpack.c.b16 %v1487, %v1486
    %1632 = vmatpush.bf16.msra.mxu0 %v1495
    %1633 = vmatpush.bf16.msra.mxu0 %v1494
    %1634 = vmatpush.bf16.msra.mxu0 %v1493
    %1635 = vmatpush.bf16.msra.mxu0 %v1492
    %1636 = vmatpush.bf16.msra.mxu0 %v1491
    %1637 = vmatpush.bf16.msra.mxu0 %v1490
    %1638 = vmatpush.bf16.msra.mxu0 %v1489
    %1639 = vmatpush.bf16.msra.mxu0 %v1488
    %1640 = vmatmul.bf16.gmra.mxu0 %v1056
    %v1641 = vpop.f32.mrf.mxu0
    %v1642 = vadd.f32 0.0, %v1641
    %v1643 = vpop.f32.mrf.mxu0
    %v1644 = vadd.f32 0.0, %v1643
    %1645 = vmatmul.bf16.gmra.mxu0 %v1065
    %v1646 = vpop.f32.mrf.mxu0
    %v1647 = vadd.f32 0.0, %v1646
    %v1648 = vpop.f32.mrf.mxu0
    %v1649 = vadd.f32 0.0, %v1648
    %1650 = vmatmul.bf16.gmra.mxu0 %v1074
    %v1651 = vpop.f32.mrf.mxu0
    %v1652 = vadd.f32 0.0, %v1651
    %v1653 = vpop.f32.mrf.mxu0
    %v1654 = vadd.f32 0.0, %v1653
    %1655 = vmatmul.bf16.gmra.mxu0 %v1083
    %v1656 = vpop.f32.mrf.mxu0
    %v1657 = vadd.f32 0.0, %v1656
    %v1658 = vpop.f32.mrf.mxu0
    %v1659 = vadd.f32 0.0, %v1658
    %1660 = vmatmul.bf16.gmra.mxu0 %v1092
    %v1661 = vpop.f32.mrf.mxu0
    %v1662 = vadd.f32 0.0, %v1661
    %v1663 = vpop.f32.mrf.mxu0
    %v1664 = vadd.f32 0.0, %v1663
    %1665 = vmatmul.bf16.gmra.mxu0 %v1101
    %v1666 = vpop.f32.mrf.mxu0
    %v1667 = vadd.f32 0.0, %v1666
    %v1668 = vpop.f32.mrf.mxu0
    %v1669 = vadd.f32 0.0, %v1668
    %1670 = vmatmul.bf16.gmra.mxu0 %v1110
    %v1671 = vpop.f32.mrf.mxu0
    %v1672 = vadd.f32 0.0, %v1671
    %v1673 = vpop.f32.mrf.mxu0
    %v1674 = vadd.f32 0.0, %v1673
    %1675 = vmatmul.bf16.gmra.mxu0 %v1119
    %v1676 = vpop.f32.mrf.mxu0
    %v1677 = vadd.f32 0.0, %v1676
    %v1678 = vpop.f32.mrf.mxu0
    %v1679 = vadd.f32 0.0, %v1678
    %1680 = vdwg.mxu0
    %1681 = vmatpush.bf16.msra.mxu0 %v1503
    %1682 = vmatpush.bf16.msra.mxu0 %v1502
    %1683 = vmatpush.bf16.msra.mxu0 %v1501
    %1684 = vmatpush.bf16.msra.mxu0 %v1500
    %1685 = vmatpush.bf16.msra.mxu0 %v1499
    %1686 = vmatpush.bf16.msra.mxu0 %v1498
    %1687 = vmatpush.bf16.msra.mxu0 %v1497
    %1688 = vmatpush.bf16.msra.mxu0 %v1496
    %1689 = vmatmul.bf16.gmra.mxu0 %v1057
    %v1690 = vpop.f32.mrf.mxu0
    %v1691 = vadd.f32 %v1642, %v1690
    %v1692 = vpop.f32.mrf.mxu0
    %v1693 = vadd.f32 %v1644, %v1692
    %1694 = vmatmul.bf16.gmra.mxu0 %v1066
    %v1695 = vpop.f32.mrf.mxu0
    %v1696 = vadd.f32 %v1647, %v1695
    %v1697 = vpop.f32.mrf.mxu0
    %v1698 = vadd.f32 %v1649, %v1697
    %1699 = vmatmul.bf16.gmra.mxu0 %v1075
    %v1700 = vpop.f32.mrf.mxu0
    %v1701 = vadd.f32 %v1652, %v1700
    %v1702 = vpop.f32.mrf.mxu0
    %v1703 = vadd.f32 %v1654, %v1702
    %1704 = vmatmul.bf16.gmra.mxu0 %v1084
    %v1705 = vpop.f32.mrf.mxu0
    %v1706 = vadd.f32 %v1657, %v1705
    %v1707 = vpop.f32.mrf.mxu0
    %v1708 = vadd.f32 %v1659, %v1707
    %1709 = vmatmul.bf16.gmra.mxu0 %v1093
    %v1710 = vpop.f32.mrf.mxu0
    %v1711 = vadd.f32 %v1662, %v1710
    %v1712 = vpop.f32.mrf.mxu0
    %v1713 = vadd.f32 %v1664, %v1712
    %1714 = vmatmul.bf16.gmra.mxu0 %v1102
    %v1715 = vpop.f32.mrf.mxu0
    %v1716 = vadd.f32 %v1667, %v1715
    %v1717 = vpop.f32.mrf.mxu0
    %v1718 = vadd.f32 %v1669, %v1717
    %1719 = vmatmul.bf16.gmra.mxu0 %v1111
    %v1720 = vpop.f32.mrf.mxu0
    %v1721 = vadd.f32 %v1672, %v1720
    %v1722 = vpop.f32.mrf.mxu0
    %v1723 = vadd.f32 %v1674, %v1722
    %1724 = vmatmul.bf16.gmra.mxu0 %v1120
    %v1725 = vpop.f32.mrf.mxu0
    %v1726 = vadd.f32 %v1677, %v1725
    %v1727 = vpop.f32.mrf.mxu0
    %v1728 = vadd.f32 %v1679, %v1727
    %1729 = vdwg.mxu0
    %1730 = vmatpush.bf16.msra.mxu0 %v1511
    %1731 = vmatpush.bf16.msra.mxu0 %v1510
    %1732 = vmatpush.bf16.msra.mxu0 %v1509
    %1733 = vmatpush.bf16.msra.mxu0 %v1508
    %1734 = vmatpush.bf16.msra.mxu0 %v1507
    %1735 = vmatpush.bf16.msra.mxu0 %v1506
    %1736 = vmatpush.bf16.msra.mxu0 %v1505
    %1737 = vmatpush.bf16.msra.mxu0 %v1504
    %1738 = vmatmul.bf16.gmra.mxu0 %v1058
    %v1739 = vpop.f32.mrf.mxu0
    %v1740 = vadd.f32 %v1691, %v1739
    %v1741 = vpop.f32.mrf.mxu0
    %v1742 = vadd.f32 %v1693, %v1741
    %1743 = vmatmul.bf16.gmra.mxu0 %v1067
    %v1744 = vpop.f32.mrf.mxu0
    %v1745 = vadd.f32 %v1696, %v1744
    %v1746 = vpop.f32.mrf.mxu0
    %v1747 = vadd.f32 %v1698, %v1746
    %1748 = vmatmul.bf16.gmra.mxu0 %v1076
    %v1749 = vpop.f32.mrf.mxu0
    %v1750 = vadd.f32 %v1701, %v1749
    %v1751 = vpop.f32.mrf.mxu0
    %v1752 = vadd.f32 %v1703, %v1751
    %1753 = vmatmul.bf16.gmra.mxu0 %v1085
    %v1754 = vpop.f32.mrf.mxu0
    %v1755 = vadd.f32 %v1706, %v1754
    %v1756 = vpop.f32.mrf.mxu0
    %v1757 = vadd.f32 %v1708, %v1756
    %1758 = vmatmul.bf16.gmra.mxu0 %v1094
    %v1759 = vpop.f32.mrf.mxu0
    %v1760 = vadd.f32 %v1711, %v1759
    %v1761 = vpop.f32.mrf.mxu0
    %v1762 = vadd.f32 %v1713, %v1761
    %1763 = vmatmul.bf16.gmra.mxu0 %v1103
    %v1764 = vpop.f32.mrf.mxu0
    %v1765 = vadd.f32 %v1716, %v1764
    %v1766 = vpop.f32.mrf.mxu0
    %v1767 = vadd.f32 %v1718, %v1766
    %1768 = vmatmul.bf16.gmra.mxu0 %v1112
    %v1769 = vpop.f32.mrf.mxu0
    %v1770 = vadd.f32 %v1721, %v1769
    %v1771 = vpop.f32.mrf.mxu0
    %v1772 = vadd.f32 %v1723, %v1771
    %1773 = vmatmul.bf16.gmra.mxu0 %v1121
    %v1774 = vpop.f32.mrf.mxu0
    %v1775 = vadd.f32 %v1726, %v1774
    %v1776 = vpop.f32.mrf.mxu0
    %v1777 = vadd.f32 %v1728, %v1776
    %1778 = vdwg.mxu0
    %1779 = vmatpush.bf16.msra.mxu0 %v1519
    %1780 = vmatpush.bf16.msra.mxu0 %v1518
    %1781 = vmatpush.bf16.msra.mxu0 %v1517
    %1782 = vmatpush.bf16.msra.mxu0 %v1516
    %1783 = vmatpush.bf16.msra.mxu0 %v1515
    %1784 = vmatpush.bf16.msra.mxu0 %v1514
    %1785 = vmatpush.bf16.msra.mxu0 %v1513
    %1786 = vmatpush.bf16.msra.mxu0 %v1512
    %1787 = vmatmul.bf16.gmra.mxu0 %v1059
    %v1788 = vpop.f32.mrf.mxu0
    %v1789 = vadd.f32 %v1740, %v1788
    %v1790 = vpop.f32.mrf.mxu0
    %v1791 = vadd.f32 %v1742, %v1790
    %1792 = vmatmul.bf16.gmra.mxu0 %v1068
    %v1793 = vpop.f32.mrf.mxu0
    %v1794 = vadd.f32 %v1745, %v1793
    %v1795 = vpop.f32.mrf.mxu0
    %v1796 = vadd.f32 %v1747, %v1795
    %1797 = vmatmul.bf16.gmra.mxu0 %v1077
    %v1798 = vpop.f32.mrf.mxu0
    %v1799 = vadd.f32 %v1750, %v1798
    %v1800 = vpop.f32.mrf.mxu0
    %v1801 = vadd.f32 %v1752, %v1800
    %1802 = vmatmul.bf16.gmra.mxu0 %v1086
    %v1803 = vpop.f32.mrf.mxu0
    %v1804 = vadd.f32 %v1755, %v1803
    %v1805 = vpop.f32.mrf.mxu0
    %v1806 = vadd.f32 %v1757, %v1805
    %1807 = vmatmul.bf16.gmra.mxu0 %v1095
    %v1808 = vpop.f32.mrf.mxu0
    %v1809 = vadd.f32 %v1760, %v1808
    %v1810 = vpop.f32.mrf.mxu0
    %v1811 = vadd.f32 %v1762, %v1810
    %1812 = vmatmul.bf16.gmra.mxu0 %v1104
    %v1813 = vpop.f32.mrf.mxu0
    %v1814 = vadd.f32 %v1765, %v1813
    %v1815 = vpop.f32.mrf.mxu0
    %v1816 = vadd.f32 %v1767, %v1815
    %1817 = vmatmul.bf16.gmra.mxu0 %v1113
    %v1818 = vpop.f32.mrf.mxu0
    %v1819 = vadd.f32 %v1770, %v1818
    %v1820 = vpop.f32.mrf.mxu0
    %v1821 = vadd.f32 %v1772, %v1820
    %1822 = vmatmul.bf16.gmra.mxu0 %v1122
    %v1823 = vpop.f32.mrf.mxu0
    %v1824 = vadd.f32 %v1775, %v1823
    %v1825 = vpop.f32.mrf.mxu0
    %v1826 = vadd.f32 %v1777, %v1825
    %1827 = vdwg.mxu0
    %1828 = vmatpush.bf16.msra.mxu0 %v1527
    %1829 = vmatpush.bf16.msra.mxu0 %v1526
    %1830 = vmatpush.bf16.msra.mxu0 %v1525
    %1831 = vmatpush.bf16.msra.mxu0 %v1524
    %1832 = vmatpush.bf16.msra.mxu0 %v1523
    %1833 = vmatpush.bf16.msra.mxu0 %v1522
    %1834 = vmatpush.bf16.msra.mxu0 %v1521
    %1835 = vmatpush.bf16.msra.mxu0 %v1520
    %1836 = vmatmul.bf16.gmra.mxu0 %v1060
    %v1837 = vpop.f32.mrf.mxu0
    %v1838 = vadd.f32 %v1789, %v1837
    %v1839 = vpop.f32.mrf.mxu0
    %v1840 = vadd.f32 %v1791, %v1839
    %1841 = vmatmul.bf16.gmra.mxu0 %v1069
    %v1842 = vpop.f32.mrf.mxu0
    %v1843 = vadd.f32 %v1794, %v1842
    %v1844 = vpop.f32.mrf.mxu0
    %v1845 = vadd.f32 %v1796, %v1844
    %1846 = vmatmul.bf16.gmra.mxu0 %v1078
    %v1847 = vpop.f32.mrf.mxu0
    %v1848 = vadd.f32 %v1799, %v1847
    %v1849 = vpop.f32.mrf.mxu0
    %v1850 = vadd.f32 %v1801, %v1849
    %1851 = vmatmul.bf16.gmra.mxu0 %v1087
    %v1852 = vpop.f32.mrf.mxu0
    %v1853 = vadd.f32 %v1804, %v1852
    %v1854 = vpop.f32.mrf.mxu0
    %v1855 = vadd.f32 %v1806, %v1854
    %1856 = vmatmul.bf16.gmra.mxu0 %v1096
    %v1857 = vpop.f32.mrf.mxu0
    %v1858 = vadd.f32 %v1809, %v1857
    %v1859 = vpop.f32.mrf.mxu0
    %v1860 = vadd.f32 %v1811, %v1859
    %1861 = vmatmul.bf16.gmra.mxu0 %v1105
    %v1862 = vpop.f32.mrf.mxu0
    %v1863 = vadd.f32 %v1814, %v1862
    %v1864 = vpop.f32.mrf.mxu0
    %v1865 = vadd.f32 %v1816, %v1864
    %1866 = vmatmul.bf16.gmra.mxu0 %v1114
    %v1867 = vpop.f32.mrf.mxu0
    %v1868 = vadd.f32 %v1819, %v1867
    %v1869 = vpop.f32.mrf.mxu0
    %v1870 = vadd.f32 %v1821, %v1869
    %1871 = vmatmul.bf16.gmra.mxu0 %v1123
    %v1872 = vpop.f32.mrf.mxu0
    %v1873 = vadd.f32 %v1824, %v1872
    %v1874 = vpop.f32.mrf.mxu0
    %v1875 = vadd.f32 %v1826, %v1874
    %1876 = vdwg.mxu0
    %1877 = vmatpush.bf16.msra.mxu0 %v1535
    %1878 = vmatpush.bf16.msra.mxu0 %v1534
    %1879 = vmatpush.bf16.msra.mxu0 %v1533
    %1880 = vmatpush.bf16.msra.mxu0 %v1532
    %1881 = vmatpush.bf16.msra.mxu0 %v1531
    %1882 = vmatpush.bf16.msra.mxu0 %v1530
    %1883 = vmatpush.bf16.msra.mxu0 %v1529
    %1884 = vmatpush.bf16.msra.mxu0 %v1528
    %1885 = vmatmul.bf16.gmra.mxu0 %v1061
    %v1886 = vpop.f32.mrf.mxu0
    %v1887 = vadd.f32 %v1838, %v1886
    %v1888 = vpop.f32.mrf.mxu0
    %v1889 = vadd.f32 %v1840, %v1888
    %1890 = vmatmul.bf16.gmra.mxu0 %v1070
    %v1891 = vpop.f32.mrf.mxu0
    %v1892 = vadd.f32 %v1843, %v1891
    %v1893 = vpop.f32.mrf.mxu0
    %v1894 = vadd.f32 %v1845, %v1893
    %1895 = vmatmul.bf16.gmra.mxu0 %v1079
    %v1896 = vpop.f32.mrf.mxu0
    %v1897 = vadd.f32 %v1848, %v1896
    %v1898 = vpop.f32.mrf.mxu0
    %v1899 = vadd.f32 %v1850, %v1898
    %1900 = vmatmul.bf16.gmra.mxu0 %v1088
    %v1901 = vpop.f32.mrf.mxu0
    %v1902 = vadd.f32 %v1853, %v1901
    %v1903 = vpop.f32.mrf.mxu0
    %v1904 = vadd.f32 %v1855, %v1903
    %1905 = vmatmul.bf16.gmra.mxu0 %v1097
    %v1906 = vpop.f32.mrf.mxu0
    %v1907 = vadd.f32 %v1858, %v1906
    %v1908 = vpop.f32.mrf.mxu0
    %v1909 = vadd.f32 %v1860, %v1908
    %1910 = vmatmul.bf16.gmra.mxu0 %v1106
    %v1911 = vpop.f32.mrf.mxu0
    %v1912 = vadd.f32 %v1863, %v1911
    %v1913 = vpop.f32.mrf.mxu0
    %v1914 = vadd.f32 %v1865, %v1913
    %1915 = vmatmul.bf16.gmra.mxu0 %v1115
    %v1916 = vpop.f32.mrf.mxu0
    %v1917 = vadd.f32 %v1868, %v1916
    %v1918 = vpop.f32.mrf.mxu0
    %v1919 = vadd.f32 %v1870, %v1918
    %1920 = vmatmul.bf16.gmra.mxu0 %v1124
    %v1921 = vpop.f32.mrf.mxu0
    %v1922 = vadd.f32 %v1873, %v1921
    %v1923 = vpop.f32.mrf.mxu0
    %v1924 = vadd.f32 %v1875, %v1923
    %1925 = vdwg.mxu0
    %1926 = vmatpush.bf16.msra.mxu0 %v1543
    %1927 = vmatpush.bf16.msra.mxu0 %v1542
    %1928 = vmatpush.bf16.msra.mxu0 %v1541
    %1929 = vmatpush.bf16.msra.mxu0 %v1540
    %1930 = vmatpush.bf16.msra.mxu0 %v1539
    %1931 = vmatpush.bf16.msra.mxu0 %v1538
    %1932 = vmatpush.bf16.msra.mxu0 %v1537
    %1933 = vmatpush.bf16.msra.mxu0 %v1536
    %1934 = vmatmul.bf16.gmra.mxu0 %v1062
    %v1935 = vpop.f32.mrf.mxu0
    %v1936 = vadd.f32 %v1887, %v1935
    %v1937 = vpop.f32.mrf.mxu0
    %v1938 = vadd.f32 %v1889, %v1937
    %1939 = vmatmul.bf16.gmra.mxu0 %v1071
    %v1940 = vpop.f32.mrf.mxu0
    %v1941 = vadd.f32 %v1892, %v1940
    %v1942 = vpop.f32.mrf.mxu0
    %v1943 = vadd.f32 %v1894, %v1942
    %1944 = vmatmul.bf16.gmra.mxu0 %v1080
    %v1945 = vpop.f32.mrf.mxu0
    %v1946 = vadd.f32 %v1897, %v1945
    %v1947 = vpop.f32.mrf.mxu0
    %v1948 = vadd.f32 %v1899, %v1947
    %1949 = vmatmul.bf16.gmra.mxu0 %v1089
    %v1950 = vpop.f32.mrf.mxu0
    %v1951 = vadd.f32 %v1902, %v1950
    %v1952 = vpop.f32.mrf.mxu0
    %v1953 = vadd.f32 %v1904, %v1952
    %1954 = vmatmul.bf16.gmra.mxu0 %v1098
    %v1955 = vpop.f32.mrf.mxu0
    %v1956 = vadd.f32 %v1907, %v1955
    %v1957 = vpop.f32.mrf.mxu0
    %v1958 = vadd.f32 %v1909, %v1957
    %1959 = vmatmul.bf16.gmra.mxu0 %v1107
    %v1960 = vpop.f32.mrf.mxu0
    %v1961 = vadd.f32 %v1912, %v1960
    %v1962 = vpop.f32.mrf.mxu0
    %v1963 = vadd.f32 %v1914, %v1962
    %1964 = vmatmul.bf16.gmra.mxu0 %v1116
    %v1965 = vpop.f32.mrf.mxu0
    %v1966 = vadd.f32 %v1917, %v1965
    %v1967 = vpop.f32.mrf.mxu0
    %v1968 = vadd.f32 %v1919, %v1967
    %1969 = vmatmul.bf16.gmra.mxu0 %v1125
    %v1970 = vpop.f32.mrf.mxu0
    %v1971 = vadd.f32 %v1922, %v1970
    %v1972 = vpop.f32.mrf.mxu0
    %v1973 = vadd.f32 %v1924, %v1972
    %1974 = vdwg.mxu0
    %1975 = vmatpush.bf16.msra.mxu0 %v1551
    %1976 = vmatpush.bf16.msra.mxu0 %v1550
    %1977 = vmatpush.bf16.msra.mxu0 %v1549
    %1978 = vmatpush.bf16.msra.mxu0 %v1548
    %1979 = vmatpush.bf16.msra.mxu0 %v1547
    %1980 = vmatpush.bf16.msra.mxu0 %v1546
    %1981 = vmatpush.bf16.msra.mxu0 %v1545
    %1982 = vmatpush.bf16.msra.mxu0 %v1544
    %1983 = vmatmul.bf16.gmra.mxu0 %v1063
    %v1984 = vpop.f32.mrf.mxu0
    %v1985 = vadd.f32 %v1936, %v1984
    %v1986 = vpop.f32.mrf.mxu0
    %v1987 = vadd.f32 %v1938, %v1986
    %1988 = vmatmul.bf16.gmra.mxu0 %v1072
    %v1989 = vpop.f32.mrf.mxu0
    %v1990 = vadd.f32 %v1941, %v1989
    %v1991 = vpop.f32.mrf.mxu0
    %v1992 = vadd.f32 %v1943, %v1991
    %1993 = vmatmul.bf16.gmra.mxu0 %v1081
    %v1994 = vpop.f32.mrf.mxu0
    %v1995 = vadd.f32 %v1946, %v1994
    %v1996 = vpop.f32.mrf.mxu0
    %v1997 = vadd.f32 %v1948, %v1996
    %1998 = vmatmul.bf16.gmra.mxu0 %v1090
    %v1999 = vpop.f32.mrf.mxu0
    %v2000 = vadd.f32 %v1951, %v1999
    %v2001 = vpop.f32.mrf.mxu0
    %v2002 = vadd.f32 %v1953, %v2001
    %2003 = vmatmul.bf16.gmra.mxu0 %v1099
    %v2004 = vpop.f32.mrf.mxu0
    %v2005 = vadd.f32 %v1956, %v2004
    %v2006 = vpop.f32.mrf.mxu0
    %v2007 = vadd.f32 %v1958, %v2006
    %2008 = vmatmul.bf16.gmra.mxu0 %v1108
    %v2009 = vpop.f32.mrf.mxu0
    %v2010 = vadd.f32 %v1961, %v2009
    %v2011 = vpop.f32.mrf.mxu0
    %v2012 = vadd.f32 %v1963, %v2011
    %2013 = vmatmul.bf16.gmra.mxu0 %v1117
    %v2014 = vpop.f32.mrf.mxu0
    %v2015 = vadd.f32 %v1966, %v2014
    %v2016 = vpop.f32.mrf.mxu0
    %v2017 = vadd.f32 %v1968, %v2016
    %2018 = vmatmul.bf16.gmra.mxu0 %v1126
    %v2019 = vpop.f32.mrf.mxu0
    %v2020 = vadd.f32 %v1971, %v2019
    %v2021 = vpop.f32.mrf.mxu0
    %v2022 = vadd.f32 %v1973, %v2021
    %2023 = vdwg.mxu0
    %2024 = vmatpush.bf16.msra.mxu0 %v1559
    %2025 = vmatpush.bf16.msra.mxu0 %v1558
    %2026 = vmatpush.bf16.msra.mxu0 %v1557
    %2027 = vmatpush.bf16.msra.mxu0 %v1556
    %2028 = vmatpush.bf16.msra.mxu0 %v1555
    %2029 = vmatpush.bf16.msra.mxu0 %v1554
    %2030 = vmatpush.bf16.msra.mxu0 %v1553
    %2031 = vmatpush.bf16.msra.mxu0 %v1552
    %2032 = vmatmul.bf16.gmra.mxu0 %v1064
    %v2033 = vpop.f32.mrf.mxu0
    %v2034 = vadd.f32 %v1985, %v2033
    %v2035 = vpop.f32.mrf.mxu0
    %v2036 = vadd.f32 %v1987, %v2035
    %2037 = vmatmul.bf16.gmra.mxu0 %v1073
    %v2038 = vpop.f32.mrf.mxu0
    %v2039 = vadd.f32 %v1990, %v2038
    %v2040 = vpop.f32.mrf.mxu0
    %v2041 = vadd.f32 %v1992, %v2040
    %2042 = vmatmul.bf16.gmra.mxu0 %v1082
    %v2043 = vpop.f32.mrf.mxu0
    %v2044 = vadd.f32 %v1995, %v2043
    %v2045 = vpop.f32.mrf.mxu0
    %v2046 = vadd.f32 %v1997, %v2045
    %2047 = vmatmul.bf16.gmra.mxu0 %v1091
    %v2048 = vpop.f32.mrf.mxu0
    %v2049 = vadd.f32 %v2000, %v2048
    %v2050 = vpop.f32.mrf.mxu0
    %v2051 = vadd.f32 %v2002, %v2050
    %2052 = vmatmul.bf16.gmra.mxu0 %v1100
    %v2053 = vpop.f32.mrf.mxu0
    %v2054 = vadd.f32 %v2005, %v2053
    %v2055 = vpop.f32.mrf.mxu0
    %v2056 = vadd.f32 %v2007, %v2055
    %2057 = vmatmul.bf16.gmra.mxu0 %v1109
    %v2058 = vpop.f32.mrf.mxu0
    %v2059 = vadd.f32 %v2010, %v2058
    %v2060 = vpop.f32.mrf.mxu0
    %v2061 = vadd.f32 %v2012, %v2060
    %2062 = vmatmul.bf16.gmra.mxu0 %v1118
    %v2063 = vpop.f32.mrf.mxu0
    %v2064 = vadd.f32 %v2015, %v2063
    %v2065 = vpop.f32.mrf.mxu0
    %v2066 = vadd.f32 %v2017, %v2065
    %2067 = vmatmul.bf16.gmra.mxu0 %v1127
    %v2068 = vpop.f32.mrf.mxu0
    %v2069 = vadd.f32 %v2020, %v2068
    %v2070 = vpop.f32.mrf.mxu0
    %v2071 = vadd.f32 %v2022, %v2070
    %2072 = vdwg.mxu0
    %v2073 = vld [vmem:[%s7] sm:$0x1]
    %v2074 = vld [vmem:[%s8] sm:$0x1]
    %v2075 = vadd.f32 %v2034, %v2036
    %v2076 = vadd.f32 %v2075, %v2039
    %v2077 = vadd.f32 %v2076, %v2041
    %v2078 = vadd.f32 %v2077, %v2044
    %v2079 = vadd.f32 %v2078, %v2046
    %v2080 = vadd.f32 %v2079, %v2049
    %v2081 = vadd.f32 %v2080, %v2051
    %v2082 = vadd.f32 %v2081, %v2054
    %v2083 = vadd.f32 %v2082, %v2056
    %v2084 = vadd.f32 %v2083, %v2059
    %v2085 = vadd.f32 %v2084, %v2061
    %v2086 = vadd.f32 %v2085, %v2064
    %v2087 = vadd.f32 %v2086, %v2066
    %v2088 = vadd.f32 %v2087, %v2069
    %v2089 = vadd.f32 %v2088, %v2071
    %v2090 = vrot.slane %v2089, 4
    %v2091 = vadd.f32 %v2089, %v2090
    %v2092 = vrot.slane %v2091, 2
    %v2093 = vadd.f32 %v2091, %v2092
    %v2094 = vrot.slane %v2093, 1
    %v2095 = vadd.f32 %v2093, %v2094
    %v2096 = vmul.f32 %v2095, 0.0078125
    %v2097 = vmul.f32 %v2034, %v2034
    %v2098 = vmul.f32 %v2036, %v2036
    %v2099 = vmul.f32 %v2039, %v2039
    %v2100 = vmul.f32 %v2041, %v2041
    %v2101 = vmul.f32 %v2044, %v2044
    %v2102 = vmul.f32 %v2046, %v2046
    %v2103 = vmul.f32 %v2049, %v2049
    %v2104 = vmul.f32 %v2051, %v2051
    %v2105 = vmul.f32 %v2054, %v2054
    %v2106 = vmul.f32 %v2056, %v2056
    %v2107 = vmul.f32 %v2059, %v2059
    %v2108 = vmul.f32 %v2061, %v2061
    %v2109 = vmul.f32 %v2064, %v2064
    %v2110 = vmul.f32 %v2066, %v2066
    %v2111 = vmul.f32 %v2069, %v2069
    %v2112 = vmul.f32 %v2071, %v2071
    %v2113 = vadd.f32 %v2097, %v2098
    %v2114 = vadd.f32 %v2113, %v2099
    %v2115 = vadd.f32 %v2114, %v2100
    %v2116 = vadd.f32 %v2115, %v2101
    %v2117 = vadd.f32 %v2116, %v2102
    %v2118 = vadd.f32 %v2117, %v2103
    %v2119 = vadd.f32 %v2118, %v2104
    %v2120 = vadd.f32 %v2119, %v2105
    %v2121 = vadd.f32 %v2120, %v2106
    %v2122 = vadd.f32 %v2121, %v2107
    %v2123 = vadd.f32 %v2122, %v2108
    %v2124 = vadd.f32 %v2123, %v2109
    %v2125 = vadd.f32 %v2124, %v2110
    %v2126 = vadd.f32 %v2125, %v2111
    %v2127 = vadd.f32 %v2126, %v2112
    %v2128 = vrot.slane %v2127, 4
    %v2129 = vadd.f32 %v2127, %v2128
    %v2130 = vrot.slane %v2129, 2
    %v2131 = vadd.f32 %v2129, %v2130
    %v2132 = vrot.slane %v2131, 1
    %v2133 = vadd.f32 %v2131, %v2132
    %v2134 = vmul.f32 %v2133, 0.0078125
    %v2135 = vmul.f32 %v2096, %v2096
    %v2136 = vsub.f32 %v2134, %v2135
    %v2137 = vadd.f32 %v2136, 1e-05
    %v2138 = vrsqrt.pop %v2137
    %v2139 = vmul.f32 %v2138, %v2137
    %v2140 = vmul.f32 %v2139, %v2138
    %v2141 = vmul.f32 0.5, %v2140
    %v2142 = vsub.f32 1.5, %v2141
    %v2143 = vmul.f32 %v2138, %v2142
    %vm2144 = vweird.f32 %v2137
    %vm2145 = vweird.f32 %v2138
    %vm2146 = vmor %vm2144, %vm2145
    %v2147 = vsel %vm2146, %v2138, %v2143
    %v2148 = vmul.f32 %v2073, %v2147
    %v2149 = vmul.f32 %v2096, %v2148
    %v2150 = vsub.f32 %v2074, %v2149
    %v2152 = vperm.slane %v2148, 0
    %v2154 = vmul.f32 %v2034, %v2152
    %v2155 = vmul.f32 %v2036, %v2152
    %v2156 = vmul.f32 %v2039, %v2152
    %v2157 = vmul.f32 %v2041, %v2152
    %v2158 = vmul.f32 %v2044, %v2152
    %v2159 = vmul.f32 %v2046, %v2152
    %v2160 = vmul.f32 %v2049, %v2152
    %v2161 = vmul.f32 %v2051, %v2152
    %v2162 = vmul.f32 %v2054, %v2152
    %v2163 = vmul.f32 %v2056, %v2152
    %v2164 = vmul.f32 %v2059, %v2152
    %v2165 = vmul.f32 %v2061, %v2152
    %v2166 = vmul.f32 %v2064, %v2152
    %v2167 = vmul.f32 %v2066, %v2152
    %v2168 = vmul.f32 %v2069, %v2152
    %v2169 = vmul.f32 %v2071, %v2152
    %v2171 = vperm.slane %v2150, 0
    %v2173 = vadd.f32 %v2154, %v2171
    %v2174 = vadd.f32 %v2155, %v2171
    %v2175 = vadd.f32 %v2156, %v2171
    %v2176 = vadd.f32 %v2157, %v2171
    %v2177 = vadd.f32 %v2158, %v2171
    %v2178 = vadd.f32 %v2159, %v2171
    %v2179 = vadd.f32 %v2160, %v2171
    %v2180 = vadd.f32 %v2161, %v2171
    %v2181 = vadd.f32 %v2162, %v2171
    %v2182 = vadd.f32 %v2163, %v2171
    %v2183 = vadd.f32 %v2164, %v2171
    %v2184 = vadd.f32 %v2165, %v2171
    %v2185 = vadd.f32 %v2166, %v2171
    %v2186 = vadd.f32 %v2167, %v2171
    %v2187 = vadd.f32 %v2168, %v2171
    %v2188 = vadd.f32 %v2169, %v2171
    %v2189 = vmax.f32 %v2173, 0.0
    %v2190 = vmax.f32 %v2174, 0.0
    %v2191 = vmax.f32 %v2175, 0.0
    %v2192 = vmax.f32 %v2176, 0.0
    %v2193 = vmax.f32 %v2177, 0.0
    %v2194 = vmax.f32 %v2178, 0.0
    %v2195 = vmax.f32 %v2179, 0.0
    %v2196 = vmax.f32 %v2180, 0.0
    %v2197 = vmax.f32 %v2181, 0.0
    %v2198 = vmax.f32 %v2182, 0.0
    %v2199 = vmax.f32 %v2183, 0.0
    %v2200 = vmax.f32 %v2184, 0.0
    %v2201 = vmax.f32 %v2185, 0.0
    %v2202 = vmax.f32 %v2186, 0.0
    %v2203 = vmax.f32 %v2187, 0.0
    %v2204 = vmax.f32 %v2188, 0.0
    %v2205 = vpack.c.bf16 %v2189, %v2189
    %v2206 = vpack.c.bf16 %v2190, %v2190
    %v2207 = vpack.c.bf16 %v2191, %v2191
    %v2208 = vpack.c.bf16 %v2192, %v2192
    %v2209 = vpack.c.bf16 %v2193, %v2193
    %v2210 = vpack.c.bf16 %v2194, %v2194
    %v2211 = vpack.c.bf16 %v2195, %v2195
    %v2212 = vpack.c.bf16 %v2196, %v2196
    %v2213 = vpack.c.bf16 %v2197, %v2197
    %v2214 = vpack.c.bf16 %v2198, %v2198
    %v2215 = vpack.c.bf16 %v2199, %v2199
    %v2216 = vpack.c.bf16 %v2200, %v2200
    %v2217 = vpack.c.bf16 %v2201, %v2201
    %v2218 = vpack.c.bf16 %v2202, %v2202
    %v2219 = vpack.c.bf16 %v2203, %v2203
    %v2220 = vpack.c.bf16 %v2204, %v2204
    %2221 = vst [vmem:[#allocation2] sm:$0xf] 0
    %2222 = vst [vmem:[#allocation2 + $0x4] sm:$0x1] 0
    %2223 = vst [vmem:[#allocation2 + $0x50] sm:$0xf] 0
    %2224 = vst [vmem:[#allocation2 + $0x54] sm:$0x1] 0
    %s2225 = scalar_lea.vmem [#allocation2], 72
    %2226 = vst [vmem:[%s2225] sm:$0xf] 0
    %2227 = vst [vmem:[%s2225 + $0x4] sm:$0x1] 0
    %2228 = vst [vmem:[%s2225 + $0x50] sm:$0xf] 0
    %2229 = vst [vmem:[%s2225 + $0x54] sm:$0x1] 0
    %s2230 = scalar_lea.vmem [#allocation2], 8
    %vm2231 = vcmask 1040384
    %vm2232 = vsmask.f32 256
    %vm2233 = vmand %vm2231, %vm2232
    %v2234 = vld [vmem:[%s2230] sm:$0x1]
    %v2235 = vsel %vm2233, 0, %v2234
    %2236 = vst [vmem:[%s2230] sm:$0x1] %v2235
    %v2237 = vld [vmem:[%s2230 + $0x8] sm:$0x1]
    %v2238 = vsel %vm2233, 0, %v2237
    %2239 = vst [vmem:[%s2230 + $0x8] sm:$0x1] %v2238
    %v2240 = vld [vmem:[%s2230 + $0x10] sm:$0x1]
    %v2241 = vsel %vm2233, 0, %v2240
    %2242 = vst [vmem:[%s2230 + $0x10] sm:$0x1] %v2241
    %v2243 = vld [vmem:[%s2230 + $0x18] sm:$0x1]
    %v2244 = vsel %vm2233, 0, %v2243
    %2245 = vst [vmem:[%s2230 + $0x18] sm:$0x1] %v2244
    %v2246 = vld [vmem:[%s2230 + $0x20] sm:$0x1]
    %v2247 = vsel %vm2233, 0, %v2246
    %2248 = vst [vmem:[%s2230 + $0x20] sm:$0x1] %v2247
    %v2249 = vld [vmem:[%s2230 + $0x28] sm:$0x1]
    %v2250 = vsel %vm2233, 0, %v2249
    %2251 = vst [vmem:[%s2230 + $0x28] sm:$0x1] %v2250
    %v2252 = vld [vmem:[%s2230 + $0x30] sm:$0x1]
    %v2253 = vsel %vm2233, 0, %v2252
    %2254 = vst [vmem:[%s2230 + $0x30] sm:$0x1] %v2253
    %v2255 = vld [vmem:[%s2230 + $0x38] sm:$0x1]
    %v2256 = vsel %vm2233, 0, %v2255
    %2257 = vst [vmem:[%s2230 + $0x38] sm:$0x1] %v2256
    %v2258 = vld [vmem:[%s2230 + $0x50] sm:$0x1]
    %v2259 = vsel %vm2233, 0, %v2258
    %2260 = vst [vmem:[%s2230 + $0x50] sm:$0x1] %v2259
    %v2261 = vld [vmem:[%s2230 + $0x58] sm:$0x1]
    %v2262 = vsel %vm2233, 0, %v2261
    %2263 = vst [vmem:[%s2230 + $0x58] sm:$0x1] %v2262
    %v2264 = vld [vmem:[%s2230 + $0x60] sm:$0x1]
    %v2265 = vsel %vm2233, 0, %v2264
    %2266 = vst [vmem:[%s2230 + $0x60] sm:$0x1] %v2265
    %v2267 = vld [vmem:[%s2230 + $0x68] sm:$0x1]
    %v2268 = vsel %vm2233, 0, %v2267
    %2269 = vst [vmem:[%s2230 + $0x68] sm:$0x1] %v2268
    %v2270 = vld [vmem:[%s2230 + $0x70] sm:$0x1]
    %v2271 = vsel %vm2233, 0, %v2270
    %2272 = vst [vmem:[%s2230 + $0x70] sm:$0x1] %v2271
    %v2273 = vld [vmem:[%s2230 + $0x78] sm:$0x1]
    %v2274 = vsel %vm2233, 0, %v2273
    %2275 = vst [vmem:[%s2230 + $0x78] sm:$0x1] %v2274
    %v2276 = vld [vmem:[%s2230 + $0x80] sm:$0x1]
    %v2277 = vsel %vm2233, 0, %v2276
    %2278 = vst [vmem:[%s2230 + $0x80] sm:$0x1] %v2277
    %v2279 = vld [vmem:[%s2230 + $0x88] sm:$0x1]
    %v2280 = vsel %vm2233, 0, %v2279
    %2281 = vst [vmem:[%s2230 + $0x88] sm:$0x1] %v2280
    %vm2282 = vsmask.f32 7938
    %vm2283 = vmand %vm2231, %vm2282
    %v2284 = vld [vmem:[%s2230 + $0x4] sm:$0x1]
    %v2285 = vsel %vm2283, 0, %v2284
    %2286 = vst [vmem:[%s2230 + $0x4] sm:$0x1] %v2285
    %v2287 = vld [vmem:[%s2230 + $0xc] sm:$0x1]
    %v2288 = vsel %vm2283, 0, %v2287
    %2289 = vst [vmem:[%s2230 + $0xc] sm:$0x1] %v2288
    %v2290 = vld [vmem:[%s2230 + $0x14] sm:$0x1]
    %v2291 = vsel %vm2283, 0, %v2290
    %2292 = vst [vmem:[%s2230 + $0x14] sm:$0x1] %v2291
    %v2293 = vld [vmem:[%s2230 + $0x1c] sm:$0x1]
    %v2294 = vsel %vm2283, 0, %v2293
    %2295 = vst [vmem:[%s2230 + $0x1c] sm:$0x1] %v2294
    %v2296 = vld [vmem:[%s2230 + $0x24] sm:$0x1]
    %v2297 = vsel %vm2283, 0, %v2296
    %2298 = vst [vmem:[%s2230 + $0x24] sm:$0x1] %v2297
    %v2299 = vld [vmem:[%s2230 + $0x2c] sm:$0x1]
    %v2300 = vsel %vm2283, 0, %v2299
    %2301 = vst [vmem:[%s2230 + $0x2c] sm:$0x1] %v2300
    %v2302 = vld [vmem:[%s2230 + $0x34] sm:$0x1]
    %v2303 = vsel %vm2283, 0, %v2302
    %2304 = vst [vmem:[%s2230 + $0x34] sm:$0x1] %v2303
    %v2305 = vld [vmem:[%s2230 + $0x3c] sm:$0x1]
    %v2306 = vsel %vm2283, 0, %v2305
    %2307 = vst [vmem:[%s2230 + $0x3c] sm:$0x1] %v2306
    %v2308 = vld [vmem:[%s2230 + $0x54] sm:$0x1]
    %v2309 = vsel %vm2283, 0, %v2308
    %2310 = vst [vmem:[%s2230 + $0x54] sm:$0x1] %v2309
    %v2311 = vld [vmem:[%s2230 + $0x5c] sm:$0x1]
    %v2312 = vsel %vm2283, 0, %v2311
    %2313 = vst [vmem:[%s2230 + $0x5c] sm:$0x1] %v2312
    %v2314 = vld [vmem:[%s2230 + $0x64] sm:$0x1]
    %v2315 = vsel %vm2283, 0, %v2314
    %2316 = vst [vmem:[%s2230 + $0x64] sm:$0x1] %v2315
    %v2317 = vld [vmem:[%s2230 + $0x6c] sm:$0x1]
    %v2318 = vsel %vm2283, 0, %v2317
    %2319 = vst [vmem:[%s2230 + $0x6c] sm:$0x1] %v2318
    %v2320 = vld [vmem:[%s2230 + $0x74] sm:$0x1]
    %v2321 = vsel %vm2283, 0, %v2320
    %2322 = vst [vmem:[%s2230 + $0x74] sm:$0x1] %v2321
    %v2323 = vld [vmem:[%s2230 + $0x7c] sm:$0x1]
    %v2324 = vsel %vm2283, 0, %v2323
    %2325 = vst [vmem:[%s2230 + $0x7c] sm:$0x1] %v2324
    %v2326 = vld [vmem:[%s2230 + $0x84] sm:$0x1]
    %v2327 = vsel %vm2283, 0, %v2326
    %2328 = vst [vmem:[%s2230 + $0x84] sm:$0x1] %v2327
    %v2329 = vld [vmem:[%s2230 + $0x8c] sm:$0x1]
    %v2330 = vsel %vm2283, 0, %v2329
    %2331 = vst [vmem:[%s2230 + $0x8c] sm:$0x1] %v2330
    %v2333 = vshrl.u32 %v2205, 16
    %v2335 = vrot.slane %v2333, 7
    %v2336 = vshll.u32 %v2205, 16
    %v2338 = vor.u32 %v2335, %v2336
    %v2339 = vrot.slane %v2335, 4
    %v2341 = vshrl.u32 %v2206, 16
    %v2343 = vrot.slane %v2341, 7
    %v2344 = vshll.u32 %v2206, 16
    %v2346 = vor.u32 %v2343, %v2344
    %v2347 = vrot.slane %v2343, 4
    %v2349 = vshrl.u32 %v2207, 16
    %v2351 = vrot.slane %v2349, 7
    %v2352 = vshll.u32 %v2207, 16
    %v2354 = vor.u32 %v2351, %v2352
    %v2355 = vrot.slane %v2351, 4
    %v2357 = vshrl.u32 %v2208, 16
    %v2359 = vrot.slane %v2357, 7
    %v2360 = vshll.u32 %v2208, 16
    %v2362 = vor.u32 %v2359, %v2360
    %v2363 = vrot.slane %v2359, 4
    %v2365 = vshrl.u32 %v2209, 16
    %v2367 = vrot.slane %v2365, 7
    %v2368 = vshll.u32 %v2209, 16
    %v2370 = vor.u32 %v2367, %v2368
    %v2371 = vrot.slane %v2367, 4
    %v2373 = vshrl.u32 %v2210, 16
    %v2375 = vrot.slane %v2373, 7
    %v2376 = vshll.u32 %v2210, 16
    %v2378 = vor.u32 %v2375, %v2376
    %v2379 = vrot.slane %v2375, 4
    %v2381 = vshrl.u32 %v2211, 16
    %v2383 = vrot.slane %v2381, 7
    %v2384 = vshll.u32 %v2211, 16
    %v2386 = vor.u32 %v2383, %v2384
    %v2387 = vrot.slane %v2383, 4
    %v2389 = vshrl.u32 %v2212, 16
    %v2391 = vrot.slane %v2389, 7
    %v2392 = vshll.u32 %v2212, 16
    %v2394 = vor.u32 %v2391, %v2392
    %v2395 = vrot.slane %v2391, 4
    %v2397 = vshrl.u32 %v2213, 16
    %v2399 = vrot.slane %v2397, 7
    %v2400 = vshll.u32 %v2213, 16
    %v2402 = vor.u32 %v2399, %v2400
    %v2403 = vrot.slane %v2399, 4
    %v2405 = vshrl.u32 %v2214, 16
    %v2407 = vrot.slane %v2405, 7
    %v2408 = vshll.u32 %v2214, 16
    %v2410 = vor.u32 %v2407, %v2408
    %v2411 = vrot.slane %v2407, 4
    %v2413 = vshrl.u32 %v2215, 16
    %v2415 = vrot.slane %v2413, 7
    %v2416 = vshll.u32 %v2215, 16
    %v2418 = vor.u32 %v2415, %v2416
    %v2419 = vrot.slane %v2415, 4
    %v2421 = vshrl.u32 %v2216, 16
    %v2423 = vrot.slane %v2421, 7
    %v2424 = vshll.u32 %v2216, 16
    %v2426 = vor.u32 %v2423, %v2424
    %v2427 = vrot.slane %v2423, 4
    %v2429 = vshrl.u32 %v2217, 16
    %v2431 = vrot.slane %v2429, 7
    %v2432 = vshll.u32 %v2217, 16
    %v2434 = vor.u32 %v2431, %v2432
    %v2435 = vrot.slane %v2431, 4
    %v2437 = vshrl.u32 %v2218, 16
    %v2439 = vrot.slane %v2437, 7
    %v2440 = vshll.u32 %v2218, 16
    %v2442 = vor.u32 %v2439, %v2440
    %v2443 = vrot.slane %v2439, 4
    %v2445 = vshrl.u32 %v2219, 16
    %v2447 = vrot.slane %v2445, 7
    %v2448 = vshll.u32 %v2219, 16
    %v2450 = vor.u32 %v2447, %v2448
    %v2451 = vrot.slane %v2447, 4
    %v2453 = vshrl.u32 %v2220, 16
    %v2455 = vrot.slane %v2453, 7
    %v2456 = vshll.u32 %v2220, 16
    %v2458 = vor.u32 %v2455, %v2456
    %v2459 = vrot.slane %v2455, 4
    %vm2492 = vcmask 1043456
    %vm2493 = vmand %vm2492, %vm2282
    %v2494 = vld [vmem:[%s2230] sm:$0xf]
    %v2495 = vsel %vm2493, %v2338, %v2494
    %2496 = vst [vmem:[%s2230] sm:$0xf] %v2495
    %v2497 = vld [vmem:[%s2230 + $0x4] sm:$0x1]
    %v2498 = vsel %vm2233, %v2339, %v2497
    %2499 = vst [vmem:[%s2230 + $0x4] sm:$0x1] %v2498
    %v2500 = vld [vmem:[%s2230 + $0x8] sm:$0xf]
    %v2501 = vsel %vm2493, %v2346, %v2500
    %2502 = vst [vmem:[%s2230 + $0x8] sm:$0xf] %v2501
    %v2503 = vld [vmem:[%s2230 + $0xc] sm:$0x1]
    %v2504 = vsel %vm2233, %v2347, %v2503
    %2505 = vst [vmem:[%s2230 + $0xc] sm:$0x1] %v2504
    %v2506 = vld [vmem:[%s2230 + $0x10] sm:$0xf]
    %v2507 = vsel %vm2493, %v2354, %v2506
    %2508 = vst [vmem:[%s2230 + $0x10] sm:$0xf] %v2507
    %v2509 = vld [vmem:[%s2230 + $0x14] sm:$0x1]
    %v2510 = vsel %vm2233, %v2355, %v2509
    %2511 = vst [vmem:[%s2230 + $0x14] sm:$0x1] %v2510
    %v2512 = vld [vmem:[%s2230 + $0x18] sm:$0xf]
    %v2513 = vsel %vm2493, %v2362, %v2512
    %2514 = vst [vmem:[%s2230 + $0x18] sm:$0xf] %v2513
    %v2515 = vld [vmem:[%s2230 + $0x1c] sm:$0x1]
    %v2516 = vsel %vm2233, %v2363, %v2515
    %2517 = vst [vmem:[%s2230 + $0x1c] sm:$0x1] %v2516
    %v2518 = vld [vmem:[%s2230 + $0x20] sm:$0xf]
    %v2519 = vsel %vm2493, %v2370, %v2518
    %2520 = vst [vmem:[%s2230 + $0x20] sm:$0xf] %v2519
    %v2521 = vld [vmem:[%s2230 + $0x24] sm:$0x1]
    %v2522 = vsel %vm2233, %v2371, %v2521
    %2523 = vst [vmem:[%s2230 + $0x24] sm:$0x1] %v2522
    %v2524 = vld [vmem:[%s2230 + $0x28] sm:$0xf]
    %v2525 = vsel %vm2493, %v2378, %v2524
    %2526 = vst [vmem:[%s2230 + $0x28] sm:$0xf] %v2525
    %v2527 = vld [vmem:[%s2230 + $0x2c] sm:$0x1]
    %v2528 = vsel %vm2233, %v2379, %v2527
    %2529 = vst [vmem:[%s2230 + $0x2c] sm:$0x1] %v2528
    %v2530 = vld [vmem:[%s2230 + $0x30] sm:$0xf]
    %v2531 = vsel %vm2493, %v2386, %v2530
    %2532 = vst [vmem:[%s2230 + $0x30] sm:$0xf] %v2531
    %v2533 = vld [vmem:[%s2230 + $0x34] sm:$0x1]
    %v2534 = vsel %vm2233, %v2387, %v2533
    %2535 = vst [vmem:[%s2230 + $0x34] sm:$0x1] %v2534
    %v2536 = vld [vmem:[%s2230 + $0x38] sm:$0xf]
    %v2537 = vsel %vm2493, %v2394, %v2536
    %2538 = vst [vmem:[%s2230 + $0x38] sm:$0xf] %v2537
    %v2539 = vld [vmem:[%s2230 + $0x3c] sm:$0x1]
    %v2540 = vsel %vm2233, %v2395, %v2539
    %2541 = vst [vmem:[%s2230 + $0x3c] sm:$0x1] %v2540
    %v2542 = vld [vmem:[%s2230 + $0x50] sm:$0xf]
    %v2543 = vsel %vm2493, %v2402, %v2542
    %2544 = vst [vmem:[%s2230 + $0x50] sm:$0xf] %v2543
    %v2545 = vld [vmem:[%s2230 + $0x54] sm:$0x1]
    %v2546 = vsel %vm2233, %v2403, %v2545
    %2547 = vst [vmem:[%s2230 + $0x54] sm:$0x1] %v2546
    %v2548 = vld [vmem:[%s2230 + $0x58] sm:$0xf]
    %v2549 = vsel %vm2493, %v2410, %v2548
    %2550 = vst [vmem:[%s2230 + $0x58] sm:$0xf] %v2549
    %v2551 = vld [vmem:[%s2230 + $0x5c] sm:$0x1]
    %v2552 = vsel %vm2233, %v2411, %v2551
    %2553 = vst [vmem:[%s2230 + $0x5c] sm:$0x1] %v2552
    %v2554 = vld [vmem:[%s2230 + $0x60] sm:$0xf]
    %v2555 = vsel %vm2493, %v2418, %v2554
    %2556 = vst [vmem:[%s2230 + $0x60] sm:$0xf] %v2555
    %v2557 = vld [vmem:[%s2230 + $0x64] sm:$0x1]
    %v2558 = vsel %vm2233, %v2419, %v2557
    %2559 = vst [vmem:[%s2230 + $0x64] sm:$0x1] %v2558
    %v2560 = vld [vmem:[%s2230 + $0x68] sm:$0xf]
    %v2561 = vsel %vm2493, %v2426, %v2560
    %2562 = vst [vmem:[%s2230 + $0x68] sm:$0xf] %v2561
    %v2563 = vld [vmem:[%s2230 + $0x6c] sm:$0x1]
    %v2564 = vsel %vm2233, %v2427, %v2563
    %2565 = vst [vmem:[%s2230 + $0x6c] sm:$0x1] %v2564
    %v2566 = vld [vmem:[%s2230 + $0x70] sm:$0xf]
    %v2567 = vsel %vm2493, %v2434, %v2566
    %2568 = vst [vmem:[%s2230 + $0x70] sm:$0xf] %v2567
    %v2569 = vld [vmem:[%s2230 + $0x74] sm:$0x1]
    %v2570 = vsel %vm2233, %v2435, %v2569
    %2571 = vst [vmem:[%s2230 + $0x74] sm:$0x1] %v2570
    %v2572 = vld [vmem:[%s2230 + $0x78] sm:$0xf]
    %v2573 = vsel %vm2493, %v2442, %v2572
    %2574 = vst [vmem:[%s2230 + $0x78] sm:$0xf] %v2573
    %v2575 = vld [vmem:[%s2230 + $0x7c] sm:$0x1]
    %v2576 = vsel %vm2233, %v2443, %v2575
    %2577 = vst [vmem:[%s2230 + $0x7c] sm:$0x1] %v2576
    %v2578 = vld [vmem:[%s2230 + $0x80] sm:$0xf]
    %v2579 = vsel %vm2493, %v2450, %v2578
    %2580 = vst [vmem:[%s2230 + $0x80] sm:$0xf] %v2579
    %v2581 = vld [vmem:[%s2230 + $0x84] sm:$0x1]
    %v2582 = vsel %vm2233, %v2451, %v2581
    %2583 = vst [vmem:[%s2230 + $0x84] sm:$0x1] %v2582
    %v2584 = vld [vmem:[%s2230 + $0x88] sm:$0xf]
    %v2585 = vsel %vm2493, %v2458, %v2584
    %2586 = vst [vmem:[%s2230 + $0x88] sm:$0xf] %v2585
    %v2587 = vld [vmem:[%s2230 + $0x8c] sm:$0x1]
    %v2588 = vsel %vm2233, %v2459, %v2587
    %2589 = vst [vmem:[%s2230 + $0x8c] sm:$0x1] %v2588
    %v2590 = vld [vmem:[#allocation2] sm:$0xf]
    %v2591 = vld [vmem:[#allocation2 + $0x8] sm:$0xf]
    %v2592 = vld [vmem:[#allocation2 + $0x10] sm:$0xf]
    %v2593 = vld [vmem:[#allocation2 + $0x18] sm:$0xf]
    %v2594 = vld [vmem:[#allocation2 + $0x20] sm:$0xf]
    %v2595 = vld [vmem:[#allocation2 + $0x28] sm:$0xf]
    %v2596 = vld [vmem:[#allocation2 + $0x30] sm:$0xf]
    %v2597 = vld [vmem:[#allocation2 + $0x38] sm:$0xf]
    %v2598 = vld [vmem:[#allocation2 + $0x50] sm:$0xf]
    %v2599 = vld [vmem:[#allocation2 + $0x58] sm:$0xf]
    %v2600 = vld [vmem:[#allocation2 + $0x60] sm:$0xf]
    %v2601 = vld [vmem:[#allocation2 + $0x68] sm:$0xf]
    %v2602 = vld [vmem:[#allocation2 + $0x70] sm:$0xf]
    %v2603 = vld [vmem:[#allocation2 + $0x78] sm:$0xf]
    %v2604 = vld [vmem:[#allocation2 + $0x80] sm:$0xf]
    %v2605 = vld [vmem:[#allocation2 + $0x88] sm:$0xf]
    %v2606 = vld [vmem:[#allocation2 + $0x4] sm:$0x1]
    %v2607 = vld [vmem:[#allocation2 + $0xc] sm:$0x1]
    %v2608 = vld [vmem:[#allocation2 + $0x14] sm:$0x1]
    %v2609 = vld [vmem:[#allocation2 + $0x1c] sm:$0x1]
    %v2610 = vld [vmem:[#allocation2 + $0x24] sm:$0x1]
    %v2611 = vld [vmem:[#allocation2 + $0x2c] sm:$0x1]
    %v2612 = vld [vmem:[#allocation2 + $0x34] sm:$0x1]
    %v2613 = vld [vmem:[#allocation2 + $0x3c] sm:$0x1]
    %v2614 = vld [vmem:[#allocation2 + $0x54] sm:$0x1]
    %v2615 = vld [vmem:[#allocation2 + $0x5c] sm:$0x1]
    %v2616 = vld [vmem:[#allocation2 + $0x64] sm:$0x1]
    %v2617 = vld [vmem:[#allocation2 + $0x6c] sm:$0x1]
    %v2618 = vld [vmem:[#allocation2 + $0x74] sm:$0x1]
    %v2619 = vld [vmem:[#allocation2 + $0x7c] sm:$0x1]
    %v2620 = vld [vmem:[#allocation2 + $0x84] sm:$0x1]
    %v2621 = vld [vmem:[#allocation2 + $0x8c] sm:$0x1]
    %v2622 = vld [vmem:[#allocation2] sm:$0xe]
    %v2623 = vld [vmem:[#allocation2 + $0x8] sm:$0xe]
    %v2624 = vld [vmem:[#allocation2 + $0x10] sm:$0xe]
    %v2625 = vld [vmem:[#allocation2 + $0x18] sm:$0xe]
    %v2626 = vld [vmem:[#allocation2 + $0x20] sm:$0xe]
    %v2627 = vld [vmem:[#allocation2 + $0x28] sm:$0xe]
    %v2628 = vld [vmem:[#allocation2 + $0x30] sm:$0xe]
    %v2629 = vld [vmem:[#allocation2 + $0x38] sm:$0xe]
    %v2630 = vld [vmem:[#allocation2 + $0x50] sm:$0xe]
    %v2631 = vld [vmem:[#allocation2 + $0x58] sm:$0xe]
    %v2632 = vld [vmem:[#allocation2 + $0x60] sm:$0xe]
    %v2633 = vld [vmem:[#allocation2 + $0x68] sm:$0xe]
    %v2634 = vld [vmem:[#allocation2 + $0x70] sm:$0xe]
    %v2635 = vld [vmem:[#allocation2 + $0x78] sm:$0xe]
    %v2636 = vld [vmem:[#allocation2 + $0x80] sm:$0xe]
    %v2637 = vld [vmem:[#allocation2 + $0x88] sm:$0xe]
    %v2638 = vld [vmem:[%s2230] sm:$0xf]
    %v2639 = vld [vmem:[%s2230 + $0x8] sm:$0xf]
    %v2640 = vld [vmem:[%s2230 + $0x10] sm:$0xf]
    %v2641 = vld [vmem:[%s2230 + $0x18] sm:$0xf]
    %v2642 = vld [vmem:[%s2230 + $0x20] sm:$0xf]
    %v2643 = vld [vmem:[%s2230 + $0x28] sm:$0xf]
    %v2644 = vld [vmem:[%s2230 + $0x30] sm:$0xf]
    %v2645 = vld [vmem:[%s2230 + $0x38] sm:$0xf]
    %v2646 = vld [vmem:[%s2230 + $0x50] sm:$0xf]
    %v2647 = vld [vmem:[%s2230 + $0x58] sm:$0xf]
    %v2648 = vld [vmem:[%s2230 + $0x60] sm:$0xf]
    %v2649 = vld [vmem:[%s2230 + $0x68] sm:$0xf]
    %v2650 = vld [vmem:[%s2230 + $0x70] sm:$0xf]
    %v2651 = vld [vmem:[%s2230 + $0x78] sm:$0xf]
    %v2652 = vld [vmem:[%s2230 + $0x80] sm:$0xf]
    %v2653 = vld [vmem:[%s2230 + $0x88] sm:$0xf]
    %v2654 = vld [vmem:[%s2230 + $0x4] sm:$0x1]
    %v2655 = vld [vmem:[%s2230 + $0xc] sm:$0x1]
    %v2656 = vld [vmem:[%s2230 + $0x14] sm:$0x1]
    %v2657 = vld [vmem:[%s2230 + $0x1c] sm:$0x1]
    %v2658 = vld [vmem:[%s2230 + $0x24] sm:$0x1]
    %v2659 = vld [vmem:[%s2230 + $0x2c] sm:$0x1]
    %v2660 = vld [vmem:[%s2230 + $0x34] sm:$0x1]
    %v2661 = vld [vmem:[%s2230 + $0x3c] sm:$0x1]
    %v2662 = vld [vmem:[%s2230 + $0x54] sm:$0x1]
    %v2663 = vld [vmem:[%s2230 + $0x5c] sm:$0x1]
    %v2664 = vld [vmem:[%s2230 + $0x64] sm:$0x1]
    %v2665 = vld [vmem:[%s2230 + $0x6c] sm:$0x1]
    %v2666 = vld [vmem:[%s2230 + $0x74] sm:$0x1]
    %v2667 = vld [vmem:[%s2230 + $0x7c] sm:$0x1]
    %v2668 = vld [vmem:[%s2230 + $0x84] sm:$0x1]
    %v2669 = vld [vmem:[%s2230 + $0x8c] sm:$0x1]
    %v2670 = vld [vmem:[%s2230] sm:$0xe]
    %v2671 = vld [vmem:[%s2230 + $0x8] sm:$0xe]
    %v2672 = vld [vmem:[%s2230 + $0x10] sm:$0xe]
    %v2673 = vld [vmem:[%s2230 + $0x18] sm:$0xe]
    %v2674 = vld [vmem:[%s2230 + $0x20] sm:$0xe]
    %v2675 = vld [vmem:[%s2230 + $0x28] sm:$0xe]
    %v2676 = vld [vmem:[%s2230 + $0x30] sm:$0xe]
    %v2677 = vld [vmem:[%s2230 + $0x38] sm:$0xe]
    %v2678 = vld [vmem:[%s2230 + $0x50] sm:$0xe]
    %v2679 = vld [vmem:[%s2230 + $0x58] sm:$0xe]
    %v2680 = vld [vmem:[%s2230 + $0x60] sm:$0xe]
    %v2681 = vld [vmem:[%s2230 + $0x68] sm:$0xe]
    %v2682 = vld [vmem:[%s2230 + $0x70] sm:$0xe]
    %v2683 = vld [vmem:[%s2230 + $0x78] sm:$0xe]
    %v2684 = vld [vmem:[%s2230 + $0x80] sm:$0xe]
    %v2685 = vld [vmem:[%s2230 + $0x88] sm:$0xe]
    %s2686 = scalar_lea.vmem [#allocation2], 16
    %v2687 = vld [vmem:[%s2686] sm:$0xf]
    %v2688 = vld [vmem:[%s2686 + $0x8] sm:$0xf]
    %v2689 = vld [vmem:[%s2686 + $0x10] sm:$0xf]
    %v2690 = vld [vmem:[%s2686 + $0x18] sm:$0xf]
    %v2691 = vld [vmem:[%s2686 + $0x20] sm:$0xf]
    %v2692 = vld [vmem:[%s2686 + $0x28] sm:$0xf]
    %v2693 = vld [vmem:[%s2686 + $0x30] sm:$0xf]
    %v2694 = vld [vmem:[%s2686 + $0x38] sm:$0xf]
    %v2695 = vld [vmem:[%s2686 + $0x50] sm:$0xf]
    %v2696 = vld [vmem:[%s2686 + $0x58] sm:$0xf]
    %v2697 = vld [vmem:[%s2686 + $0x60] sm:$0xf]
    %v2698 = vld [vmem:[%s2686 + $0x68] sm:$0xf]
    %v2699 = vld [vmem:[%s2686 + $0x70] sm:$0xf]
    %v2700 = vld [vmem:[%s2686 + $0x78] sm:$0xf]
    %v2701 = vld [vmem:[%s2686 + $0x80] sm:$0xf]
    %v2702 = vld [vmem:[%s2686 + $0x88] sm:$0xf]
    %v2703 = vld [vmem:[%s2686 + $0x4] sm:$0x1]
    %v2704 = vld [vmem:[%s2686 + $0xc] sm:$0x1]
    %v2705 = vld [vmem:[%s2686 + $0x14] sm:$0x1]
    %v2706 = vld [vmem:[%s2686 + $0x1c] sm:$0x1]
    %v2707 = vld [vmem:[%s2686 + $0x24] sm:$0x1]
    %v2708 = vld [vmem:[%s2686 + $0x2c] sm:$0x1]
    %v2709 = vld [vmem:[%s2686 + $0x34] sm:$0x1]
    %v2710 = vld [vmem:[%s2686 + $0x3c] sm:$0x1]
    %v2711 = vld [vmem:[%s2686 + $0x54] sm:$0x1]
    %v2712 = vld [vmem:[%s2686 + $0x5c] sm:$0x1]
    %v2713 = vld [vmem:[%s2686 + $0x64] sm:$0x1]
    %v2714 = vld [vmem:[%s2686 + $0x6c] sm:$0x1]
    %v2715 = vld [vmem:[%s2686 + $0x74] sm:$0x1]
    %v2716 = vld [vmem:[%s2686 + $0x7c] sm:$0x1]
    %v2717 = vld [vmem:[%s2686 + $0x84] sm:$0x1]
    %v2718 = vld [vmem:[%s2686 + $0x8c] sm:$0x1]
    %v2719 = vld [vmem:[%s2686] sm:$0xe]
    %v2720 = vld [vmem:[%s2686 + $0x8] sm:$0xe]
    %v2721 = vld [vmem:[%s2686 + $0x10] sm:$0xe]
    %v2722 = vld [vmem:[%s2686 + $0x18] sm:$0xe]
    %v2723 = vld [vmem:[%s2686 + $0x20] sm:$0xe]
    %v2724 = vld [vmem:[%s2686 + $0x28] sm:$0xe]
    %v2725 = vld [vmem:[%s2686 + $0x30] sm:$0xe]
    %v2726 = vld [vmem:[%s2686 + $0x38] sm:$0xe]
    %v2727 = vld [vmem:[%s2686 + $0x50] sm:$0xe]
    %v2728 = vld [vmem:[%s2686 + $0x58] sm:$0xe]
    %v2729 = vld [vmem:[%s2686 + $0x60] sm:$0xe]
    %v2730 = vld [vmem:[%s2686 + $0x68] sm:$0xe]
    %v2731 = vld [vmem:[%s2686 + $0x70] sm:$0xe]
    %v2732 = vld [vmem:[%s2686 + $0x78] sm:$0xe]
    %v2733 = vld [vmem:[%s2686 + $0x80] sm:$0xe]
    %v2734 = vld [vmem:[%s2686 + $0x88] sm:$0xe]
    %v2767 = vunpack.c.l.b16 %v2590
    %v2768 = vunpack.c.l.b16 %v2606
    %v2769 = vunpack.c.l.b16 %v2591
    %v2770 = vunpack.c.l.b16 %v2607
    %v2771 = vunpack.c.l.b16 %v2592
    %v2772 = vunpack.c.l.b16 %v2608
    %v2773 = vunpack.c.l.b16 %v2593
    %v2774 = vunpack.c.l.b16 %v2609
    %v2775 = vunpack.c.l.b16 %v2594
    %v2776 = vunpack.c.l.b16 %v2610
    %v2777 = vunpack.c.l.b16 %v2595
    %v2778 = vunpack.c.l.b16 %v2611
    %v2779 = vunpack.c.l.b16 %v2596
    %v2780 = vunpack.c.l.b16 %v2612
    %v2781 = vunpack.c.l.b16 %v2597
    %v2782 = vunpack.c.l.b16 %v2613
    %v2783 = vunpack.c.l.b16 %v2598
    %v2784 = vunpack.c.l.b16 %v2614
    %v2785 = vunpack.c.l.b16 %v2599
    %v2786 = vunpack.c.l.b16 %v2615
    %v2787 = vunpack.c.l.b16 %v2600
    %v2788 = vunpack.c.l.b16 %v2616
    %v2789 = vunpack.c.l.b16 %v2601
    %v2790 = vunpack.c.l.b16 %v2617
    %v2791 = vunpack.c.l.b16 %v2602
    %v2792 = vunpack.c.l.b16 %v2618
    %v2793 = vunpack.c.l.b16 %v2603
    %v2794 = vunpack.c.l.b16 %v2619
    %v2795 = vunpack.c.l.b16 %v2604
    %v2796 = vunpack.c.l.b16 %v2620
    %v2797 = vunpack.c.l.b16 %v2605
    %v2798 = vunpack.c.l.b16 %v2621
    %v2799 = vpack.c.b16 %v2768, %v2767
    %v2800 = vpack.c.b16 %v2770, %v2769
    %v2801 = vpack.c.b16 %v2772, %v2771
    %v2802 = vpack.c.b16 %v2774, %v2773
    %v2803 = vpack.c.b16 %v2776, %v2775
    %v2804 = vpack.c.b16 %v2778, %v2777
    %v2805 = vpack.c.b16 %v2780, %v2779
    %v2806 = vpack.c.b16 %v2782, %v2781
    %v2807 = vpack.c.b16 %v2784, %v2783
    %v2808 = vpack.c.b16 %v2786, %v2785
    %v2809 = vpack.c.b16 %v2788, %v2787
    %v2810 = vpack.c.b16 %v2790, %v2789
    %v2811 = vpack.c.b16 %v2792, %v2791
    %v2812 = vpack.c.b16 %v2794, %v2793
    %v2813 = vpack.c.b16 %v2796, %v2795
    %v2814 = vpack.c.b16 %v2798, %v2797
    %v2816 = vshrl.u32 %v2799, 16
    %v2818 = vshll.u32 %v2799, 16
    %v2820 = vrot.slane %v2818, 1
    %v2821 = vor.u32 %v2816, %v2820
    %v2823 = vshrl.u32 %v2800, 16
    %v2825 = vshll.u32 %v2800, 16
    %v2827 = vrot.slane %v2825, 1
    %v2828 = vor.u32 %v2823, %v2827
    %v2830 = vshrl.u32 %v2801, 16
    %v2832 = vshll.u32 %v2801, 16
    %v2834 = vrot.slane %v2832, 1
    %v2835 = vor.u32 %v2830, %v2834
    %v2837 = vshrl.u32 %v2802, 16
    %v2839 = vshll.u32 %v2802, 16
    %v2841 = vrot.slane %v2839, 1
    %v2842 = vor.u32 %v2837, %v2841
    %v2844 = vshrl.u32 %v2803, 16
    %v2846 = vshll.u32 %v2803, 16
    %v2848 = vrot.slane %v2846, 1
    %v2849 = vor.u32 %v2844, %v2848
    %v2851 = vshrl.u32 %v2804, 16
    %v2853 = vshll.u32 %v2804, 16
    %v2855 = vrot.slane %v2853, 1
    %v2856 = vor.u32 %v2851, %v2855
    %v2858 = vshrl.u32 %v2805, 16
    %v2860 = vshll.u32 %v2805, 16
    %v2862 = vrot.slane %v2860, 1
    %v2863 = vor.u32 %v2858, %v2862
    %v2865 = vshrl.u32 %v2806, 16
    %v2867 = vshll.u32 %v2806, 16
    %v2869 = vrot.slane %v2867, 1
    %v2870 = vor.u32 %v2865, %v2869
    %v2872 = vshrl.u32 %v2807, 16
    %v2874 = vshll.u32 %v2807, 16
    %v2876 = vrot.slane %v2874, 1
    %v2877 = vor.u32 %v2872, %v2876
    %v2879 = vshrl.u32 %v2808, 16
    %v2881 = vshll.u32 %v2808, 16
    %v2883 = vrot.slane %v2881, 1
    %v2884 = vor.u32 %v2879, %v2883
    %v2886 = vshrl.u32 %v2809, 16
    %v2888 = vshll.u32 %v2809, 16
    %v2890 = vrot.slane %v2888, 1
    %v2891 = vor.u32 %v2886, %v2890
    %v2893 = vshrl.u32 %v2810, 16
    %v2895 = vshll.u32 %v2810, 16
    %v2897 = vrot.slane %v2895, 1
    %v2898 = vor.u32 %v2893, %v2897
    %v2900 = vshrl.u32 %v2811, 16
    %v2902 = vshll.u32 %v2811, 16
    %v2904 = vrot.slane %v2902, 1
    %v2905 = vor.u32 %v2900, %v2904
    %v2907 = vshrl.u32 %v2812, 16
    %v2909 = vshll.u32 %v2812, 16
    %v2911 = vrot.slane %v2909, 1
    %v2912 = vor.u32 %v2907, %v2911
    %v2914 = vshrl.u32 %v2813, 16
    %v2916 = vshll.u32 %v2813, 16
    %v2918 = vrot.slane %v2916, 1
    %v2919 = vor.u32 %v2914, %v2918
    %v2921 = vshrl.u32 %v2814, 16
    %v2923 = vshll.u32 %v2814, 16
    %v2925 = vrot.slane %v2923, 1
    %v2926 = vor.u32 %v2921, %v2925
    %v2943 = vunpack.c.l.b16 %v2622
    %v2944 = vunpack.c.l.b16 %v2623
    %v2945 = vunpack.c.l.b16 %v2624
    %v2946 = vunpack.c.l.b16 %v2625
    %v2947 = vunpack.c.l.b16 %v2626
    %v2948 = vunpack.c.l.b16 %v2627
    %v2949 = vunpack.c.l.b16 %v2628
    %v2950 = vunpack.c.l.b16 %v2629
    %v2951 = vunpack.c.l.b16 %v2630
    %v2952 = vunpack.c.l.b16 %v2631
    %v2953 = vunpack.c.l.b16 %v2632
    %v2954 = vunpack.c.l.b16 %v2633
    %v2955 = vunpack.c.l.b16 %v2634
    %v2956 = vunpack.c.l.b16 %v2635
    %v2957 = vunpack.c.l.b16 %v2636
    %v2958 = vunpack.c.l.b16 %v2637
    %v2959 = vpack.c.b16 %v2768, %v2943
    %v2960 = vpack.c.b16 %v2770, %v2944
    %v2961 = vpack.c.b16 %v2772, %v2945
    %v2962 = vpack.c.b16 %v2774, %v2946
    %v2963 = vpack.c.b16 %v2776, %v2947
    %v2964 = vpack.c.b16 %v2778, %v2948
    %v2965 = vpack.c.b16 %v2780, %v2949
    %v2966 = vpack.c.b16 %v2782, %v2950
    %v2967 = vpack.c.b16 %v2784, %v2951
    %v2968 = vpack.c.b16 %v2786, %v2952
    %v2969 = vpack.c.b16 %v2788, %v2953
    %v2970 = vpack.c.b16 %v2790, %v2954
    %v2971 = vpack.c.b16 %v2792, %v2955
    %v2972 = vpack.c.b16 %v2794, %v2956
    %v2973 = vpack.c.b16 %v2796, %v2957
    %v2974 = vpack.c.b16 %v2798, %v2958
    %v2975 = vrot.slane %v2959, 1
    %v2976 = vrot.slane %v2960, 1
    %v2977 = vrot.slane %v2961, 1
    %v2978 = vrot.slane %v2962, 1
    %v2979 = vrot.slane %v2963, 1
    %v2980 = vrot.slane %v2964, 1
    %v2981 = vrot.slane %v2965, 1
    %v2982 = vrot.slane %v2966, 1
    %v2983 = vrot.slane %v2967, 1
    %v2984 = vrot.slane %v2968, 1
    %v2985 = vrot.slane %v2969, 1
    %v2986 = vrot.slane %v2970, 1
    %v2987 = vrot.slane %v2971, 1
    %v2988 = vrot.slane %v2972, 1
    %v2989 = vrot.slane %v2973, 1
    %v2990 = vrot.slane %v2974, 1
    %v3023 = vunpack.c.l.b16 %v2638
    %v3024 = vunpack.c.l.b16 %v2654
    %v3025 = vunpack.c.l.b16 %v2639
    %v3026 = vunpack.c.l.b16 %v2655
    %v3027 = vunpack.c.l.b16 %v2640
    %v3028 = vunpack.c.l.b16 %v2656
    %v3029 = vunpack.c.l.b16 %v2641
    %v3030 = vunpack.c.l.b16 %v2657
    %v3031 = vunpack.c.l.b16 %v2642
    %v3032 = vunpack.c.l.b16 %v2658
    %v3033 = vunpack.c.l.b16 %v2643
    %v3034 = vunpack.c.l.b16 %v2659
    %v3035 = vunpack.c.l.b16 %v2644
    %v3036 = vunpack.c.l.b16 %v2660
    %v3037 = vunpack.c.l.b16 %v2645
    %v3038 = vunpack.c.l.b16 %v2661
    %v3039 = vunpack.c.l.b16 %v2646
    %v3040 = vunpack.c.l.b16 %v2662
    %v3041 = vunpack.c.l.b16 %v2647
    %v3042 = vunpack.c.l.b16 %v2663
    %v3043 = vunpack.c.l.b16 %v2648
    %v3044 = vunpack.c.l.b16 %v2664
    %v3045 = vunpack.c.l.b16 %v2649
    %v3046 = vunpack.c.l.b16 %v2665
    %v3047 = vunpack.c.l.b16 %v2650
    %v3048 = vunpack.c.l.b16 %v2666
    %v3049 = vunpack.c.l.b16 %v2651
    %v3050 = vunpack.c.l.b16 %v2667
    %v3051 = vunpack.c.l.b16 %v2652
    %v3052 = vunpack.c.l.b16 %v2668
    %v3053 = vunpack.c.l.b16 %v2653
    %v3054 = vunpack.c.l.b16 %v2669
    %v3055 = vpack.c.b16 %v3024, %v3023
    %v3056 = vpack.c.b16 %v3026, %v3025
    %v3057 = vpack.c.b16 %v3028, %v3027
    %v3058 = vpack.c.b16 %v3030, %v3029
    %v3059 = vpack.c.b16 %v3032, %v3031
    %v3060 = vpack.c.b16 %v3034, %v3033
    %v3061 = vpack.c.b16 %v3036, %v3035
    %v3062 = vpack.c.b16 %v3038, %v3037
    %v3063 = vpack.c.b16 %v3040, %v3039
    %v3064 = vpack.c.b16 %v3042, %v3041
    %v3065 = vpack.c.b16 %v3044, %v3043
    %v3066 = vpack.c.b16 %v3046, %v3045
    %v3067 = vpack.c.b16 %v3048, %v3047
    %v3068 = vpack.c.b16 %v3050, %v3049
    %v3069 = vpack.c.b16 %v3052, %v3051
    %v3070 = vpack.c.b16 %v3054, %v3053
    %v3072 = vshrl.u32 %v3055, 16
    %v3074 = vshll.u32 %v3055, 16
    %v3076 = vrot.slane %v3074, 1
    %v3077 = vor.u32 %v3072, %v3076
    %v3079 = vshrl.u32 %v3056, 16
    %v3081 = vshll.u32 %v3056, 16
    %v3083 = vrot.slane %v3081, 1
    %v3084 = vor.u32 %v3079, %v3083
    %v3086 = vshrl.u32 %v3057, 16
    %v3088 = vshll.u32 %v3057, 16
    %v3090 = vrot.slane %v3088, 1
    %v3091 = vor.u32 %v3086, %v3090
    %v3093 = vshrl.u32 %v3058, 16
    %v3095 = vshll.u32 %v3058, 16
    %v3097 = vrot.slane %v3095, 1
    %v3098 = vor.u32 %v3093, %v3097
    %v3100 = vshrl.u32 %v3059, 16
    %v3102 = vshll.u32 %v3059, 16
    %v3104 = vrot.slane %v3102, 1
    %v3105 = vor.u32 %v3100, %v3104
    %v3107 = vshrl.u32 %v3060, 16
    %v3109 = vshll.u32 %v3060, 16
    %v3111 = vrot.slane %v3109, 1
    %v3112 = vor.u32 %v3107, %v3111
    %v3114 = vshrl.u32 %v3061, 16
    %v3116 = vshll.u32 %v3061, 16
    %v3118 = vrot.slane %v3116, 1
    %v3119 = vor.u32 %v3114, %v3118
    %v3121 = vshrl.u32 %v3062, 16
    %v3123 = vshll.u32 %v3062, 16
    %v3125 = vrot.slane %v3123, 1
    %v3126 = vor.u32 %v3121, %v3125
    %v3128 = vshrl.u32 %v3063, 16
    %v3130 = vshll.u32 %v3063, 16
    %v3132 = vrot.slane %v3130, 1
    %v3133 = vor.u32 %v3128, %v3132
    %v3135 = vshrl.u32 %v3064, 16
    %v3137 = vshll.u32 %v3064, 16
    %v3139 = vrot.slane %v3137, 1
    %v3140 = vor.u32 %v3135, %v3139
    %v3142 = vshrl.u32 %v3065, 16
    %v3144 = vshll.u32 %v3065, 16
    %v3146 = vrot.slane %v3144, 1
    %v3147 = vor.u32 %v3142, %v3146
    %v3149 = vshrl.u32 %v3066, 16
    %v3151 = vshll.u32 %v3066, 16
    %v3153 = vrot.slane %v3151, 1
    %v3154 = vor.u32 %v3149, %v3153
    %v3156 = vshrl.u32 %v3067, 16
    %v3158 = vshll.u32 %v3067, 16
    %v3160 = vrot.slane %v3158, 1
    %v3161 = vor.u32 %v3156, %v3160
    %v3163 = vshrl.u32 %v3068, 16
    %v3165 = vshll.u32 %v3068, 16
    %v3167 = vrot.slane %v3165, 1
    %v3168 = vor.u32 %v3163, %v3167
    %v3170 = vshrl.u32 %v3069, 16
    %v3172 = vshll.u32 %v3069, 16
    %v3174 = vrot.slane %v3172, 1
    %v3175 = vor.u32 %v3170, %v3174
    %v3177 = vshrl.u32 %v3070, 16
    %v3179 = vshll.u32 %v3070, 16
    %v3181 = vrot.slane %v3179, 1
    %v3182 = vor.u32 %v3177, %v3181
    %v3199 = vunpack.c.l.b16 %v2670
    %v3200 = vunpack.c.l.b16 %v2671
    %v3201 = vunpack.c.l.b16 %v2672
    %v3202 = vunpack.c.l.b16 %v2673
    %v3203 = vunpack.c.l.b16 %v2674
    %v3204 = vunpack.c.l.b16 %v2675
    %v3205 = vunpack.c.l.b16 %v2676
    %v3206 = vunpack.c.l.b16 %v2677
    %v3207 = vunpack.c.l.b16 %v2678
    %v3208 = vunpack.c.l.b16 %v2679
    %v3209 = vunpack.c.l.b16 %v2680
    %v3210 = vunpack.c.l.b16 %v2681
    %v3211 = vunpack.c.l.b16 %v2682
    %v3212 = vunpack.c.l.b16 %v2683
    %v3213 = vunpack.c.l.b16 %v2684
    %v3214 = vunpack.c.l.b16 %v2685
    %v3215 = vpack.c.b16 %v3024, %v3199
    %v3216 = vpack.c.b16 %v3026, %v3200
    %v3217 = vpack.c.b16 %v3028, %v3201
    %v3218 = vpack.c.b16 %v3030, %v3202
    %v3219 = vpack.c.b16 %v3032, %v3203
    %v3220 = vpack.c.b16 %v3034, %v3204
    %v3221 = vpack.c.b16 %v3036, %v3205
    %v3222 = vpack.c.b16 %v3038, %v3206
    %v3223 = vpack.c.b16 %v3040, %v3207
    %v3224 = vpack.c.b16 %v3042, %v3208
    %v3225 = vpack.c.b16 %v3044, %v3209
    %v3226 = vpack.c.b16 %v3046, %v3210
    %v3227 = vpack.c.b16 %v3048, %v3211
    %v3228 = vpack.c.b16 %v3050, %v3212
    %v3229 = vpack.c.b16 %v3052, %v3213
    %v3230 = vpack.c.b16 %v3054, %v3214
    %v3231 = vrot.slane %v3215, 1
    %v3232 = vrot.slane %v3216, 1
    %v3233 = vrot.slane %v3217, 1
    %v3234 = vrot.slane %v3218, 1
    %v3235 = vrot.slane %v3219, 1
    %v3236 = vrot.slane %v3220, 1
    %v3237 = vrot.slane %v3221, 1
    %v3238 = vrot.slane %v3222, 1
    %v3239 = vrot.slane %v3223, 1
    %v3240 = vrot.slane %v3224, 1
    %v3241 = vrot.slane %v3225, 1
    %v3242 = vrot.slane %v3226, 1
    %v3243 = vrot.slane %v3227, 1
    %v3244 = vrot.slane %v3228, 1
    %v3245 = vrot.slane %v3229, 1
    %v3246 = vrot.slane %v3230, 1
    %v3279 = vunpack.c.l.b16 %v2687
    %v3280 = vunpack.c.l.b16 %v2703
    %v3281 = vunpack.c.l.b16 %v2688
    %v3282 = vunpack.c.l.b16 %v2704
    %v3283 = vunpack.c.l.b16 %v2689
    %v3284 = vunpack.c.l.b16 %v2705
    %v3285 = vunpack.c.l.b16 %v2690
    %v3286 = vunpack.c.l.b16 %v2706
    %v3287 = vunpack.c.l.b16 %v2691
    %v3288 = vunpack.c.l.b16 %v2707
    %v3289 = vunpack.c.l.b16 %v2692
    %v3290 = vunpack.c.l.b16 %v2708
    %v3291 = vunpack.c.l.b16 %v2693
    %v3292 = vunpack.c.l.b16 %v2709
    %v3293 = vunpack.c.l.b16 %v2694
    %v3294 = vunpack.c.l.b16 %v2710
    %v3295 = vunpack.c.l.b16 %v2695
    %v3296 = vunpack.c.l.b16 %v2711
    %v3297 = vunpack.c.l.b16 %v2696
    %v3298 = vunpack.c.l.b16 %v2712
    %v3299 = vunpack.c.l.b16 %v2697
    %v3300 = vunpack.c.l.b16 %v2713
    %v3301 = vunpack.c.l.b16 %v2698
    %v3302 = vunpack.c.l.b16 %v2714
    %v3303 = vunpack.c.l.b16 %v2699
    %v3304 = vunpack.c.l.b16 %v2715
    %v3305 = vunpack.c.l.b16 %v2700
    %v3306 = vunpack.c.l.b16 %v2716
    %v3307 = vunpack.c.l.b16 %v2701
    %v3308 = vunpack.c.l.b16 %v2717
    %v3309 = vunpack.c.l.b16 %v2702
    %v3310 = vunpack.c.l.b16 %v2718
    %v3311 = vpack.c.b16 %v3280, %v3279
    %v3312 = vpack.c.b16 %v3282, %v3281
    %v3313 = vpack.c.b16 %v3284, %v3283
    %v3314 = vpack.c.b16 %v3286, %v3285
    %v3315 = vpack.c.b16 %v3288, %v3287
    %v3316 = vpack.c.b16 %v3290, %v3289
    %v3317 = vpack.c.b16 %v3292, %v3291
    %v3318 = vpack.c.b16 %v3294, %v3293
    %v3319 = vpack.c.b16 %v3296, %v3295
    %v3320 = vpack.c.b16 %v3298, %v3297
    %v3321 = vpack.c.b16 %v3300, %v3299
    %v3322 = vpack.c.b16 %v3302, %v3301
    %v3323 = vpack.c.b16 %v3304, %v3303
    %v3324 = vpack.c.b16 %v3306, %v3305
    %v3325 = vpack.c.b16 %v3308, %v3307
    %v3326 = vpack.c.b16 %v3310, %v3309
    %v3328 = vshrl.u32 %v3311, 16
    %v3330 = vshll.u32 %v3311, 16
    %v3332 = vrot.slane %v3330, 1
    %v3333 = vor.u32 %v3328, %v3332
    %v3335 = vshrl.u32 %v3312, 16
    %v3337 = vshll.u32 %v3312, 16
    %v3339 = vrot.slane %v3337, 1
    %v3340 = vor.u32 %v3335, %v3339
    %v3342 = vshrl.u32 %v3313, 16
    %v3344 = vshll.u32 %v3313, 16
    %v3346 = vrot.slane %v3344, 1
    %v3347 = vor.u32 %v3342, %v3346
    %v3349 = vshrl.u32 %v3314, 16
    %v3351 = vshll.u32 %v3314, 16
    %v3353 = vrot.slane %v3351, 1
    %v3354 = vor.u32 %v3349, %v3353
    %v3356 = vshrl.u32 %v3315, 16
    %v3358 = vshll.u32 %v3315, 16
    %v3360 = vrot.slane %v3358, 1
    %v3361 = vor.u32 %v3356, %v3360
    %v3363 = vshrl.u32 %v3316, 16
    %v3365 = vshll.u32 %v3316, 16
    %v3367 = vrot.slane %v3365, 1
    %v3368 = vor.u32 %v3363, %v3367
    %v3370 = vshrl.u32 %v3317, 16
    %v3372 = vshll.u32 %v3317, 16
    %v3374 = vrot.slane %v3372, 1
    %v3375 = vor.u32 %v3370, %v3374
    %v3377 = vshrl.u32 %v3318, 16
    %v3379 = vshll.u32 %v3318, 16
    %v3381 = vrot.slane %v3379, 1
    %v3382 = vor.u32 %v3377, %v3381
    %v3384 = vshrl.u32 %v3319, 16
    %v3386 = vshll.u32 %v3319, 16
    %v3388 = vrot.slane %v3386, 1
    %v3389 = vor.u32 %v3384, %v3388
    %v3391 = vshrl.u32 %v3320, 16
    %v3393 = vshll.u32 %v3320, 16
    %v3395 = vrot.slane %v3393, 1
    %v3396 = vor.u32 %v3391, %v3395
    %v3398 = vshrl.u32 %v3321, 16
    %v3400 = vshll.u32 %v3321, 16
    %v3402 = vrot.slane %v3400, 1
    %v3403 = vor.u32 %v3398, %v3402
    %v3405 = vshrl.u32 %v3322, 16
    %v3407 = vshll.u32 %v3322, 16
    %v3409 = vrot.slane %v3407, 1
    %v3410 = vor.u32 %v3405, %v3409
    %v3412 = vshrl.u32 %v3323, 16
    %v3414 = vshll.u32 %v3323, 16
    %v3416 = vrot.slane %v3414, 1
    %v3417 = vor.u32 %v3412, %v3416
    %v3419 = vshrl.u32 %v3324, 16
    %v3421 = vshll.u32 %v3324, 16
    %v3423 = vrot.slane %v3421, 1
    %v3424 = vor.u32 %v3419, %v3423
    %v3426 = vshrl.u32 %v3325, 16
    %v3428 = vshll.u32 %v3325, 16
    %v3430 = vrot.slane %v3428, 1
    %v3431 = vor.u32 %v3426, %v3430
    %v3433 = vshrl.u32 %v3326, 16
    %v3435 = vshll.u32 %v3326, 16
    %v3437 = vrot.slane %v3435, 1
    %v3438 = vor.u32 %v3433, %v3437
    %v3455 = vunpack.c.l.b16 %v2719
    %v3456 = vunpack.c.l.b16 %v2720
    %v3457 = vunpack.c.l.b16 %v2721
    %v3458 = vunpack.c.l.b16 %v2722
    %v3459 = vunpack.c.l.b16 %v2723
    %v3460 = vunpack.c.l.b16 %v2724
    %v3461 = vunpack.c.l.b16 %v2725
    %v3462 = vunpack.c.l.b16 %v2726
    %v3463 = vunpack.c.l.b16 %v2727
    %v3464 = vunpack.c.l.b16 %v2728
    %v3465 = vunpack.c.l.b16 %v2729
    %v3466 = vunpack.c.l.b16 %v2730
    %v3467 = vunpack.c.l.b16 %v2731
    %v3468 = vunpack.c.l.b16 %v2732
    %v3469 = vunpack.c.l.b16 %v2733
    %v3470 = vunpack.c.l.b16 %v2734
    %v3471 = vpack.c.b16 %v3280, %v3455
    %v3472 = vpack.c.b16 %v3282, %v3456
    %v3473 = vpack.c.b16 %v3284, %v3457
    %v3474 = vpack.c.b16 %v3286, %v3458
    %v3475 = vpack.c.b16 %v3288, %v3459
    %v3476 = vpack.c.b16 %v3290, %v3460
    %v3477 = vpack.c.b16 %v3292, %v3461
    %v3478 = vpack.c.b16 %v3294, %v3462
    %v3479 = vpack.c.b16 %v3296, %v3463
    %v3480 = vpack.c.b16 %v3298, %v3464
    %v3481 = vpack.c.b16 %v3300, %v3465
    %v3482 = vpack.c.b16 %v3302, %v3466
    %v3483 = vpack.c.b16 %v3304, %v3467
    %v3484 = vpack.c.b16 %v3306, %v3468
    %v3485 = vpack.c.b16 %v3308, %v3469
    %v3486 = vpack.c.b16 %v3310, %v3470
    %v3487 = vrot.slane %v3471, 1
    %v3488 = vrot.slane %v3472, 1
    %v3489 = vrot.slane %v3473, 1
    %v3490 = vrot.slane %v3474, 1
    %v3491 = vrot.slane %v3475, 1
    %v3492 = vrot.slane %v3476, 1
    %v3493 = vrot.slane %v3477, 1
    %v3494 = vrot.slane %v3478, 1
    %v3495 = vrot.slane %v3479, 1
    %v3496 = vrot.slane %v3480, 1
    %v3497 = vrot.slane %v3481, 1
    %v3498 = vrot.slane %v3482, 1
    %v3499 = vrot.slane %v3483, 1
    %v3500 = vrot.slane %v3484, 1
    %v3501 = vrot.slane %v3485, 1
    %v3502 = vrot.slane %v3486, 1
    %v3503 = vunpack.c.l.b16 %v2821
    %v3504 = vunpack.c.l.b16 %v2975
    %v3505 = vunpack.c.l.b16 %v3077
    %v3506 = vunpack.c.l.b16 %v3231
    %v3507 = vunpack.c.l.b16 %v3333
    %v3508 = vunpack.c.l.b16 %v3487
    %v3509 = vunpack.c.l.b16 %v2828
    %v3510 = vunpack.c.l.b16 %v2976
    %v3511 = vunpack.c.l.b16 %v3084
    %v3512 = vunpack.c.l.b16 %v3232
    %v3513 = vunpack.c.l.b16 %v3340
    %v3514 = vunpack.c.l.b16 %v3488
    %v3515 = vunpack.c.l.b16 %v2835
    %v3516 = vunpack.c.l.b16 %v2977
    %v3517 = vunpack.c.l.b16 %v3091
    %v3518 = vunpack.c.l.b16 %v3233
    %v3519 = vunpack.c.l.b16 %v3347
    %v3520 = vunpack.c.l.b16 %v3489
    %v3521 = vunpack.c.l.b16 %v2842
    %v3522 = vunpack.c.l.b16 %v2978
    %v3523 = vunpack.c.l.b16 %v3098
    %v3524 = vunpack.c.l.b16 %v3234
    %v3525 = vunpack.c.l.b16 %v3354
    %v3526 = vunpack.c.l.b16 %v3490
    %v3527 = vunpack.c.l.b16 %v2849
    %v3528 = vunpack.c.l.b16 %v2979
    %v3529 = vunpack.c.l.b16 %v3105
    %v3530 = vunpack.c.l.b16 %v3235
    %v3531 = vunpack.c.l.b16 %v3361
    %v3532 = vunpack.c.l.b16 %v3491
    %v3533 = vunpack.c.l.b16 %v2856
    %v3534 = vunpack.c.l.b16 %v2980
    %v3535 = vunpack.c.l.b16 %v3112
    %v3536 = vunpack.c.l.b16 %v3236
    %v3537 = vunpack.c.l.b16 %v3368
    %v3538 = vunpack.c.l.b16 %v3492
    %v3539 = vunpack.c.l.b16 %v2863
    %v3540 = vunpack.c.l.b16 %v2981
    %v3541 = vunpack.c.l.b16 %v3119
    %v3542 = vunpack.c.l.b16 %v3237
    %v3543 = vunpack.c.l.b16 %v3375
    %v3544 = vunpack.c.l.b16 %v3493
    %v3545 = vunpack.c.l.b16 %v2870
    %v3546 = vunpack.c.l.b16 %v2982
    %v3547 = vunpack.c.l.b16 %v3126
    %v3548 = vunpack.c.l.b16 %v3238
    %v3549 = vunpack.c.l.b16 %v3382
    %v3550 = vunpack.c.l.b16 %v3494
    %v3551 = vunpack.c.l.b16 %v2877
    %v3552 = vunpack.c.l.b16 %v2983
    %v3553 = vunpack.c.l.b16 %v3133
    %v3554 = vunpack.c.l.b16 %v3239
    %v3555 = vunpack.c.l.b16 %v3389
    %v3556 = vunpack.c.l.b16 %v3495
    %v3557 = vunpack.c.l.b16 %v2884
    %v3558 = vunpack.c.l.b16 %v2984
    %v3559 = vunpack.c.l.b16 %v3140
    %v3560 = vunpack.c.l.b16 %v3240
    %v3561 = vunpack.c.l.b16 %v3396
    %v3562 = vunpack.c.l.b16 %v3496
    %v3563 = vunpack.c.l.b16 %v2891
    %v3564 = vunpack.c.l.b16 %v2985
    %v3565 = vunpack.c.l.b16 %v3147
    %v3566 = vunpack.c.l.b16 %v3241
    %v3567 = vunpack.c.l.b16 %v3403
    %v3568 = vunpack.c.l.b16 %v3497
    %v3569 = vunpack.c.l.b16 %v2898
    %v3570 = vunpack.c.l.b16 %v2986
    %v3571 = vunpack.c.l.b16 %v3154
    %v3572 = vunpack.c.l.b16 %v3242
    %v3573 = vunpack.c.l.b16 %v3410
    %v3574 = vunpack.c.l.b16 %v3498
    %v3575 = vunpack.c.l.b16 %v2905
    %v3576 = vunpack.c.l.b16 %v2987
    %v3577 = vunpack.c.l.b16 %v3161
    %v3578 = vunpack.c.l.b16 %v3243
    %v3579 = vunpack.c.l.b16 %v3417
    %v3580 = vunpack.c.l.b16 %v3499
    %v3581 = vunpack.c.l.b16 %v2912
    %v3582 = vunpack.c.l.b16 %v2988
    %v3583 = vunpack.c.l.b16 %v3168
    %v3584 = vunpack.c.l.b16 %v3244
    %v3585 = vunpack.c.l.b16 %v3424
    %v3586 = vunpack.c.l.b16 %v3500
    %v3587 = vunpack.c.l.b16 %v2919
    %v3588 = vunpack.c.l.b16 %v2989
    %v3589 = vunpack.c.l.b16 %v3175
    %v3590 = vunpack.c.l.b16 %v3245
    %v3591 = vunpack.c.l.b16 %v3431
    %v3592 = vunpack.c.l.b16 %v3501
    %v3593 = vunpack.c.l.b16 %v2926
    %v3594 = vunpack.c.l.b16 %v2990
    %v3595 = vunpack.c.l.b16 %v3182
    %v3596 = vunpack.c.l.b16 %v3246
    %v3597 = vunpack.c.l.b16 %v3438
    %v3598 = vunpack.c.l.b16 %v3502
    %v3599 = vld [vmem:[%s5] sm:$0xf]
    %v3600 = vld [vmem:[%s5 + $0x4] sm:$0xf]
    %v3601 = vld [vmem:[%s5 + $0x8] sm:$0xf]
    %v3602 = vld [vmem:[%s5 + $0xc] sm:$0xf]
    %v3603 = vld [vmem:[%s5 + $0x10] sm:$0xf]
    %v3604 = vld [vmem:[%s5 + $0x14] sm:$0xf]
    %v3605 = vld [vmem:[%s5 + $0x18] sm:$0xf]
    %v3606 = vld [vmem:[%s5 + $0x1c] sm:$0xf]
    %v3607 = vld [vmem:[%s5 + $0x20] sm:$0xf]
    %v3608 = vld [vmem:[%s5 + $0x24] sm:$0xf]
    %v3609 = vld [vmem:[%s5 + $0x28] sm:$0xf]
    %v3610 = vld [vmem:[%s5 + $0x2c] sm:$0xf]
    %v3611 = vld [vmem:[%s5 + $0x30] sm:$0xf]
    %v3612 = vld [vmem:[%s5 + $0x34] sm:$0xf]
    %v3613 = vld [vmem:[%s5 + $0x38] sm:$0xf]
    %v3614 = vld [vmem:[%s5 + $0x3c] sm:$0xf]
    %v3615 = vld [vmem:[%s5 + $0x40] sm:$0xf]
    %v3616 = vld [vmem:[%s5 + $0x44] sm:$0xf]
    %v3617 = vld [vmem:[%s5 + $0x48] sm:$0xf]
    %v3618 = vld [vmem:[%s5 + $0x4c] sm:$0xf]
    %v3619 = vld [vmem:[%s5 + $0x50] sm:$0xf]
    %v3620 = vld [vmem:[%s5 + $0x54] sm:$0xf]
    %v3621 = vld [vmem:[%s5 + $0x58] sm:$0xf]
    %v3622 = vld [vmem:[%s5 + $0x5c] sm:$0xf]
    %v3623 = vld [vmem:[%s5 + $0x60] sm:$0xf]
    %v3624 = vld [vmem:[%s5 + $0x64] sm:$0xf]
    %v3625 = vld [vmem:[%s5 + $0x68] sm:$0xf]
    %v3626 = vld [vmem:[%s5 + $0x6c] sm:$0xf]
    %v3627 = vld [vmem:[%s5 + $0x70] sm:$0xf]
    %v3628 = vld [vmem:[%s5 + $0x74] sm:$0xf]
    %v3629 = vld [vmem:[%s5 + $0x78] sm:$0xf]
    %v3630 = vld [vmem:[%s5 + $0x7c] sm:$0xf]
    %v3631 = vld [vmem:[%s5 + $0x80] sm:$0xf]
    %v3632 = vld [vmem:[%s5 + $0x84] sm:$0xf]
    %v3633 = vld [vmem:[%s5 + $0x88] sm:$0xf]
    %v3634 = vld [vmem:[%s5 + $0x8c] sm:$0xf]
    %v3635 = vld [vmem:[%s5 + $0x90] sm:$0xf]
    %v3636 = vld [vmem:[%s5 + $0x94] sm:$0xf]
    %v3637 = vld [vmem:[%s5 + $0x98] sm:$0xf]
    %v3638 = vld [vmem:[%s5 + $0x9c] sm:$0xf]
    %v3639 = vld [vmem:[%s5 + $0xa0] sm:$0xf]
    %v3640 = vld [vmem:[%s5 + $0xa4] sm:$0xf]
    %v3641 = vld [vmem:[%s5 + $0xa8] sm:$0xf]
    %v3642 = vld [vmem:[%s5 + $0xac] sm:$0xf]
    %v3643 = vld [vmem:[%s5 + $0xb0] sm:$0xf]
    %v3644 = vld [vmem:[%s5 + $0xb4] sm:$0xf]
    %v3645 = vld [vmem:[%s5 + $0xb8] sm:$0xf]
    %v3646 = vld [vmem:[%s5 + $0xbc] sm:$0xf]
    %v3647 = vld [vmem:[%s5 + $0xc0] sm:$0xf]
    %v3648 = vld [vmem:[%s5 + $0xc4] sm:$0xf]
    %v3649 = vld [vmem:[%s5 + $0xc8] sm:$0xf]
    %v3650 = vld [vmem:[%s5 + $0xcc] sm:$0xf]
    %v3651 = vld [vmem:[%s5 + $0xd0] sm:$0xf]
    %v3652 = vld [vmem:[%s5 + $0xd4] sm:$0xf]
    %v3653 = vld [vmem:[%s5 + $0xd8] sm:$0xf]
    %v3654 = vld [vmem:[%s5 + $0xdc] sm:$0xf]
    %v3655 = vld [vmem:[%s5 + $0xe0] sm:$0xf]
    %v3656 = vld [vmem:[%s5 + $0xe4] sm:$0xf]
    %v3657 = vld [vmem:[%s5 + $0xe8] sm:$0xf]
    %v3658 = vld [vmem:[%s5 + $0xec] sm:$0xf]
    %v3659 = vld [vmem:[%s5 + $0xf0] sm:$0xf]
    %v3660 = vld [vmem:[%s5 + $0xf4] sm:$0xf]
    %v3661 = vld [vmem:[%s5 + $0xf8] sm:$0xf]
    %v3662 = vld [vmem:[%s5 + $0xfc] sm:$0xf]
    %v3663 = vld [vmem:[%s5 + $0x100] sm:$0xf]
    %v3664 = vld [vmem:[%s5 + $0x104] sm:$0xf]
    %v3665 = vld [vmem:[%s5 + $0x108] sm:$0xf]
    %v3666 = vld [vmem:[%s5 + $0x10c] sm:$0xf]
    %v3667 = vld [vmem:[%s5 + $0x110] sm:$0xf]
    %v3668 = vld [vmem:[%s5 + $0x114] sm:$0xf]
    %v3669 = vld [vmem:[%s5 + $0x118] sm:$0xf]
    %v3670 = vld [vmem:[%s5 + $0x11c] sm:$0xf]
    %v3671 = vld [vmem:[%s5 + $0x120] sm:$0xf]
    %v3672 = vld [vmem:[%s5 + $0x124] sm:$0xf]
    %v3673 = vld [vmem:[%s5 + $0x128] sm:$0xf]
    %v3674 = vld [vmem:[%s5 + $0x12c] sm:$0xf]
    %v3675 = vld [vmem:[%s5 + $0x130] sm:$0xf]
    %v3676 = vld [vmem:[%s5 + $0x134] sm:$0xf]
    %v3677 = vld [vmem:[%s5 + $0x138] sm:$0xf]
    %v3678 = vld [vmem:[%s5 + $0x13c] sm:$0xf]
    %v3679 = vld [vmem:[%s5 + $0x140] sm:$0xf]
    %v3680 = vld [vmem:[%s5 + $0x144] sm:$0xf]
    %v3681 = vld [vmem:[%s5 + $0x148] sm:$0xf]
    %v3682 = vld [vmem:[%s5 + $0x14c] sm:$0xf]
    %v3683 = vld [vmem:[%s5 + $0x150] sm:$0xf]
    %v3684 = vld [vmem:[%s5 + $0x154] sm:$0xf]
    %v3685 = vld [vmem:[%s5 + $0x158] sm:$0xf]
    %v3686 = vld [vmem:[%s5 + $0x15c] sm:$0xf]
    %v3687 = vld [vmem:[%s5 + $0x160] sm:$0xf]
    %v3688 = vld [vmem:[%s5 + $0x164] sm:$0xf]
    %v3689 = vld [vmem:[%s5 + $0x168] sm:$0xf]
    %v3690 = vld [vmem:[%s5 + $0x16c] sm:$0xf]
    %v3691 = vld [vmem:[%s5 + $0x170] sm:$0xf]
    %v3692 = vld [vmem:[%s5 + $0x174] sm:$0xf]
    %v3693 = vld [vmem:[%s5 + $0x178] sm:$0xf]
    %v3694 = vld [vmem:[%s5 + $0x17c] sm:$0xf]
    %v3695 = vld [vmem:[%s5 + $0x180] sm:$0xf]
    %v3696 = vld [vmem:[%s5 + $0x184] sm:$0xf]
    %v3697 = vld [vmem:[%s5 + $0x188] sm:$0xf]
    %v3698 = vld [vmem:[%s5 + $0x18c] sm:$0xf]
    %v3699 = vld [vmem:[%s5 + $0x190] sm:$0xf]
    %v3700 = vld [vmem:[%s5 + $0x194] sm:$0xf]
    %v3701 = vld [vmem:[%s5 + $0x198] sm:$0xf]
    %v3702 = vld [vmem:[%s5 + $0x19c] sm:$0xf]
    %v3703 = vld [vmem:[%s5 + $0x1a0] sm:$0xf]
    %v3704 = vld [vmem:[%s5 + $0x1a4] sm:$0xf]
    %v3705 = vld [vmem:[%s5 + $0x1a8] sm:$0xf]
    %v3706 = vld [vmem:[%s5 + $0x1ac] sm:$0xf]
    %v3707 = vld [vmem:[%s5 + $0x1b0] sm:$0xf]
    %v3708 = vld [vmem:[%s5 + $0x1b4] sm:$0xf]
    %v3709 = vld [vmem:[%s5 + $0x1b8] sm:$0xf]
    %v3710 = vld [vmem:[%s5 + $0x1bc] sm:$0xf]
    %v3711 = vld [vmem:[%s5 + $0x1c0] sm:$0xf]
    %v3712 = vld [vmem:[%s5 + $0x1c4] sm:$0xf]
    %v3713 = vld [vmem:[%s5 + $0x1c8] sm:$0xf]
    %v3714 = vld [vmem:[%s5 + $0x1cc] sm:$0xf]
    %v3715 = vld [vmem:[%s5 + $0x1d0] sm:$0xf]
    %v3716 = vld [vmem:[%s5 + $0x1d4] sm:$0xf]
    %v3717 = vld [vmem:[%s5 + $0x1d8] sm:$0xf]
    %v3718 = vld [vmem:[%s5 + $0x1dc] sm:$0xf]
    %v3719 = vld [vmem:[%s5 + $0x1e0] sm:$0xf]
    %v3720 = vld [vmem:[%s5 + $0x1e4] sm:$0xf]
    %v3721 = vld [vmem:[%s5 + $0x1e8] sm:$0xf]
    %v3722 = vld [vmem:[%s5 + $0x1ec] sm:$0xf]
    %v3723 = vld [vmem:[%s5 + $0x1f0] sm:$0xf]
    %v3724 = vld [vmem:[%s5 + $0x1f4] sm:$0xf]
    %v3725 = vld [vmem:[%s5 + $0x1f8] sm:$0xf]
    %v3726 = vld [vmem:[%s5 + $0x1fc] sm:$0xf]
    %v3727 = vld [vmem:[%s5 + $0x200] sm:$0xf]
    %v3728 = vld [vmem:[%s5 + $0x204] sm:$0xf]
    %v3729 = vld [vmem:[%s5 + $0x208] sm:$0xf]
    %v3730 = vld [vmem:[%s5 + $0x20c] sm:$0xf]
    %v3731 = vld [vmem:[%s5 + $0x210] sm:$0xf]
    %v3732 = vld [vmem:[%s5 + $0x214] sm:$0xf]
    %v3733 = vld [vmem:[%s5 + $0x218] sm:$0xf]
    %v3734 = vld [vmem:[%s5 + $0x21c] sm:$0xf]
    %v3735 = vld [vmem:[%s5 + $0x220] sm:$0xf]
    %v3736 = vld [vmem:[%s5 + $0x224] sm:$0xf]
    %v3737 = vld [vmem:[%s5 + $0x228] sm:$0xf]
    %v3738 = vld [vmem:[%s5 + $0x22c] sm:$0xf]
    %v3739 = vld [vmem:[%s5 + $0x230] sm:$0xf]
    %v3740 = vld [vmem:[%s5 + $0x234] sm:$0xf]
    %v3741 = vld [vmem:[%s5 + $0x238] sm:$0xf]
    %v3742 = vld [vmem:[%s5 + $0x23c] sm:$0xf]
    %v3743 = vpack.c.b16 %v2769, %v2767
    %v3744 = vpack.c.b16 %v3509, %v3503
    %v3745 = vpack.c.b16 %v3510, %v3504
    %v3746 = vpack.c.b16 %v3025, %v3023
    %v3747 = vpack.c.b16 %v3511, %v3505
    %v3748 = vpack.c.b16 %v3512, %v3506
    %v3749 = vpack.c.b16 %v3281, %v3279
    %v3750 = vpack.c.b16 %v3513, %v3507
    %v3751 = vpack.c.b16 %v3514, %v3508
    %v3752 = vpack.c.b16 %v2773, %v2771
    %v3753 = vpack.c.b16 %v3521, %v3515
    %v3754 = vpack.c.b16 %v3522, %v3516
    %v3755 = vpack.c.b16 %v3029, %v3027
    %v3756 = vpack.c.b16 %v3523, %v3517
    %v3757 = vpack.c.b16 %v3524, %v3518
    %v3758 = vpack.c.b16 %v3285, %v3283
    %v3759 = vpack.c.b16 %v3525, %v3519
    %v3760 = vpack.c.b16 %v3526, %v3520
    %v3761 = vpack.c.b16 %v2777, %v2775
    %v3762 = vpack.c.b16 %v3533, %v3527
    %v3763 = vpack.c.b16 %v3534, %v3528
    %v3764 = vpack.c.b16 %v3033, %v3031
    %v3765 = vpack.c.b16 %v3535, %v3529
    %v3766 = vpack.c.b16 %v3536, %v3530
    %v3767 = vpack.c.b16 %v3289, %v3287
    %v3768 = vpack.c.b16 %v3537, %v3531
    %v3769 = vpack.c.b16 %v3538, %v3532
    %v3770 = vpack.c.b16 %v2781, %v2779
    %v3771 = vpack.c.b16 %v3545, %v3539
    %v3772 = vpack.c.b16 %v3546, %v3540
    %v3773 = vpack.c.b16 %v3037, %v3035
    %v3774 = vpack.c.b16 %v3547, %v3541
    %v3775 = vpack.c.b16 %v3548, %v3542
    %v3776 = vpack.c.b16 %v3293, %v3291
    %v3777 = vpack.c.b16 %v3549, %v3543
    %v3778 = vpack.c.b16 %v3550, %v3544
    %v3779 = vpack.c.b16 %v2785, %v2783
    %v3780 = vpack.c.b16 %v3557, %v3551
    %v3781 = vpack.c.b16 %v3558, %v3552
    %v3782 = vpack.c.b16 %v3041, %v3039
    %v3783 = vpack.c.b16 %v3559, %v3553
    %v3784 = vpack.c.b16 %v3560, %v3554
    %v3785 = vpack.c.b16 %v3297, %v3295
    %v3786 = vpack.c.b16 %v3561, %v3555
    %v3787 = vpack.c.b16 %v3562, %v3556
    %v3788 = vpack.c.b16 %v2789, %v2787
    %v3789 = vpack.c.b16 %v3569, %v3563
    %v3790 = vpack.c.b16 %v3570, %v3564
    %v3791 = vpack.c.b16 %v3045, %v3043
    %v3792 = vpack.c.b16 %v3571, %v3565
    %v3793 = vpack.c.b16 %v3572, %v3566
    %v3794 = vpack.c.b16 %v3301, %v3299
    %v3795 = vpack.c.b16 %v3573, %v3567
    %v3796 = vpack.c.b16 %v3574, %v3568
    %v3797 = vpack.c.b16 %v2793, %v2791
    %v3798 = vpack.c.b16 %v3581, %v3575
    %v3799 = vpack.c.b16 %v3582, %v3576
    %v3800 = vpack.c.b16 %v3049, %v3047
    %v3801 = vpack.c.b16 %v3583, %v3577
    %v3802 = vpack.c.b16 %v3584, %v3578
    %v3803 = vpack.c.b16 %v3305, %v3303
    %v3804 = vpack.c.b16 %v3585, %v3579
    %v3805 = vpack.c.b16 %v3586, %v3580
    %v3806 = vpack.c.b16 %v2797, %v2795
    %v3807 = vpack.c.b16 %v3593, %v3587
    %v3808 = vpack.c.b16 %v3594, %v3588
    %v3809 = vpack.c.b16 %v3053, %v3051
    %v3810 = vpack.c.b16 %v3595, %v3589
    %v3811 = vpack.c.b16 %v3596, %v3590
    %v3812 = vpack.c.b16 %v3309, %v3307
    %v3813 = vpack.c.b16 %v3597, %v3591
    %v3814 = vpack.c.b16 %v3598, %v3592
    %v4031 = vunpack.c.l.b16 %v3599
    %v4032 = vunpack.c.l.b16 %v3600
    %v4033 = vunpack.c.l.b16 %v3601
    %v4034 = vunpack.c.l.b16 %v3602
    %v4035 = vunpack.c.l.b16 %v3603
    %v4036 = vunpack.c.l.b16 %v3604
    %v4037 = vunpack.c.l.b16 %v3605
    %v4038 = vunpack.c.l.b16 %v3606
    %v4039 = vunpack.c.l.b16 %v3607
    %v4040 = vunpack.c.l.b16 %v3608
    %v4041 = vunpack.c.l.b16 %v3609
    %v4042 = vunpack.c.l.b16 %v3610
    %v4043 = vunpack.c.l.b16 %v3611
    %v4044 = vunpack.c.l.b16 %v3612
    %v4045 = vunpack.c.l.b16 %v3613
    %v4046 = vunpack.c.l.b16 %v3614
    %v4047 = vunpack.c.l.b16 %v3615
    %v4048 = vunpack.c.l.b16 %v3616
    %v4049 = vunpack.c.l.b16 %v3617
    %v4050 = vunpack.c.l.b16 %v3618
    %v4051 = vunpack.c.l.b16 %v3619
    %v4052 = vunpack.c.l.b16 %v3620
    %v4053 = vunpack.c.l.b16 %v3621
    %v4054 = vunpack.c.l.b16 %v3622
    %v4055 = vunpack.c.l.b16 %v3623
    %v4056 = vunpack.c.l.b16 %v3624
    %v4057 = vunpack.c.l.b16 %v3625
    %v4058 = vunpack.c.l.b16 %v3626
    %v4059 = vunpack.c.l.b16 %v3627
    %v4060 = vunpack.c.l.b16 %v3628
    %v4061 = vunpack.c.l.b16 %v3629
    %v4062 = vunpack.c.l.b16 %v3630
    %v4063 = vunpack.c.l.b16 %v3631
    %v4064 = vunpack.c.l.b16 %v3632
    %v4065 = vunpack.c.l.b16 %v3633
    %v4066 = vunpack.c.l.b16 %v3634
    %v4067 = vunpack.c.l.b16 %v3635
    %v4068 = vunpack.c.l.b16 %v3636
    %v4069 = vunpack.c.l.b16 %v3637
    %v4070 = vunpack.c.l.b16 %v3638
    %v4071 = vunpack.c.l.b16 %v3639
    %v4072 = vunpack.c.l.b16 %v3640
    %v4073 = vunpack.c.l.b16 %v3641
    %v4074 = vunpack.c.l.b16 %v3642
    %v4075 = vunpack.c.l.b16 %v3643
    %v4076 = vunpack.c.l.b16 %v3644
    %v4077 = vunpack.c.l.b16 %v3645
    %v4078 = vunpack.c.l.b16 %v3646
    %v4079 = vunpack.c.l.b16 %v3647
    %v4080 = vunpack.c.l.b16 %v3648
    %v4081 = vunpack.c.l.b16 %v3649
    %v4082 = vunpack.c.l.b16 %v3650
    %v4083 = vunpack.c.l.b16 %v3651
    %v4084 = vunpack.c.l.b16 %v3652
    %v4085 = vunpack.c.l.b16 %v3653
    %v4086 = vunpack.c.l.b16 %v3654
    %v4087 = vunpack.c.l.b16 %v3655
    %v4088 = vunpack.c.l.b16 %v3656
    %v4089 = vunpack.c.l.b16 %v3657
    %v4090 = vunpack.c.l.b16 %v3658
    %v4091 = vunpack.c.l.b16 %v3659
    %v4092 = vunpack.c.l.b16 %v3660
    %v4093 = vunpack.c.l.b16 %v3661
    %v4094 = vunpack.c.l.b16 %v3662
    %v4095 = vunpack.c.l.b16 %v3663
    %v4096 = vunpack.c.l.b16 %v3664
    %v4097 = vunpack.c.l.b16 %v3665
    %v4098 = vunpack.c.l.b16 %v3666
    %v4099 = vunpack.c.l.b16 %v3667
    %v4100 = vunpack.c.l.b16 %v3668
    %v4101 = vunpack.c.l.b16 %v3669
    %v4102 = vunpack.c.l.b16 %v3670
    %v4103 = vunpack.c.l.b16 %v3671
    %v4104 = vunpack.c.l.b16 %v3672
    %v4105 = vunpack.c.l.b16 %v3673
    %v4106 = vunpack.c.l.b16 %v3674
    %v4107 = vunpack.c.l.b16 %v3675
    %v4108 = vunpack.c.l.b16 %v3676
    %v4109 = vunpack.c.l.b16 %v3677
    %v4110 = vunpack.c.l.b16 %v3678
    %v4111 = vunpack.c.l.b16 %v3679
    %v4112 = vunpack.c.l.b16 %v3680
    %v4113 = vunpack.c.l.b16 %v3681
    %v4114 = vunpack.c.l.b16 %v3682
    %v4115 = vunpack.c.l.b16 %v3683
    %v4116 = vunpack.c.l.b16 %v3684
    %v4117 = vunpack.c.l.b16 %v3685
    %v4118 = vunpack.c.l.b16 %v3686
    %v4119 = vunpack.c.l.b16 %v3687
    %v4120 = vunpack.c.l.b16 %v3688
    %v4121 = vunpack.c.l.b16 %v3689
    %v4122 = vunpack.c.l.b16 %v3690
    %v4123 = vunpack.c.l.b16 %v3691
    %v4124 = vunpack.c.l.b16 %v3692
    %v4125 = vunpack.c.l.b16 %v3693
    %v4126 = vunpack.c.l.b16 %v3694
    %v4127 = vunpack.c.l.b16 %v3695
    %v4128 = vunpack.c.l.b16 %v3696
    %v4129 = vunpack.c.l.b16 %v3697
    %v4130 = vunpack.c.l.b16 %v3698
    %v4131 = vunpack.c.l.b16 %v3699
    %v4132 = vunpack.c.l.b16 %v3700
    %v4133 = vunpack.c.l.b16 %v3701
    %v4134 = vunpack.c.l.b16 %v3702
    %v4135 = vunpack.c.l.b16 %v3703
    %v4136 = vunpack.c.l.b16 %v3704
    %v4137 = vunpack.c.l.b16 %v3705
    %v4138 = vunpack.c.l.b16 %v3706
    %v4139 = vunpack.c.l.b16 %v3707
    %v4140 = vunpack.c.l.b16 %v3708
    %v4141 = vunpack.c.l.b16 %v3709
    %v4142 = vunpack.c.l.b16 %v3710
    %v4143 = vunpack.c.l.b16 %v3711
    %v4144 = vunpack.c.l.b16 %v3712
    %v4145 = vunpack.c.l.b16 %v3713
    %v4146 = vunpack.c.l.b16 %v3714
    %v4147 = vunpack.c.l.b16 %v3715
    %v4148 = vunpack.c.l.b16 %v3716
    %v4149 = vunpack.c.l.b16 %v3717
    %v4150 = vunpack.c.l.b16 %v3718
    %v4151 = vunpack.c.l.b16 %v3719
    %v4152 = vunpack.c.l.b16 %v3720
    %v4153 = vunpack.c.l.b16 %v3721
    %v4154 = vunpack.c.l.b16 %v3722
    %v4155 = vunpack.c.l.b16 %v3723
    %v4156 = vunpack.c.l.b16 %v3724
    %v4157 = vunpack.c.l.b16 %v3725
    %v4158 = vunpack.c.l.b16 %v3726
    %v4159 = vunpack.c.l.b16 %v3727
    %v4160 = vunpack.c.l.b16 %v3728
    %v4161 = vunpack.c.l.b16 %v3729
    %v4162 = vunpack.c.l.b16 %v3730
    %v4163 = vunpack.c.l.b16 %v3731
    %v4164 = vunpack.c.l.b16 %v3732
    %v4165 = vunpack.c.l.b16 %v3733
    %v4166 = vunpack.c.l.b16 %v3734
    %v4167 = vunpack.c.l.b16 %v3735
    %v4168 = vunpack.c.l.b16 %v3736
    %v4169 = vunpack.c.l.b16 %v3737
    %v4170 = vunpack.c.l.b16 %v3738
    %v4171 = vunpack.c.l.b16 %v3739
    %v4172 = vunpack.c.l.b16 %v3740
    %v4173 = vunpack.c.l.b16 %v3741
    %v4174 = vunpack.c.l.b16 %v3742
    %v4175 = vpack.c.b16 %v4032, %v4031
    %v4176 = vpack.c.b16 %v4034, %v4033
    %v4177 = vpack.c.b16 %v4036, %v4035
    %v4178 = vpack.c.b16 %v4038, %v4037
    %v4179 = vpack.c.b16 %v4040, %v4039
    %v4180 = vpack.c.b16 %v4042, %v4041
    %v4181 = vpack.c.b16 %v4044, %v4043
    %v4182 = vpack.c.b16 %v4046, %v4045
    %v4183 = vpack.c.b16 %v4048, %v4047
    %v4184 = vpack.c.b16 %v4050, %v4049
    %v4185 = vpack.c.b16 %v4052, %v4051
    %v4186 = vpack.c.b16 %v4054, %v4053
    %v4187 = vpack.c.b16 %v4056, %v4055
    %v4188 = vpack.c.b16 %v4058, %v4057
    %v4189 = vpack.c.b16 %v4060, %v4059
    %v4190 = vpack.c.b16 %v4062, %v4061
    %v4191 = vpack.c.b16 %v4064, %v4063
    %v4192 = vpack.c.b16 %v4066, %v4065
    %v4193 = vpack.c.b16 %v4068, %v4067
    %v4194 = vpack.c.b16 %v4070, %v4069
    %v4195 = vpack.c.b16 %v4072, %v4071
    %v4196 = vpack.c.b16 %v4074, %v4073
    %v4197 = vpack.c.b16 %v4076, %v4075
    %v4198 = vpack.c.b16 %v4078, %v4077
    %v4199 = vpack.c.b16 %v4080, %v4079
    %v4200 = vpack.c.b16 %v4082, %v4081
    %v4201 = vpack.c.b16 %v4084, %v4083
    %v4202 = vpack.c.b16 %v4086, %v4085
    %v4203 = vpack.c.b16 %v4088, %v4087
    %v4204 = vpack.c.b16 %v4090, %v4089
    %v4205 = vpack.c.b16 %v4092, %v4091
    %v4206 = vpack.c.b16 %v4094, %v4093
    %v4207 = vpack.c.b16 %v4096, %v4095
    %v4208 = vpack.c.b16 %v4098, %v4097
    %v4209 = vpack.c.b16 %v4100, %v4099
    %v4210 = vpack.c.b16 %v4102, %v4101
    %v4211 = vpack.c.b16 %v4104, %v4103
    %v4212 = vpack.c.b16 %v4106, %v4105
    %v4213 = vpack.c.b16 %v4108, %v4107
    %v4214 = vpack.c.b16 %v4110, %v4109
    %v4215 = vpack.c.b16 %v4112, %v4111
    %v4216 = vpack.c.b16 %v4114, %v4113
    %v4217 = vpack.c.b16 %v4116, %v4115
    %v4218 = vpack.c.b16 %v4118, %v4117
    %v4219 = vpack.c.b16 %v4120, %v4119
    %v4220 = vpack.c.b16 %v4122, %v4121
    %v4221 = vpack.c.b16 %v4124, %v4123
    %v4222 = vpack.c.b16 %v4126, %v4125
    %v4223 = vpack.c.b16 %v4128, %v4127
    %v4224 = vpack.c.b16 %v4130, %v4129
    %v4225 = vpack.c.b16 %v4132, %v4131
    %v4226 = vpack.c.b16 %v4134, %v4133
    %v4227 = vpack.c.b16 %v4136, %v4135
    %v4228 = vpack.c.b16 %v4138, %v4137
    %v4229 = vpack.c.b16 %v4140, %v4139
    %v4230 = vpack.c.b16 %v4142, %v4141
    %v4231 = vpack.c.b16 %v4144, %v4143
    %v4232 = vpack.c.b16 %v4146, %v4145
    %v4233 = vpack.c.b16 %v4148, %v4147
    %v4234 = vpack.c.b16 %v4150, %v4149
    %v4235 = vpack.c.b16 %v4152, %v4151
    %v4236 = vpack.c.b16 %v4154, %v4153
    %v4237 = vpack.c.b16 %v4156, %v4155
    %v4238 = vpack.c.b16 %v4158, %v4157
    %v4239 = vpack.c.b16 %v4160, %v4159
    %v4240 = vpack.c.b16 %v4162, %v4161
    %v4241 = vpack.c.b16 %v4164, %v4163
    %v4242 = vpack.c.b16 %v4166, %v4165
    %v4243 = vpack.c.b16 %v4168, %v4167
    %v4244 = vpack.c.b16 %v4170, %v4169
    %v4245 = vpack.c.b16 %v4172, %v4171
    %v4246 = vpack.c.b16 %v4174, %v4173
    %4319 = vmatpush.bf16.msra.mxu0 %v4182
    %4320 = vmatpush.bf16.msra.mxu0 %v4181
    %4321 = vmatpush.bf16.msra.mxu0 %v4180
    %4322 = vmatpush.bf16.msra.mxu0 %v4179
    %4323 = vmatpush.bf16.msra.mxu0 %v4178
    %4324 = vmatpush.bf16.msra.mxu0 %v4177
    %4325 = vmatpush.bf16.msra.mxu0 %v4176
    %4326 = vmatpush.bf16.msra.mxu0 %v4175
    %4327 = vmatmul.bf16.gmra.mxu0 %v3743
    %v4328 = vpop.f32.mrf.mxu0
    %v4329 = vadd.f32 0.0, %v4328
    %v4330 = vpop.f32.mrf.mxu0
    %v4331 = vadd.f32 0.0, %v4330
    %4332 = vmatmul.bf16.gmra.mxu0 %v3752
    %v4333 = vpop.f32.mrf.mxu0
    %v4334 = vadd.f32 0.0, %v4333
    %v4335 = vpop.f32.mrf.mxu0
    %v4336 = vadd.f32 0.0, %v4335
    %4337 = vmatmul.bf16.gmra.mxu0 %v3761
    %v4338 = vpop.f32.mrf.mxu0
    %v4339 = vadd.f32 0.0, %v4338
    %v4340 = vpop.f32.mrf.mxu0
    %v4341 = vadd.f32 0.0, %v4340
    %4342 = vmatmul.bf16.gmra.mxu0 %v3770
    %v4343 = vpop.f32.mrf.mxu0
    %v4344 = vadd.f32 0.0, %v4343
    %v4345 = vpop.f32.mrf.mxu0
    %v4346 = vadd.f32 0.0, %v4345
    %4347 = vmatmul.bf16.gmra.mxu0 %v3779
    %v4348 = vpop.f32.mrf.mxu0
    %v4349 = vadd.f32 0.0, %v4348
    %v4350 = vpop.f32.mrf.mxu0
    %v4351 = vadd.f32 0.0, %v4350
    %4352 = vmatmul.bf16.gmra.mxu0 %v3788
    %v4353 = vpop.f32.mrf.mxu0
    %v4354 = vadd.f32 0.0, %v4353
    %v4355 = vpop.f32.mrf.mxu0
    %v4356 = vadd.f32 0.0, %v4355
    %4357 = vmatmul.bf16.gmra.mxu0 %v3797
    %v4358 = vpop.f32.mrf.mxu0
    %v4359 = vadd.f32 0.0, %v4358
    %v4360 = vpop.f32.mrf.mxu0
    %v4361 = vadd.f32 0.0, %v4360
    %4362 = vmatmul.bf16.gmra.mxu0 %v3806
    %v4363 = vpop.f32.mrf.mxu0
    %v4364 = vadd.f32 0.0, %v4363
    %v4365 = vpop.f32.mrf.mxu0
    %v4366 = vadd.f32 0.0, %v4365
    %4367 = vdwg.mxu0
    %4368 = vmatpush.bf16.msra.mxu0 %v4190
    %4369 = vmatpush.bf16.msra.mxu0 %v4189
    %4370 = vmatpush.bf16.msra.mxu0 %v4188
    %4371 = vmatpush.bf16.msra.mxu0 %v4187
    %4372 = vmatpush.bf16.msra.mxu0 %v4186
    %4373 = vmatpush.bf16.msra.mxu0 %v4185
    %4374 = vmatpush.bf16.msra.mxu0 %v4184
    %4375 = vmatpush.bf16.msra.mxu0 %v4183
    %4376 = vmatmul.bf16.gmra.mxu0 %v3744
    %v4377 = vpop.f32.mrf.mxu0
    %v4378 = vadd.f32 %v4329, %v4377
    %v4379 = vpop.f32.mrf.mxu0
    %v4380 = vadd.f32 %v4331, %v4379
    %4381 = vmatmul.bf16.gmra.mxu0 %v3753
    %v4382 = vpop.f32.mrf.mxu0
    %v4383 = vadd.f32 %v4334, %v4382
    %v4384 = vpop.f32.mrf.mxu0
    %v4385 = vadd.f32 %v4336, %v4384
    %4386 = vmatmul.bf16.gmra.mxu0 %v3762
    %v4387 = vpop.f32.mrf.mxu0
    %v4388 = vadd.f32 %v4339, %v4387
    %v4389 = vpop.f32.mrf.mxu0
    %v4390 = vadd.f32 %v4341, %v4389
    %4391 = vmatmul.bf16.gmra.mxu0 %v3771
    %v4392 = vpop.f32.mrf.mxu0
    %v4393 = vadd.f32 %v4344, %v4392
    %v4394 = vpop.f32.mrf.mxu0
    %v4395 = vadd.f32 %v4346, %v4394
    %4396 = vmatmul.bf16.gmra.mxu0 %v3780
    %v4397 = vpop.f32.mrf.mxu0
    %v4398 = vadd.f32 %v4349, %v4397
    %v4399 = vpop.f32.mrf.mxu0
    %v4400 = vadd.f32 %v4351, %v4399
    %4401 = vmatmul.bf16.gmra.mxu0 %v3789
    %v4402 = vpop.f32.mrf.mxu0
    %v4403 = vadd.f32 %v4354, %v4402
    %v4404 = vpop.f32.mrf.mxu0
    %v4405 = vadd.f32 %v4356, %v4404
    %4406 = vmatmul.bf16.gmra.mxu0 %v3798
    %v4407 = vpop.f32.mrf.mxu0
    %v4408 = vadd.f32 %v4359, %v4407
    %v4409 = vpop.f32.mrf.mxu0
    %v4410 = vadd.f32 %v4361, %v4409
    %4411 = vmatmul.bf16.gmra.mxu0 %v3807
    %v4412 = vpop.f32.mrf.mxu0
    %v4413 = vadd.f32 %v4364, %v4412
    %v4414 = vpop.f32.mrf.mxu0
    %v4415 = vadd.f32 %v4366, %v4414
    %4416 = vdwg.mxu0
    %4417 = vmatpush.bf16.msra.mxu0 %v4198
    %4418 = vmatpush.bf16.msra.mxu0 %v4197
    %4419 = vmatpush.bf16.msra.mxu0 %v4196
    %4420 = vmatpush.bf16.msra.mxu0 %v4195
    %4421 = vmatpush.bf16.msra.mxu0 %v4194
    %4422 = vmatpush.bf16.msra.mxu0 %v4193
    %4423 = vmatpush.bf16.msra.mxu0 %v4192
    %4424 = vmatpush.bf16.msra.mxu0 %v4191
    %4425 = vmatmul.bf16.gmra.mxu0 %v3745
    %v4426 = vpop.f32.mrf.mxu0
    %v4427 = vadd.f32 %v4378, %v4426
    %v4428 = vpop.f32.mrf.mxu0
    %v4429 = vadd.f32 %v4380, %v4428
    %4430 = vmatmul.bf16.gmra.mxu0 %v3754
    %v4431 = vpop.f32.mrf.mxu0
    %v4432 = vadd.f32 %v4383, %v4431
    %v4433 = vpop.f32.mrf.mxu0
    %v4434 = vadd.f32 %v4385, %v4433
    %4435 = vmatmul.bf16.gmra.mxu0 %v3763
    %v4436 = vpop.f32.mrf.mxu0
    %v4437 = vadd.f32 %v4388, %v4436
    %v4438 = vpop.f32.mrf.mxu0
    %v4439 = vadd.f32 %v4390, %v4438
    %4440 = vmatmul.bf16.gmra.mxu0 %v3772
    %v4441 = vpop.f32.mrf.mxu0
    %v4442 = vadd.f32 %v4393, %v4441
    %v4443 = vpop.f32.mrf.mxu0
    %v4444 = vadd.f32 %v4395, %v4443
    %4445 = vmatmul.bf16.gmra.mxu0 %v3781
    %v4446 = vpop.f32.mrf.mxu0
    %v4447 = vadd.f32 %v4398, %v4446
    %v4448 = vpop.f32.mrf.mxu0
    %v4449 = vadd.f32 %v4400, %v4448
    %4450 = vmatmul.bf16.gmra.mxu0 %v3790
    %v4451 = vpop.f32.mrf.mxu0
    %v4452 = vadd.f32 %v4403, %v4451
    %v4453 = vpop.f32.mrf.mxu0
    %v4454 = vadd.f32 %v4405, %v4453
    %4455 = vmatmul.bf16.gmra.mxu0 %v3799
    %v4456 = vpop.f32.mrf.mxu0
    %v4457 = vadd.f32 %v4408, %v4456
    %v4458 = vpop.f32.mrf.mxu0
    %v4459 = vadd.f32 %v4410, %v4458
    %4460 = vmatmul.bf16.gmra.mxu0 %v3808
    %v4461 = vpop.f32.mrf.mxu0
    %v4462 = vadd.f32 %v4413, %v4461
    %v4463 = vpop.f32.mrf.mxu0
    %v4464 = vadd.f32 %v4415, %v4463
    %4465 = vdwg.mxu0
    %4466 = vmatpush.bf16.msra.mxu0 %v4206
    %4467 = vmatpush.bf16.msra.mxu0 %v4205
    %4468 = vmatpush.bf16.msra.mxu0 %v4204
    %4469 = vmatpush.bf16.msra.mxu0 %v4203
    %4470 = vmatpush.bf16.msra.mxu0 %v4202
    %4471 = vmatpush.bf16.msra.mxu0 %v4201
    %4472 = vmatpush.bf16.msra.mxu0 %v4200
    %4473 = vmatpush.bf16.msra.mxu0 %v4199
    %4474 = vmatmul.bf16.gmra.mxu0 %v3746
    %v4475 = vpop.f32.mrf.mxu0
    %v4476 = vadd.f32 %v4427, %v4475
    %v4477 = vpop.f32.mrf.mxu0
    %v4478 = vadd.f32 %v4429, %v4477
    %4479 = vmatmul.bf16.gmra.mxu0 %v3755
    %v4480 = vpop.f32.mrf.mxu0
    %v4481 = vadd.f32 %v4432, %v4480
    %v4482 = vpop.f32.mrf.mxu0
    %v4483 = vadd.f32 %v4434, %v4482
    %4484 = vmatmul.bf16.gmra.mxu0 %v3764
    %v4485 = vpop.f32.mrf.mxu0
    %v4486 = vadd.f32 %v4437, %v4485
    %v4487 = vpop.f32.mrf.mxu0
    %v4488 = vadd.f32 %v4439, %v4487
    %4489 = vmatmul.bf16.gmra.mxu0 %v3773
    %v4490 = vpop.f32.mrf.mxu0
    %v4491 = vadd.f32 %v4442, %v4490
    %v4492 = vpop.f32.mrf.mxu0
    %v4493 = vadd.f32 %v4444, %v4492
    %4494 = vmatmul.bf16.gmra.mxu0 %v3782
    %v4495 = vpop.f32.mrf.mxu0
    %v4496 = vadd.f32 %v4447, %v4495
    %v4497 = vpop.f32.mrf.mxu0
    %v4498 = vadd.f32 %v4449, %v4497
    %4499 = vmatmul.bf16.gmra.mxu0 %v3791
    %v4500 = vpop.f32.mrf.mxu0
    %v4501 = vadd.f32 %v4452, %v4500
    %v4502 = vpop.f32.mrf.mxu0
    %v4503 = vadd.f32 %v4454, %v4502
    %4504 = vmatmul.bf16.gmra.mxu0 %v3800
    %v4505 = vpop.f32.mrf.mxu0
    %v4506 = vadd.f32 %v4457, %v4505
    %v4507 = vpop.f32.mrf.mxu0
    %v4508 = vadd.f32 %v4459, %v4507
    %4509 = vmatmul.bf16.gmra.mxu0 %v3809
    %v4510 = vpop.f32.mrf.mxu0
    %v4511 = vadd.f32 %v4462, %v4510
    %v4512 = vpop.f32.mrf.mxu0
    %v4513 = vadd.f32 %v4464, %v4512
    %4514 = vdwg.mxu0
    %4515 = vmatpush.bf16.msra.mxu0 %v4214
    %4516 = vmatpush.bf16.msra.mxu0 %v4213
    %4517 = vmatpush.bf16.msra.mxu0 %v4212
    %4518 = vmatpush.bf16.msra.mxu0 %v4211
    %4519 = vmatpush.bf16.msra.mxu0 %v4210
    %4520 = vmatpush.bf16.msra.mxu0 %v4209
    %4521 = vmatpush.bf16.msra.mxu0 %v4208
    %4522 = vmatpush.bf16.msra.mxu0 %v4207
    %4523 = vmatmul.bf16.gmra.mxu0 %v3747
    %v4524 = vpop.f32.mrf.mxu0
    %v4525 = vadd.f32 %v4476, %v4524
    %v4526 = vpop.f32.mrf.mxu0
    %v4527 = vadd.f32 %v4478, %v4526
    %4528 = vmatmul.bf16.gmra.mxu0 %v3756
    %v4529 = vpop.f32.mrf.mxu0
    %v4530 = vadd.f32 %v4481, %v4529
    %v4531 = vpop.f32.mrf.mxu0
    %v4532 = vadd.f32 %v4483, %v4531
    %4533 = vmatmul.bf16.gmra.mxu0 %v3765
    %v4534 = vpop.f32.mrf.mxu0
    %v4535 = vadd.f32 %v4486, %v4534
    %v4536 = vpop.f32.mrf.mxu0
    %v4537 = vadd.f32 %v4488, %v4536
    %4538 = vmatmul.bf16.gmra.mxu0 %v3774
    %v4539 = vpop.f32.mrf.mxu0
    %v4540 = vadd.f32 %v4491, %v4539
    %v4541 = vpop.f32.mrf.mxu0
    %v4542 = vadd.f32 %v4493, %v4541
    %4543 = vmatmul.bf16.gmra.mxu0 %v3783
    %v4544 = vpop.f32.mrf.mxu0
    %v4545 = vadd.f32 %v4496, %v4544
    %v4546 = vpop.f32.mrf.mxu0
    %v4547 = vadd.f32 %v4498, %v4546
    %4548 = vmatmul.bf16.gmra.mxu0 %v3792
    %v4549 = vpop.f32.mrf.mxu0
    %v4550 = vadd.f32 %v4501, %v4549
    %v4551 = vpop.f32.mrf.mxu0
    %v4552 = vadd.f32 %v4503, %v4551
    %4553 = vmatmul.bf16.gmra.mxu0 %v3801
    %v4554 = vpop.f32.mrf.mxu0
    %v4555 = vadd.f32 %v4506, %v4554
    %v4556 = vpop.f32.mrf.mxu0
    %v4557 = vadd.f32 %v4508, %v4556
    %4558 = vmatmul.bf16.gmra.mxu0 %v3810
    %v4559 = vpop.f32.mrf.mxu0
    %v4560 = vadd.f32 %v4511, %v4559
    %v4561 = vpop.f32.mrf.mxu0
    %v4562 = vadd.f32 %v4513, %v4561
    %4563 = vdwg.mxu0
    %4564 = vmatpush.bf16.msra.mxu0 %v4222
    %4565 = vmatpush.bf16.msra.mxu0 %v4221
    %4566 = vmatpush.bf16.msra.mxu0 %v4220
    %4567 = vmatpush.bf16.msra.mxu0 %v4219
    %4568 = vmatpush.bf16.msra.mxu0 %v4218
    %4569 = vmatpush.bf16.msra.mxu0 %v4217
    %4570 = vmatpush.bf16.msra.mxu0 %v4216
    %4571 = vmatpush.bf16.msra.mxu0 %v4215
    %4572 = vmatmul.bf16.gmra.mxu0 %v3748
    %v4573 = vpop.f32.mrf.mxu0
    %v4574 = vadd.f32 %v4525, %v4573
    %v4575 = vpop.f32.mrf.mxu0
    %v4576 = vadd.f32 %v4527, %v4575
    %4577 = vmatmul.bf16.gmra.mxu0 %v3757
    %v4578 = vpop.f32.mrf.mxu0
    %v4579 = vadd.f32 %v4530, %v4578
    %v4580 = vpop.f32.mrf.mxu0
    %v4581 = vadd.f32 %v4532, %v4580
    %4582 = vmatmul.bf16.gmra.mxu0 %v3766
    %v4583 = vpop.f32.mrf.mxu0
    %v4584 = vadd.f32 %v4535, %v4583
    %v4585 = vpop.f32.mrf.mxu0
    %v4586 = vadd.f32 %v4537, %v4585
    %4587 = vmatmul.bf16.gmra.mxu0 %v3775
    %v4588 = vpop.f32.mrf.mxu0
    %v4589 = vadd.f32 %v4540, %v4588
    %v4590 = vpop.f32.mrf.mxu0
    %v4591 = vadd.f32 %v4542, %v4590
    %4592 = vmatmul.bf16.gmra.mxu0 %v3784
    %v4593 = vpop.f32.mrf.mxu0
    %v4594 = vadd.f32 %v4545, %v4593
    %v4595 = vpop.f32.mrf.mxu0
    %v4596 = vadd.f32 %v4547, %v4595
    %4597 = vmatmul.bf16.gmra.mxu0 %v3793
    %v4598 = vpop.f32.mrf.mxu0
    %v4599 = vadd.f32 %v4550, %v4598
    %v4600 = vpop.f32.mrf.mxu0
    %v4601 = vadd.f32 %v4552, %v4600
    %4602 = vmatmul.bf16.gmra.mxu0 %v3802
    %v4603 = vpop.f32.mrf.mxu0
    %v4604 = vadd.f32 %v4555, %v4603
    %v4605 = vpop.f32.mrf.mxu0
    %v4606 = vadd.f32 %v4557, %v4605
    %4607 = vmatmul.bf16.gmra.mxu0 %v3811
    %v4608 = vpop.f32.mrf.mxu0
    %v4609 = vadd.f32 %v4560, %v4608
    %v4610 = vpop.f32.mrf.mxu0
    %v4611 = vadd.f32 %v4562, %v4610
    %4612 = vdwg.mxu0
    %4613 = vmatpush.bf16.msra.mxu0 %v4230
    %4614 = vmatpush.bf16.msra.mxu0 %v4229
    %4615 = vmatpush.bf16.msra.mxu0 %v4228
    %4616 = vmatpush.bf16.msra.mxu0 %v4227
    %4617 = vmatpush.bf16.msra.mxu0 %v4226
    %4618 = vmatpush.bf16.msra.mxu0 %v4225
    %4619 = vmatpush.bf16.msra.mxu0 %v4224
    %4620 = vmatpush.bf16.msra.mxu0 %v4223
    %4621 = vmatmul.bf16.gmra.mxu0 %v3749
    %v4622 = vpop.f32.mrf.mxu0
    %v4623 = vadd.f32 %v4574, %v4622
    %v4624 = vpop.f32.mrf.mxu0
    %v4625 = vadd.f32 %v4576, %v4624
    %4626 = vmatmul.bf16.gmra.mxu0 %v3758
    %v4627 = vpop.f32.mrf.mxu0
    %v4628 = vadd.f32 %v4579, %v4627
    %v4629 = vpop.f32.mrf.mxu0
    %v4630 = vadd.f32 %v4581, %v4629
    %4631 = vmatmul.bf16.gmra.mxu0 %v3767
    %v4632 = vpop.f32.mrf.mxu0
    %v4633 = vadd.f32 %v4584, %v4632
    %v4634 = vpop.f32.mrf.mxu0
    %v4635 = vadd.f32 %v4586, %v4634
    %4636 = vmatmul.bf16.gmra.mxu0 %v3776
    %v4637 = vpop.f32.mrf.mxu0
    %v4638 = vadd.f32 %v4589, %v4637
    %v4639 = vpop.f32.mrf.mxu0
    %v4640 = vadd.f32 %v4591, %v4639
    %4641 = vmatmul.bf16.gmra.mxu0 %v3785
    %v4642 = vpop.f32.mrf.mxu0
    %v4643 = vadd.f32 %v4594, %v4642
    %v4644 = vpop.f32.mrf.mxu0
    %v4645 = vadd.f32 %v4596, %v4644
    %4646 = vmatmul.bf16.gmra.mxu0 %v3794
    %v4647 = vpop.f32.mrf.mxu0
    %v4648 = vadd.f32 %v4599, %v4647
    %v4649 = vpop.f32.mrf.mxu0
    %v4650 = vadd.f32 %v4601, %v4649
    %4651 = vmatmul.bf16.gmra.mxu0 %v3803
    %v4652 = vpop.f32.mrf.mxu0
    %v4653 = vadd.f32 %v4604, %v4652
    %v4654 = vpop.f32.mrf.mxu0
    %v4655 = vadd.f32 %v4606, %v4654
    %4656 = vmatmul.bf16.gmra.mxu0 %v3812
    %v4657 = vpop.f32.mrf.mxu0
    %v4658 = vadd.f32 %v4609, %v4657
    %v4659 = vpop.f32.mrf.mxu0
    %v4660 = vadd.f32 %v4611, %v4659
    %4661 = vdwg.mxu0
    %4662 = vmatpush.bf16.msra.mxu0 %v4238
    %4663 = vmatpush.bf16.msra.mxu0 %v4237
    %4664 = vmatpush.bf16.msra.mxu0 %v4236
    %4665 = vmatpush.bf16.msra.mxu0 %v4235
    %4666 = vmatpush.bf16.msra.mxu0 %v4234
    %4667 = vmatpush.bf16.msra.mxu0 %v4233
    %4668 = vmatpush.bf16.msra.mxu0 %v4232
    %4669 = vmatpush.bf16.msra.mxu0 %v4231
    %4670 = vmatmul.bf16.gmra.mxu0 %v3750
    %v4671 = vpop.f32.mrf.mxu0
    %v4672 = vadd.f32 %v4623, %v4671
    %v4673 = vpop.f32.mrf.mxu0
    %v4674 = vadd.f32 %v4625, %v4673
    %4675 = vmatmul.bf16.gmra.mxu0 %v3759
    %v4676 = vpop.f32.mrf.mxu0
    %v4677 = vadd.f32 %v4628, %v4676
    %v4678 = vpop.f32.mrf.mxu0
    %v4679 = vadd.f32 %v4630, %v4678
    %4680 = vmatmul.bf16.gmra.mxu0 %v3768
    %v4681 = vpop.f32.mrf.mxu0
    %v4682 = vadd.f32 %v4633, %v4681
    %v4683 = vpop.f32.mrf.mxu0
    %v4684 = vadd.f32 %v4635, %v4683
    %4685 = vmatmul.bf16.gmra.mxu0 %v3777
    %v4686 = vpop.f32.mrf.mxu0
    %v4687 = vadd.f32 %v4638, %v4686
    %v4688 = vpop.f32.mrf.mxu0
    %v4689 = vadd.f32 %v4640, %v4688
    %4690 = vmatmul.bf16.gmra.mxu0 %v3786
    %v4691 = vpop.f32.mrf.mxu0
    %v4692 = vadd.f32 %v4643, %v4691
    %v4693 = vpop.f32.mrf.mxu0
    %v4694 = vadd.f32 %v4645, %v4693
    %4695 = vmatmul.bf16.gmra.mxu0 %v3795
    %v4696 = vpop.f32.mrf.mxu0
    %v4697 = vadd.f32 %v4648, %v4696
    %v4698 = vpop.f32.mrf.mxu0
    %v4699 = vadd.f32 %v4650, %v4698
    %4700 = vmatmul.bf16.gmra.mxu0 %v3804
    %v4701 = vpop.f32.mrf.mxu0
    %v4702 = vadd.f32 %v4653, %v4701
    %v4703 = vpop.f32.mrf.mxu0
    %v4704 = vadd.f32 %v4655, %v4703
    %4705 = vmatmul.bf16.gmra.mxu0 %v3813
    %v4706 = vpop.f32.mrf.mxu0
    %v4707 = vadd.f32 %v4658, %v4706
    %v4708 = vpop.f32.mrf.mxu0
    %v4709 = vadd.f32 %v4660, %v4708
    %4710 = vdwg.mxu0
    %4711 = vmatpush.bf16.msra.mxu0 %v4246
    %4712 = vmatpush.bf16.msra.mxu0 %v4245
    %4713 = vmatpush.bf16.msra.mxu0 %v4244
    %4714 = vmatpush.bf16.msra.mxu0 %v4243
    %4715 = vmatpush.bf16.msra.mxu0 %v4242
    %4716 = vmatpush.bf16.msra.mxu0 %v4241
    %4717 = vmatpush.bf16.msra.mxu0 %v4240
    %4718 = vmatpush.bf16.msra.mxu0 %v4239
    %4719 = vmatmul.bf16.gmra.mxu0 %v3751
    %v4720 = vpop.f32.mrf.mxu0
    %v4721 = vadd.f32 %v4672, %v4720
    %v4722 = vpop.f32.mrf.mxu0
    %v4723 = vadd.f32 %v4674, %v4722
    %4724 = vmatmul.bf16.gmra.mxu0 %v3760
    %v4725 = vpop.f32.mrf.mxu0
    %v4726 = vadd.f32 %v4677, %v4725
    %v4727 = vpop.f32.mrf.mxu0
    %v4728 = vadd.f32 %v4679, %v4727
    %4729 = vmatmul.bf16.gmra.mxu0 %v3769
    %v4730 = vpop.f32.mrf.mxu0
    %v4731 = vadd.f32 %v4682, %v4730
    %v4732 = vpop.f32.mrf.mxu0
    %v4733 = vadd.f32 %v4684, %v4732
    %4734 = vmatmul.bf16.gmra.mxu0 %v3778
    %v4735 = vpop.f32.mrf.mxu0
    %v4736 = vadd.f32 %v4687, %v4735
    %v4737 = vpop.f32.mrf.mxu0
    %v4738 = vadd.f32 %v4689, %v4737
    %4739 = vmatmul.bf16.gmra.mxu0 %v3787
    %v4740 = vpop.f32.mrf.mxu0
    %v4741 = vadd.f32 %v4692, %v4740
    %v4742 = vpop.f32.mrf.mxu0
    %v4743 = vadd.f32 %v4694, %v4742
    %4744 = vmatmul.bf16.gmra.mxu0 %v3796
    %v4745 = vpop.f32.mrf.mxu0
    %v4746 = vadd.f32 %v4697, %v4745
    %v4747 = vpop.f32.mrf.mxu0
    %v4748 = vadd.f32 %v4699, %v4747
    %4749 = vmatmul.bf16.gmra.mxu0 %v3805
    %v4750 = vpop.f32.mrf.mxu0
    %v4751 = vadd.f32 %v4702, %v4750
    %v4752 = vpop.f32.mrf.mxu0
    %v4753 = vadd.f32 %v4704, %v4752
    %4754 = vmatmul.bf16.gmra.mxu0 %v3814
    %v4755 = vpop.f32.mrf.mxu0
    %v4756 = vadd.f32 %v4707, %v4755
    %v4757 = vpop.f32.mrf.mxu0
    %v4758 = vadd.f32 %v4709, %v4757
    %4759 = vdwg.mxu0
    %v4760 = vld [vmem:[%s9] sm:$0x1]
    %v4761 = vld [vmem:[%s10] sm:$0x1]
    %v4762 = vadd.f32 %v4721, %v4723
    %v4763 = vadd.f32 %v4762, %v4726
    %v4764 = vadd.f32 %v4763, %v4728
    %v4765 = vadd.f32 %v4764, %v4731
    %v4766 = vadd.f32 %v4765, %v4733
    %v4767 = vadd.f32 %v4766, %v4736
    %v4768 = vadd.f32 %v4767, %v4738
    %v4769 = vadd.f32 %v4768, %v4741
    %v4770 = vadd.f32 %v4769, %v4743
    %v4771 = vadd.f32 %v4770, %v4746
    %v4772 = vadd.f32 %v4771, %v4748
    %v4773 = vadd.f32 %v4772, %v4751
    %v4774 = vadd.f32 %v4773, %v4753
    %v4775 = vadd.f32 %v4774, %v4756
    %v4776 = vadd.f32 %v4775, %v4758
    %v4777 = vrot.slane %v4776, 4
    %v4778 = vadd.f32 %v4776, %v4777
    %v4779 = vrot.slane %v4778, 2
    %v4780 = vadd.f32 %v4778, %v4779
    %v4781 = vrot.slane %v4780, 1
    %v4782 = vadd.f32 %v4780, %v4781
    %v4783 = vmul.f32 %v4782, 0.0078125
    %v4784 = vmul.f32 %v4721, %v4721
    %v4785 = vmul.f32 %v4723, %v4723
    %v4786 = vmul.f32 %v4726, %v4726
    %v4787 = vmul.f32 %v4728, %v4728
    %v4788 = vmul.f32 %v4731, %v4731
    %v4789 = vmul.f32 %v4733, %v4733
    %v4790 = vmul.f32 %v4736, %v4736
    %v4791 = vmul.f32 %v4738, %v4738
    %v4792 = vmul.f32 %v4741, %v4741
    %v4793 = vmul.f32 %v4743, %v4743
    %v4794 = vmul.f32 %v4746, %v4746
    %v4795 = vmul.f32 %v4748, %v4748
    %v4796 = vmul.f32 %v4751, %v4751
    %v4797 = vmul.f32 %v4753, %v4753
    %v4798 = vmul.f32 %v4756, %v4756
    %v4799 = vmul.f32 %v4758, %v4758
    %v4800 = vadd.f32 %v4784, %v4785
    %v4801 = vadd.f32 %v4800, %v4786
    %v4802 = vadd.f32 %v4801, %v4787
    %v4803 = vadd.f32 %v4802, %v4788
    %v4804 = vadd.f32 %v4803, %v4789
    %v4805 = vadd.f32 %v4804, %v4790
    %v4806 = vadd.f32 %v4805, %v4791
    %v4807 = vadd.f32 %v4806, %v4792
    %v4808 = vadd.f32 %v4807, %v4793
    %v4809 = vadd.f32 %v4808, %v4794
    %v4810 = vadd.f32 %v4809, %v4795
    %v4811 = vadd.f32 %v4810, %v4796
    %v4812 = vadd.f32 %v4811, %v4797
    %v4813 = vadd.f32 %v4812, %v4798
    %v4814 = vadd.f32 %v4813, %v4799
    %v4815 = vrot.slane %v4814, 4
    %v4816 = vadd.f32 %v4814, %v4815
    %v4817 = vrot.slane %v4816, 2
    %v4818 = vadd.f32 %v4816, %v4817
    %v4819 = vrot.slane %v4818, 1
    %v4820 = vadd.f32 %v4818, %v4819
    %v4821 = vmul.f32 %v4820, 0.0078125
    %v4822 = vmul.f32 %v4783, %v4783
    %v4823 = vsub.f32 %v4821, %v4822
    %v4824 = vadd.f32 %v4823, 1e-05
    %v4825 = vrsqrt.pop %v4824
    %v4826 = vmul.f32 %v4825, %v4824
    %v4827 = vmul.f32 %v4826, %v4825
    %v4828 = vmul.f32 0.5, %v4827
    %v4829 = vsub.f32 1.5, %v4828
    %v4830 = vmul.f32 %v4825, %v4829
    %vm4831 = vweird.f32 %v4824
    %vm4832 = vweird.f32 %v4825
    %vm4833 = vmor %vm4831, %vm4832
    %v4834 = vsel %vm4833, %v4825, %v4830
    %v4835 = vmul.f32 %v4760, %v4834
    %v4836 = vmul.f32 %v4783, %v4835
    %v4837 = vsub.f32 %v4761, %v4836
    %v4839 = vperm.slane %v4835, 0
    %v4841 = vmul.f32 %v4721, %v4839
    %v4842 = vmul.f32 %v4723, %v4839
    %v4843 = vmul.f32 %v4726, %v4839
    %v4844 = vmul.f32 %v4728, %v4839
    %v4845 = vmul.f32 %v4731, %v4839
    %v4846 = vmul.f32 %v4733, %v4839
    %v4847 = vmul.f32 %v4736, %v4839
    %v4848 = vmul.f32 %v4738, %v4839
    %v4849 = vmul.f32 %v4741, %v4839
    %v4850 = vmul.f32 %v4743, %v4839
    %v4851 = vmul.f32 %v4746, %v4839
    %v4852 = vmul.f32 %v4748, %v4839
    %v4853 = vmul.f32 %v4751, %v4839
    %v4854 = vmul.f32 %v4753, %v4839
    %v4855 = vmul.f32 %v4756, %v4839
    %v4856 = vmul.f32 %v4758, %v4839
    %v4858 = vperm.slane %v4837, 0
    %v4860 = vadd.f32 %v4841, %v4858
    %v4861 = vadd.f32 %v4842, %v4858
    %v4862 = vadd.f32 %v4843, %v4858
    %v4863 = vadd.f32 %v4844, %v4858
    %v4864 = vadd.f32 %v4845, %v4858
    %v4865 = vadd.f32 %v4846, %v4858
    %v4866 = vadd.f32 %v4847, %v4858
    %v4867 = vadd.f32 %v4848, %v4858
    %v4868 = vadd.f32 %v4849, %v4858
    %v4869 = vadd.f32 %v4850, %v4858
    %v4870 = vadd.f32 %v4851, %v4858
    %v4871 = vadd.f32 %v4852, %v4858
    %v4872 = vadd.f32 %v4853, %v4858
    %v4873 = vadd.f32 %v4854, %v4858
    %v4874 = vadd.f32 %v4855, %v4858
    %v4875 = vadd.f32 %v4856, %v4858
    %v4876 = vld [vmem:[%s6] sm:$0xf]
    %v4877 = vld [vmem:[%s6 + $0x4] sm:$0xf]
    %v4878 = vld [vmem:[%s6 + $0x8] sm:$0xf]
    %v4879 = vld [vmem:[%s6 + $0xc] sm:$0xf]
    %v4880 = vld [vmem:[%s6 + $0x10] sm:$0xf]
    %v4881 = vld [vmem:[%s6 + $0x14] sm:$0xf]
    %v4882 = vld [vmem:[%s6 + $0x18] sm:$0xf]
    %v4883 = vld [vmem:[%s6 + $0x1c] sm:$0xf]
    %v4884 = vld [vmem:[%s6 + $0x20] sm:$0xf]
    %v4885 = vld [vmem:[%s6 + $0x24] sm:$0xf]
    %v4886 = vld [vmem:[%s6 + $0x28] sm:$0xf]
    %v4887 = vld [vmem:[%s6 + $0x2c] sm:$0xf]
    %v4888 = vld [vmem:[%s6 + $0x30] sm:$0xf]
    %v4889 = vld [vmem:[%s6 + $0x34] sm:$0xf]
    %v4890 = vld [vmem:[%s6 + $0x38] sm:$0xf]
    %v4891 = vld [vmem:[%s6 + $0x3c] sm:$0xf]
    %v4908 = vunpack.c.l.b16 %v4876
    %v4909 = vunpack.c.l.b16 %v4877
    %v4910 = vunpack.c.l.b16 %v4878
    %v4911 = vunpack.c.l.b16 %v4879
    %v4912 = vunpack.c.l.b16 %v4880
    %v4913 = vunpack.c.l.b16 %v4881
    %v4914 = vunpack.c.l.b16 %v4882
    %v4915 = vunpack.c.l.b16 %v4883
    %v4916 = vunpack.c.l.b16 %v4884
    %v4917 = vunpack.c.l.b16 %v4885
    %v4918 = vunpack.c.l.b16 %v4886
    %v4919 = vunpack.c.l.b16 %v4887
    %v4920 = vunpack.c.l.b16 %v4888
    %v4921 = vunpack.c.l.b16 %v4889
    %v4922 = vunpack.c.l.b16 %v4890
    %v4923 = vunpack.c.l.b16 %v4891
    %v4924 = vpack.c.b16 %v4909, %v4908
    %v4925 = vpack.c.b16 %v4911, %v4910
    %v4926 = vpack.c.b16 %v4913, %v4912
    %v4927 = vpack.c.b16 %v4915, %v4914
    %v4928 = vpack.c.b16 %v4917, %v4916
    %v4929 = vpack.c.b16 %v4919, %v4918
    %v4930 = vpack.c.b16 %v4921, %v4920
    %v4931 = vpack.c.b16 %v4923, %v4922
    %4940 = vmatpush.bf16.msra.mxu0 %v4931
    %4941 = vmatpush.bf16.msra.mxu0 %v4930
    %4942 = vmatpush.bf16.msra.mxu0 %v4929
    %4943 = vmatpush.bf16.msra.mxu0 %v4928
    %4944 = vmatpush.bf16.msra.mxu0 %v4927
    %4945 = vmatpush.bf16.msra.mxu0 %v4926
    %4946 = vmatpush.bf16.msra.mxu0 %v4925
    %4947 = vmatpush.bf16.msra.mxu0 %v4924
    %4948 = vmatmul.bf16.gmra.mxu0 %v1060
    %v4949 = vpop.f32.mrf.mxu0
    %v4950 = vadd.f32 0.0, %v4949
    %v4951 = vpop.f32.mrf.mxu0
    %v4952 = vadd.f32 0.0, %v4951
    %4953 = vmatmul.bf16.gmra.mxu0 %v1069
    %v4954 = vpop.f32.mrf.mxu0
    %v4955 = vadd.f32 0.0, %v4954
    %v4956 = vpop.f32.mrf.mxu0
    %v4957 = vadd.f32 0.0, %v4956
    %4958 = vmatmul.bf16.gmra.mxu0 %v1078
    %v4959 = vpop.f32.mrf.mxu0
    %v4960 = vadd.f32 0.0, %v4959
    %v4961 = vpop.f32.mrf.mxu0
    %v4962 = vadd.f32 0.0, %v4961
    %4963 = vmatmul.bf16.gmra.mxu0 %v1087
    %v4964 = vpop.f32.mrf.mxu0
    %v4965 = vadd.f32 0.0, %v4964
    %v4966 = vpop.f32.mrf.mxu0
    %v4967 = vadd.f32 0.0, %v4966
    %4968 = vmatmul.bf16.gmra.mxu0 %v1096
    %v4969 = vpop.f32.mrf.mxu0
    %v4970 = vadd.f32 0.0, %v4969
    %v4971 = vpop.f32.mrf.mxu0
    %v4972 = vadd.f32 0.0, %v4971
    %4973 = vmatmul.bf16.gmra.mxu0 %v1105
    %v4974 = vpop.f32.mrf.mxu0
    %v4975 = vadd.f32 0.0, %v4974
    %v4976 = vpop.f32.mrf.mxu0
    %v4977 = vadd.f32 0.0, %v4976
    %4978 = vmatmul.bf16.gmra.mxu0 %v1114
    %v4979 = vpop.f32.mrf.mxu0
    %v4980 = vadd.f32 0.0, %v4979
    %v4981 = vpop.f32.mrf.mxu0
    %v4982 = vadd.f32 0.0, %v4981
    %4983 = vmatmul.bf16.gmra.mxu0 %v1123
    %v4984 = vpop.f32.mrf.mxu0
    %v4985 = vadd.f32 0.0, %v4984
    %v4986 = vpop.f32.mrf.mxu0
    %v4987 = vadd.f32 0.0, %v4986
    %4988 = vdwg.mxu0
    %v4989 = vld [vmem:[%s11] sm:$0x1]
    %v4990 = vld [vmem:[%s12] sm:$0x1]
    %v4991 = vadd.f32 %v4950, %v4952
    %v4992 = vadd.f32 %v4991, %v4955
    %v4993 = vadd.f32 %v4992, %v4957
    %v4994 = vadd.f32 %v4993, %v4960
    %v4995 = vadd.f32 %v4994, %v4962
    %v4996 = vadd.f32 %v4995, %v4965
    %v4997 = vadd.f32 %v4996, %v4967
    %v4998 = vadd.f32 %v4997, %v4970
    %v4999 = vadd.f32 %v4998, %v4972
    %v5000 = vadd.f32 %v4999, %v4975
    %v5001 = vadd.f32 %v5000, %v4977
    %v5002 = vadd.f32 %v5001, %v4980
    %v5003 = vadd.f32 %v5002, %v4982
    %v5004 = vadd.f32 %v5003, %v4985
    %v5005 = vadd.f32 %v5004, %v4987
    %v5006 = vrot.slane %v5005, 4
    %v5007 = vadd.f32 %v5005, %v5006
    %v5008 = vrot.slane %v5007, 2
    %v5009 = vadd.f32 %v5007, %v5008
    %v5010 = vrot.slane %v5009, 1
    %v5011 = vadd.f32 %v5009, %v5010
    %v5012 = vmul.f32 %v5011, 0.0078125
    %v5013 = vmul.f32 %v4950, %v4950
    %v5014 = vmul.f32 %v4952, %v4952
    %v5015 = vmul.f32 %v4955, %v4955
    %v5016 = vmul.f32 %v4957, %v4957
    %v5017 = vmul.f32 %v4960, %v4960
    %v5018 = vmul.f32 %v4962, %v4962
    %v5019 = vmul.f32 %v4965, %v4965
    %v5020 = vmul.f32 %v4967, %v4967
    %v5021 = vmul.f32 %v4970, %v4970
    %v5022 = vmul.f32 %v4972, %v4972
    %v5023 = vmul.f32 %v4975, %v4975
    %v5024 = vmul.f32 %v4977, %v4977
    %v5025 = vmul.f32 %v4980, %v4980
    %v5026 = vmul.f32 %v4982, %v4982
    %v5027 = vmul.f32 %v4985, %v4985
    %v5028 = vmul.f32 %v4987, %v4987
    %v5029 = vadd.f32 %v5013, %v5014
    %v5030 = vadd.f32 %v5029, %v5015
    %v5031 = vadd.f32 %v5030, %v5016
    %v5032 = vadd.f32 %v5031, %v5017
    %v5033 = vadd.f32 %v5032, %v5018
    %v5034 = vadd.f32 %v5033, %v5019
    %v5035 = vadd.f32 %v5034, %v5020
    %v5036 = vadd.f32 %v5035, %v5021
    %v5037 = vadd.f32 %v5036, %v5022
    %v5038 = vadd.f32 %v5037, %v5023
    %v5039 = vadd.f32 %v5038, %v5024
    %v5040 = vadd.f32 %v5039, %v5025
    %v5041 = vadd.f32 %v5040, %v5026
    %v5042 = vadd.f32 %v5041, %v5027
    %v5043 = vadd.f32 %v5042, %v5028
    %v5044 = vrot.slane %v5043, 4
    %v5045 = vadd.f32 %v5043, %v5044
    %v5046 = vrot.slane %v5045, 2
    %v5047 = vadd.f32 %v5045, %v5046
    %v5048 = vrot.slane %v5047, 1
    %v5049 = vadd.f32 %v5047, %v5048
    %v5050 = vmul.f32 %v5049, 0.0078125
    %v5051 = vmul.f32 %v5012, %v5012
    %v5052 = vsub.f32 %v5050, %v5051
    %v5053 = vadd.f32 %v5052, 1e-05
    %v5054 = vrsqrt.pop %v5053
    %v5055 = vmul.f32 %v5054, %v5053
    %v5056 = vmul.f32 %v5055, %v5054
    %v5057 = vmul.f32 0.5, %v5056
    %v5058 = vsub.f32 1.5, %v5057
    %v5059 = vmul.f32 %v5054, %v5058
    %vm5060 = vweird.f32 %v5053
    %vm5061 = vweird.f32 %v5054
    %vm5062 = vmor %vm5060, %vm5061
    %v5063 = vsel %vm5062, %v5054, %v5059
    %v5064 = vmul.f32 %v4989, %v5063
    %v5065 = vmul.f32 %v5012, %v5064
    %v5066 = vsub.f32 %v4990, %v5065
    %v5068 = vperm.slane %v5064, 0
    %v5070 = vmul.f32 %v4950, %v5068
    %v5071 = vmul.f32 %v4952, %v5068
    %v5072 = vmul.f32 %v4955, %v5068
    %v5073 = vmul.f32 %v4957, %v5068
    %v5074 = vmul.f32 %v4960, %v5068
    %v5075 = vmul.f32 %v4962, %v5068
    %v5076 = vmul.f32 %v4965, %v5068
    %v5077 = vmul.f32 %v4967, %v5068
    %v5078 = vmul.f32 %v4970, %v5068
    %v5079 = vmul.f32 %v4972, %v5068
    %v5080 = vmul.f32 %v4975, %v5068
    %v5081 = vmul.f32 %v4977, %v5068
    %v5082 = vmul.f32 %v4980, %v5068
    %v5083 = vmul.f32 %v4982, %v5068
    %v5084 = vmul.f32 %v4985, %v5068
    %v5085 = vmul.f32 %v4987, %v5068
    %v5087 = vperm.slane %v5066, 0
    %v5089 = vadd.f32 %v5070, %v5087
    %v5090 = vadd.f32 %v5071, %v5087
    %v5091 = vadd.f32 %v5072, %v5087
    %v5092 = vadd.f32 %v5073, %v5087
    %v5093 = vadd.f32 %v5074, %v5087
    %v5094 = vadd.f32 %v5075, %v5087
    %v5095 = vadd.f32 %v5076, %v5087
    %v5096 = vadd.f32 %v5077, %v5087
    %v5097 = vadd.f32 %v5078, %v5087
    %v5098 = vadd.f32 %v5079, %v5087
    %v5099 = vadd.f32 %v5080, %v5087
    %v5100 = vadd.f32 %v5081, %v5087
    %v5101 = vadd.f32 %v5082, %v5087
    %v5102 = vadd.f32 %v5083, %v5087
    %v5103 = vadd.f32 %v5084, %v5087
    %v5104 = vadd.f32 %v5085, %v5087
    %v5105 = vadd.f32 %v4860, %v5089
    %v5106 = vadd.f32 %v4861, %v5090
    %v5107 = vadd.f32 %v4862, %v5091
    %v5108 = vadd.f32 %v4863, %v5092
    %v5109 = vadd.f32 %v4864, %v5093
    %v5110 = vadd.f32 %v4865, %v5094
    %v5111 = vadd.f32 %v4866, %v5095
    %v5112 = vadd.f32 %v4867, %v5096
    %v5113 = vadd.f32 %v4868, %v5097
    %v5114 = vadd.f32 %v4869, %v5098
    %v5115 = vadd.f32 %v4870, %v5099
    %v5116 = vadd.f32 %v4871, %v5100
    %v5117 = vadd.f32 %v4872, %v5101
    %v5118 = vadd.f32 %v4873, %v5102
    %v5119 = vadd.f32 %v4874, %v5103
    %v5120 = vadd.f32 %v4875, %v5104
    %v5121 = vmax.f32 %v5105, 0.0
    %v5122 = vmax.f32 %v5106, 0.0
    %v5123 = vmax.f32 %v5107, 0.0
    %v5124 = vmax.f32 %v5108, 0.0
    %v5125 = vmax.f32 %v5109, 0.0
    %v5126 = vmax.f32 %v5110, 0.0
    %v5127 = vmax.f32 %v5111, 0.0
    %v5128 = vmax.f32 %v5112, 0.0
    %v5129 = vmax.f32 %v5113, 0.0
    %v5130 = vmax.f32 %v5114, 0.0
    %v5131 = vmax.f32 %v5115, 0.0
    %v5132 = vmax.f32 %v5116, 0.0
    %v5133 = vmax.f32 %v5117, 0.0
    %v5134 = vmax.f32 %v5118, 0.0
    %v5135 = vmax.f32 %v5119, 0.0
    %v5136 = vmax.f32 %v5120, 0.0
    %v5137 = vpack.c.bf16 %v5121, %v5121
    %v5138 = vpack.c.bf16 %v5122, %v5122
    %v5139 = vpack.c.bf16 %v5123, %v5123
    %v5140 = vpack.c.bf16 %v5124, %v5124
    %v5141 = vpack.c.bf16 %v5125, %v5125
    %v5142 = vpack.c.bf16 %v5126, %v5126
    %v5143 = vpack.c.bf16 %v5127, %v5127
    %v5144 = vpack.c.bf16 %v5128, %v5128
    %v5145 = vpack.c.bf16 %v5129, %v5129
    %v5146 = vpack.c.bf16 %v5130, %v5130
    %v5147 = vpack.c.bf16 %v5131, %v5131
    %v5148 = vpack.c.bf16 %v5132, %v5132
    %v5149 = vpack.c.bf16 %v5133, %v5133
    %v5150 = vpack.c.bf16 %v5134, %v5134
    %v5151 = vpack.c.bf16 %v5135, %v5135
    %v5152 = vpack.c.bf16 %v5136, %v5136
    %5153 = vst [vmem:[#allocation3] sm:$0xf] %v5137
    %5154 = vst [vmem:[#allocation3 + $0x4] sm:$0xf] %v5138
    %5155 = vst [vmem:[#allocation3 + $0x8] sm:$0xf] %v5139
    %5156 = vst [vmem:[#allocation3 + $0xc] sm:$0xf] %v5140
    %5157 = vst [vmem:[#allocation3 + $0x10] sm:$0xf] %v5141
    %5158 = vst [vmem:[#allocation3 + $0x14] sm:$0xf] %v5142
    %5159 = vst [vmem:[#allocation3 + $0x18] sm:$0xf] %v5143
    %5160 = vst [vmem:[#allocation3 + $0x1c] sm:$0xf] %v5144
    %5161 = vst [vmem:[#allocation3 + $0x20] sm:$0xf] %v5145
    %5162 = vst [vmem:[#allocation3 + $0x24] sm:$0xf] %v5146
    %5163 = vst [vmem:[#allocation3 + $0x28] sm:$0xf] %v5147
    %5164 = vst [vmem:[#allocation3 + $0x2c] sm:$0xf] %v5148
    %5165 = vst [vmem:[#allocation3 + $0x30] sm:$0xf] %v5149
    %5166 = vst [vmem:[#allocation3 + $0x34] sm:$0xf] %v5150
    %5167 = vst [vmem:[#allocation3 + $0x38] sm:$0xf] %v5151
    %5168 = vst [vmem:[#allocation3 + $0x3c] sm:$0xf] %v5152
    // Predicated region
    $region54: #{_lambda_.1} parent=1 // pred_check
      _
    $region55: #{_lambda_.1} parent=1 // pred_check_branch
      %5170 = sbr.rel (0) target = $region57
    $region56: #{_lambda_.1} parent=1 // pred_region
      %5172 = vsyncadd [#allocation4], 0
      %s5173 = sshll.u32 [#allocation3], 4
      %s5174 = int_to_ptr.vmem [resolvable:$true] %s5173
      %s5175 = sshll.u32 %s13, 4
      %s5176 = int_to_ptr.hbm [resolvable:$true] %s5175
      %5181 = dma.vmem_to_hbm [thread:$0]  %s5174, 1024, %s5176, [#allocation4], 64, 64, 4
    $region57: #{_lambda_.1} parent=1 // pred_fallthru
      _
    // Predicated region
    $region58: #{_lambda_.1} parent=1 // pred_check
      _
    $region59: #{_lambda_.1} parent=1 // pred_check_branch
      %5183 = sbr.rel (0) target = $region61
    $region60: #{_lambda_.1} parent=1 // pred_region
      %5185 = dma.done [#allocation4], 1024
    $region61: #{_lambda_.1} parent=1 // pred_fallthru
      _
    %5186 = vsyncpa [#allocation4], 1

</llo_original>
